<compile_context>
chip_gen: v6e
topology: v6e:2x2x1
jax: 0.10.0
libtpu: 0.0.40
codegen_flags: <defaults>
</compile_context>

<pallas_src>
import math

import jax
import jax.numpy as jnp
from jax import lax
from jax.experimental import pallas as pl
from jax.experimental.pallas import tpu as pltpu

# ---- small synthetic "BERT" config (Stage1 keeps num_hidden_layers // 4 layers) ----
BATCH = 2
SEQ = 8
HIDDEN = 64
HEADS = 4
HEAD_DIM = HIDDEN // HEADS
INTER = 128
VOCAB = 128
NUM_HIDDEN_LAYERS = 8
NUM_LAYERS = NUM_HIDDEN_LAYERS // 4
INIT_RANGE = 0.02           # config.initializer_range
LN_EPS = 1e-12              # BERT LayerNorm eps
_INV_SQRT2 = 0.7071067811865476

# ---- packed-weight layout (lane offsets chosen as multiples of 128) ----
W_IN_COLS = 512             # per-layer H-fan-in matrices: [wqkv(192) | wi(128) | wo(64)]
QKV_OFF, WI_OFF, WO_OFF = 0, 256, 384
VEC_COLS = 256              # per-layer 1-D params, one per sublane row
(V_BQKV, V_BO, V_LN1G, V_LN1B, V_BI, V_BO2, V_LN2G, V_LN2B) = range(8)
WH_COLS = 384               # head matrices: [dec(128) | sr(pad 128) | pooler(64) | transform(64)]
DEC_OFF, SR_OFF, POOL_OFF, TRANS_OFF = 0, 128, 256, 320
SR_PAD = 128                # NSP logits emitted lane-dense; wrapper slices [:, :2]
(H_DECB, H_SRB, H_POOLB, H_TRANSB, H_TLNG, H_TLNB) = range(6)


# ----------------------------- in-kernel helpers -----------------------------
def _gelu(x):               # exact (erf-based) BERT gelu
    return x * 0.5 * (1.0 + lax.erf(x * _INV_SQRT2))


def _layernorm(x, g, b):
    mu = jnp.mean(x, axis=-1, keepdims=True)
    xc = x - mu
    var = jnp.mean(xc * xc, axis=-1, keepdims=True)
    return xc * lax.rsqrt(var + LN_EPS) * g + b


# ----------------------------- fused Stage1 kernel -----------------------------
def _stage1_kernel(x_ref, w_in_ref, wo2_ref, vec_ref, wh_ref, vh_ref,
                   pred_ref, sr_ref, act_ref):
    layer = pl.program_id(0)

    @pl.when(layer == 0)
    def _():
        act_ref[...] = x_ref[...]

    xf = act_ref[...]                                           # (B*S, H)
    w_in = w_in_ref[0]                                          # (H, 512)
    vec = vec_ref[0]                                            # (8, 256)

    wqkv = w_in[:, QKV_OFF:QKV_OFF + 3 * HIDDEN]                # (H, 3H), scale folded
    wi = w_in[:, WI_OFF:WI_OFF + INTER]                         # (H, INTER)
    wo = w_in[:, WO_OFF:WO_OFF + HIDDEN]                        # (H, H)
    bqkv = vec[V_BQKV:V_BQKV + 1, :3 * HIDDEN]
    bo = vec[V_BO:V_BO + 1, :HIDDEN]
    ln1g = vec[V_LN1G:V_LN1G + 1, :HIDDEN]
    ln1b = vec[V_LN1B:V_LN1B + 1, :HIDDEN]
    bi = vec[V_BI:V_BI + 1, :INTER]
    bo2 = vec[V_BO2:V_BO2 + 1, :HIDDEN]
    ln2g = vec[V_LN2G:V_LN2G + 1, :HIDDEN]
    ln2b = vec[V_LN2B:V_LN2B + 1, :HIDDEN]

    # Fused Q|K|V projection (attention scale already folded into Wq / bq).
    qkv = jnp.dot(xf, wqkv, preferred_element_type=jnp.float32) + bqkv   # (M, 3H)

    # Stack heads onto a single LEADING batch axis -> (HEADS*B, S, Dh), then
    # one score einsum + one softmax + one context einsum for all heads.
    qs, ks, vs = [], [], []
    for h in range(HEADS):
        q0 = h * HEAD_DIM
        k0 = HIDDEN + h * HEAD_DIM
        v0 = 2 * HIDDEN + h * HEAD_DIM
        qs.append(qkv[:, q0:q0 + HEAD_DIM].reshape(BATCH, SEQ, HEAD_DIM))
        ks.append(qkv[:, k0:k0 + HEAD_DIM].reshape(BATCH, SEQ, HEAD_DIM))
        vs.append(qkv[:, v0:v0 + HEAD_DIM].reshape(BATCH, SEQ, HEAD_DIM))
    q_all = jnp.concatenate(qs, axis=0)                         # (HEADS*B, S, Dh)
    k_all = jnp.concatenate(ks, axis=0)
    v_all = jnp.concatenate(vs, axis=0)

    s = jnp.einsum("bqd,bkd->bqk", q_all, k_all,
                   preferred_element_type=jnp.float32)          # (HEADS*B, S, S)
    s = s - jnp.max(s, axis=-1, keepdims=True)
    p = jnp.exp(s)
    p = p * pl.reciprocal(jnp.sum(p, axis=-1, keepdims=True), approx=True)
    ctx = jnp.einsum("bqk,bkd->bqd", p, v_all,
                     preferred_element_type=jnp.float32)        # (HEADS*B, S, Dh)

    # Re-assemble heads along the lane axis and apply Wo as ONE matmul.
    ctx_cat = jnp.concatenate(
        [ctx[h * BATCH:(h + 1) * BATCH] for h in range(HEADS)], axis=-1)  # (B, S, H)
    attn_out = jnp.dot(ctx_cat.reshape(BATCH * SEQ, HIDDEN), wo,
                       preferred_element_type=jnp.float32) + bo
    x1 = _layernorm(attn_out + xf, ln1g, ln1b)

    inter = _gelu(jnp.dot(x1, wi, preferred_element_type=jnp.float32) + bi)
    ffn_out = jnp.dot(inter, wo2_ref[0], preferred_element_type=jnp.float32) + bo2
    x2 = _layernorm(ffn_out + x1, ln2g, ln2b)

    act_ref[...] = x2                                           # carry to next layer

    # Pooler + BertPreTrainingHeads fused into the LAST grid step (no 2nd launch).
    @pl.when(layer == pl.num_programs(0) - 1)
    def _():
        wh = wh_ref[...]                                        # (H, 384)
        vh = vh_ref[...]                                        # (8, 128)
        dec_w = wh[:, DEC_OFF:DEC_OFF + VOCAB]
        sr_w = wh[:, SR_OFF:SR_OFF + SR_PAD]                    # zero-padded to 128 lanes
        pool_w = wh[:, POOL_OFF:POOL_OFF + HIDDEN]
        trans_w = wh[:, TRANS_OFF:TRANS_OFF + HIDDEN]
        dec_b = vh[H_DECB:H_DECB + 1, :VOCAB]
        sr_b = vh[H_SRB:H_SRB + 1, :]
        pool_b = vh[H_POOLB:H_POOLB + 1, :HIDDEN]
        trans_b = vh[H_TRANSB:H_TRANSB + 1, :HIDDEN]
        tln_g = vh[H_TLNG:H_TLNG + 1, :HIDDEN]
        tln_b = vh[H_TLNB:H_TLNB + 1, :HIDDEN]

        # BertPooler + NSP head.  dense/tanh are row-wise, so compute for all
        # tokens; the wrapper slices out the first-token rows (identical math).
        pooled = jnp.tanh(jnp.dot(x2, pool_w, preferred_element_type=jnp.float32)
                          + pool_b)
        sr_ref[...] = (jnp.dot(pooled, sr_w, preferred_element_type=jnp.float32)
                       + sr_b)                                  # lane-dense (M, 128)

        # BertLMPredictionHead: transform (dense + gelu + LN, no residual) + decoder.
        t = _gelu(jnp.dot(x2, trans_w, preferred_element_type=jnp.float32) + trans_b)
        t = _layernorm(t, tln_g, tln_b)
        pred_ref[...] = (jnp.dot(t, dec_w, preferred_element_type=jnp.float32)
                         + dec_b)


# ----------------------------- forward pass -----------------------------
def stage1_forward(packed, x):
    b, s, h = x.shape
    m = b * s
    xf = x.reshape(m, h)

    pred_flat, sr_full = pl.pallas_call(
        _stage1_kernel,
        grid=(NUM_LAYERS,),
        in_specs=[
            pl.BlockSpec((m, h), lambda l: (0, 0)),                        # x
            pl.BlockSpec((1, HIDDEN, W_IN_COLS), lambda l: (l, 0, 0)),     # w_in
            pl.BlockSpec((1, INTER, HIDDEN), lambda l: (l, 0, 0)),         # wo2
            pl.BlockSpec((1, 8, VEC_COLS), lambda l: (l, 0, 0)),           # per-layer vecs
            pl.BlockSpec((HIDDEN, WH_COLS), lambda l: (0, 0)),             # head matrices
            pl.BlockSpec((8, 128), lambda l: (0, 0)),                      # head vecs
        ],
        out_specs=(pl.BlockSpec((m, VOCAB), lambda l: (0, 0)),
                   pl.BlockSpec((m, SR_PAD), lambda l: (0, 0))),
        out_shape=(jax.ShapeDtypeStruct((m, VOCAB), jnp.float32),
                   jax.ShapeDtypeStruct((m, SR_PAD), jnp.float32)),
        scratch_shapes=[pltpu.VMEM((m, h), jnp.float32)],
        compiler_params=pltpu.CompilerParams(
            dimension_semantics=("arbitrary",)),
    )(xf, packed["w_in"], packed["wo2"], packed["vecs"],
      packed["w_heads"], packed["v_heads"])

    prediction_scores = pred_flat.reshape(b, s, VOCAB)
    seq_relationship = sr_full.reshape(b, s, SR_PAD)[:, 0, :2]   # first-token rows
    return prediction_scores, seq_relationship


# ----------------------------- parameters -----------------------------
def init_params(key):
    keys = iter(jax.random.split(key, 8 * NUM_LAYERS + 8))

    def linear(k, fan_in, fan_out):
        w = INIT_RANGE * jax.random.normal(k, (fan_in, fan_out), jnp.float32)
        return w, jnp.zeros((fan_out,), jnp.float32)

    layers = []
    for _ in range(NUM_LAYERS):
        p = {}
        p["wq"], p["bq"] = linear(next(keys), HIDDEN, HIDDEN)
        p["wk"], p["bk"] = linear(next(keys), HIDDEN, HIDDEN)
        p["wv"], p["bv"] = linear(next(keys), HIDDEN, HIDDEN)
        p["wo"], p["bo"] = linear(next(keys), HIDDEN, HIDDEN)
        p["ln1_g"] = jnp.ones((HIDDEN,), jnp.float32)
        p["ln1_b"] = jnp.zeros((HIDDEN,), jnp.float32)
        p["wi"], p["bi"] = linear(next(keys), HIDDEN, INTER)
        p["wo2"], p["bo2"] = linear(next(keys), INTER, HIDDEN)
        p["ln2_g"] = jnp.ones((HIDDEN,), jnp.float32)
        p["ln2_b"] = jnp.zeros((HIDDEN,), jnp.float32)
        layers.append(p)

    params = {"layers": layers}
    params["pooler_w"], params["pooler_b"] = linear(next(keys), HIDDEN, HIDDEN)
    params["trans_w"], params["trans_b"] = linear(next(keys), HIDDEN, HIDDEN)
    params["trans_ln_g"] = jnp.ones((HIDDEN,), jnp.float32)
    params["trans_ln_b"] = jnp.zeros((HIDDEN,), jnp.float32)
    params["dec_w"], params["dec_b"] = linear(next(keys), HIDDEN, VOCAB)
    params["sr_w"], params["sr_b"] = linear(next(keys), HIDDEN, 2)
    return params


def pack_params(raw):
    """Fuse Q|K|V (attention scale folded into Wq/bq), pack the 12 per-layer
    tensors into 3 layer-stacked buffers, and pack head weights into one
    lane-padded matrix slab + one vector slab."""
    scale = 1.0 / math.sqrt(HEAD_DIM)
    layers = raw["layers"]
    num_layers = len(layers)

    w_in = jnp.zeros((num_layers, HIDDEN, W_IN_COLS), jnp.float32)
    wo2 = jnp.zeros((num_layers, INTER, HIDDEN), jnp.float32)
    vecs = jnp.zeros((num_layers, 8, VEC_COLS), jnp.float32)
    for i, p in enumerate(layers):
        wqkv = jnp.concatenate([p["wq"] * scale, p["wk"], p["wv"]], axis=1)
        bqkv = jnp.concatenate([p["bq"] * scale, p["bk"], p["bv"]], axis=0)
        w_in = w_in.at[i, :, QKV_OFF:QKV_OFF + 3 * HIDDEN].set(wqkv)
        w_in = w_in.at[i, :, WI_OFF:WI_OFF + INTER].set(p["wi"])
        w_in = w_in.at[i, :, WO_OFF:WO_OFF + HIDDEN].set(p["wo"])
        wo2 = wo2.at[i].set(p["wo2"])
        vecs = vecs.at[i, V_BQKV, :3 * HIDDEN].set(bqkv)
        vecs = vecs.at[i, V_BO, :HIDDEN].set(p["bo"])
        vecs = vecs.at[i, V_LN1G, :HIDDEN].set(p["ln1_g"])
        vecs = vecs.at[i, V_LN1B, :HIDDEN].set(p["ln1_b"])
        vecs = vecs.at[i, V_BI, :INTER].set(p["bi"])
        vecs = vecs.at[i, V_BO2, :HIDDEN].set(p["bo2"])
        vecs = vecs.at[i, V_LN2G, :HIDDEN].set(p["ln2_g"])
        vecs = vecs.at[i, V_LN2B, :HIDDEN].set(p["ln2_b"])

    w_heads = jnp.zeros((HIDDEN, WH_COLS), jnp.float32)
    w_heads = w_heads.at[:, DEC_OFF:DEC_OFF + VOCAB].set(raw["dec_w"])
    w_heads = w_heads.at[:, SR_OFF:SR_OFF + 2].set(raw["sr_w"])      # zero-padded to 128
    w_heads = w_heads.at[:, POOL_OFF:POOL_OFF + HIDDEN].set(raw["pooler_w"])
    w_heads = w_heads.at[:, TRANS_OFF:TRANS_OFF + HIDDEN].set(raw["trans_w"])

    v_heads = jnp.zeros((8, 128), jnp.float32)
    v_heads = v_heads.at[H_DECB, :VOCAB].set(raw["dec_b"])
    v_heads = v_heads.at[H_SRB, :2].set(raw["sr_b"])
    v_heads = v_heads.at[H_POOLB, :HIDDEN].set(raw["pooler_b"])
    v_heads = v_heads.at[H_TRANSB, :HIDDEN].set(raw["trans_b"])
    v_heads = v_heads.at[H_TLNG, :HIDDEN].set(raw["trans_ln_g"])
    v_heads = v_heads.at[H_TLNB, :HIDDEN].set(raw["trans_ln_b"])

    return {"w_in": w_in, "wo2": wo2, "vecs": vecs,
            "w_heads": w_heads, "v_heads": v_heads}


if __name__ == "__main__":
    key = jax.random.PRNGKey(0)
    pkey, xkey = jax.random.split(key)
    packed = pack_params(init_params(pkey))
    x = jax.random.normal(xkey, (BATCH, SEQ, HIDDEN), jnp.float32)

    fwd = jax.jit(stage1_forward)
    pred, seq_rel = fwd(packed, x)
    jax.block_until_ready((pred, seq_rel))

    assert pred.shape == (BATCH, SEQ, VOCAB)
    assert seq_rel.shape == (BATCH, 2)
    assert bool(jnp.all(jnp.isfinite(pred))) and bool(jnp.all(jnp.isfinite(seq_rel)))
    print("KERNEL_OK")
</pallas_src>

<mosaic_0001>
module attributes {stable_mosaic.version = 11 : i64} {
  func.func @_stage1_kernel(%arg0: i32, %arg1: memref<16x64xf32, #tpu.memory_space<vmem>>, %arg2: memref<1x64x512xf32, #tpu.memory_space<vmem>>, %arg3: memref<1x128x64xf32, #tpu.memory_space<vmem>>, %arg4: memref<1x8x256xf32, #tpu.memory_space<vmem>>, %arg5: memref<64x384xf32, #tpu.memory_space<vmem>>, %arg6: memref<8x128xf32, #tpu.memory_space<vmem>>, %arg7: memref<16x128xf32, #tpu.memory_space<vmem>>, %arg8: memref<16x128xf32, #tpu.memory_space<vmem>>, %arg9: memref<16x64xf32, #tpu.memory_space<vmem>>) attributes {dimension_semantics = [#tpu.dimension_semantics<arbitrary>], iteration_bounds = array<i64: 2>, scalar_prefetch = 0 : i64, scratch_operands = 1 : i64, tpu.core_type = #tpu.core_type<tc>, window_params = [{pipeline_mode = #tpu.pipeline_mode<synchronous>, transform_indices = @transform_0, window_bounds = array<i64: 16, 64>}, {transform_indices = @transform_1, window_bounds = array<i64: 1, 64, 512>}, {transform_indices = @transform_2, window_bounds = array<i64: 1, 128, 64>}, {transform_indices = @transform_3, window_bounds = array<i64: 1, 8, 256>}, {pipeline_mode = #tpu.pipeline_mode<synchronous>, transform_indices = @transform_4, window_bounds = array<i64: 64, 384>}, {pipeline_mode = #tpu.pipeline_mode<synchronous>, transform_indices = @transform_5, window_bounds = array<i64: 8, 128>}, {pipeline_mode = #tpu.pipeline_mode<synchronous>, transform_indices = @transform_6, window_bounds = array<i64: 16, 128>}, {pipeline_mode = #tpu.pipeline_mode<synchronous>, transform_indices = @transform_7, window_bounds = array<i64: 16, 128>}]} {
    %c0_i32 = arith.constant 0 : i32
    %0 = arith.cmpi eq, %arg0, %c0_i32 : i32
    %1 = arith.extui %0 : i1 to i32
    %c0_i32_0 = arith.constant 0 : i32
    %2 = arith.cmpi ne, %1, %c0_i32_0 : i32
    scf.if %2 {
      %c0_34 = arith.constant 0 : index
      %c0_35 = arith.constant 0 : index
      %132 = vector.load %arg1[%c0_34, %c0_35] : memref<16x64xf32, #tpu.memory_space<vmem>>, vector<16x64xf32>
      %c0_36 = arith.constant 0 : index
      %c0_37 = arith.constant 0 : index
      %133 = vector.load %arg9[%c0_36, %c0_37] : memref<16x64xf32, #tpu.memory_space<vmem>>, vector<16x64xf32>
      tpu.vector_store %arg9[%c0_36, %c0_37], %132 {strides = array<i32>} : memref<16x64xf32, #tpu.memory_space<vmem>>, vector<16x64xf32>,
    } else {
    }
    %c0 = arith.constant 0 : index
    %c0_1 = arith.constant 0 : index
    %3 = vector.load %arg9[%c0, %c0_1] : memref<16x64xf32, #tpu.memory_space<vmem>>, vector<16x64xf32>
    %c0_2 = arith.constant 0 : index
    %c0_3 = arith.constant 0 : index
    %c0_4 = arith.constant 0 : index
    %4 = vector.load %arg2[%c0_2, %c0_3, %c0_4] : memref<1x64x512xf32, #tpu.memory_space<vmem>>, vector<1x64x512xf32>
    %5 = vector.shape_cast %4 : vector<1x64x512xf32> to vector<64x512xf32>
    %c0_5 = arith.constant 0 : index
    %c0_6 = arith.constant 0 : index
    %c0_7 = arith.constant 0 : index
    %6 = vector.load %arg4[%c0_5, %c0_6, %c0_7] : memref<1x8x256xf32, #tpu.memory_space<vmem>>, vector<1x8x256xf32>
    %7 = vector.shape_cast %6 : vector<1x8x256xf32> to vector<8x256xf32>
    %8 = vector.extract_strided_slice %5 {offsets = [0, 0], sizes = [64, 192], strides = [1, 1]} : vector<64x512xf32> to vector<64x192xf32>
    %9 = vector.extract_strided_slice %5 {offsets = [0, 256], sizes = [64, 128], strides = [1, 1]} : vector<64x512xf32> to vector<64x128xf32>
    %10 = vector.extract_strided_slice %5 {offsets = [0, 384], sizes = [64, 64], strides = [1, 1]} : vector<64x512xf32> to vector<64x64xf32>
    %11 = vector.extract_strided_slice %7 {offsets = [0, 0], sizes = [1, 192], strides = [1, 1]} : vector<8x256xf32> to vector<1x192xf32>
    %12 = vector.extract_strided_slice %7 {offsets = [1, 0], sizes = [1, 64], strides = [1, 1]} : vector<8x256xf32> to vector<1x64xf32>
    %13 = vector.extract_strided_slice %7 {offsets = [2, 0], sizes = [1, 64], strides = [1, 1]} : vector<8x256xf32> to vector<1x64xf32>
    %14 = vector.extract_strided_slice %7 {offsets = [3, 0], sizes = [1, 64], strides = [1, 1]} : vector<8x256xf32> to vector<1x64xf32>
    %15 = vector.extract_strided_slice %7 {offsets = [4, 0], sizes = [1, 128], strides = [1, 1]} : vector<8x256xf32> to vector<1x128xf32>
    %16 = vector.extract_strided_slice %7 {offsets = [5, 0], sizes = [1, 64], strides = [1, 1]} : vector<8x256xf32> to vector<1x64xf32>
    %17 = vector.extract_strided_slice %7 {offsets = [6, 0], sizes = [1, 64], strides = [1, 1]} : vector<8x256xf32> to vector<1x64xf32>
    %18 = vector.extract_strided_slice %7 {offsets = [7, 0], sizes = [1, 64], strides = [1, 1]} : vector<8x256xf32> to vector<1x64xf32>
    %cst = arith.constant dense<0.000000e+00> : vector<16x192xf32>
    %19 = tpu.matmul %3, %8, %cst {dimension_numbers = #tpu.dot_dimension_numbers<[1], [0], [0], [1], [0, 0, 1, 1], [], []>} : vector<16x64xf32>, vector<64x192xf32>, vector<16x192xf32> -> vector<16x192xf32>
    %20 = vector.broadcast %11 : vector<1x192xf32> to vector<16x192xf32>
    %21 = arith.addf %19, %20 : vector<16x192xf32>
    %22 = vector.extract_strided_slice %21 {offsets = [0, 0], sizes = [16, 16], strides = [1, 1]} : vector<16x192xf32> to vector<16x16xf32>
    %23 = vector.shape_cast %22 : vector<16x16xf32> to vector<2x8x16xf32>
    %24 = vector.extract_strided_slice %21 {offsets = [0, 64], sizes = [16, 16], strides = [1, 1]} : vector<16x192xf32> to vector<16x16xf32>
    %25 = vector.shape_cast %24 : vector<16x16xf32> to vector<2x8x16xf32>
    %26 = vector.extract_strided_slice %21 {offsets = [0, 128], sizes = [16, 16], strides = [1, 1]} : vector<16x192xf32> to vector<16x16xf32>
    %27 = vector.shape_cast %26 : vector<16x16xf32> to vector<2x8x16xf32>
    %28 = vector.extract_strided_slice %21 {offsets = [0, 16], sizes = [16, 16], strides = [1, 1]} : vector<16x192xf32> to vector<16x16xf32>
    %29 = vector.shape_cast %28 : vector<16x16xf32> to vector<2x8x16xf32>
    %30 = vector.extract_strided_slice %21 {offsets = [0, 80], sizes = [16, 16], strides = [1, 1]} : vector<16x192xf32> to vector<16x16xf32>
    %31 = vector.shape_cast %30 : vector<16x16xf32> to vector<2x8x16xf32>
    %32 = vector.extract_strided_slice %21 {offsets = [0, 144], sizes = [16, 16], strides = [1, 1]} : vector<16x192xf32> to vector<16x16xf32>
    %33 = vector.shape_cast %32 : vector<16x16xf32> to vector<2x8x16xf32>
    %34 = vector.extract_strided_slice %21 {offsets = [0, 32], sizes = [16, 16], strides = [1, 1]} : vector<16x192xf32> to vector<16x16xf32>
    %35 = vector.shape_cast %34 : vector<16x16xf32> to vector<2x8x16xf32>
    %36 = vector.extract_strided_slice %21 {offsets = [0, 96], sizes = [16, 16], strides = [1, 1]} : vector<16x192xf32> to vector<16x16xf32>
    %37 = vector.shape_cast %36 : vector<16x16xf32> to vector<2x8x16xf32>
    %38 = vector.extract_strided_slice %21 {offsets = [0, 160], sizes = [16, 16], strides = [1, 1]} : vector<16x192xf32> to vector<16x16xf32>
    %39 = vector.shape_cast %38 : vector<16x16xf32> to vector<2x8x16xf32>
    %40 = vector.extract_strided_slice %21 {offsets = [0, 48], sizes = [16, 16], strides = [1, 1]} : vector<16x192xf32> to vector<16x16xf32>
    %41 = vector.shape_cast %40 : vector<16x16xf32> to vector<2x8x16xf32>
    %42 = vector.extract_strided_slice %21 {offsets = [0, 112], sizes = [16, 16], strides = [1, 1]} : vector<16x192xf32> to vector<16x16xf32>
    %43 = vector.shape_cast %42 : vector<16x16xf32> to vector<2x8x16xf32>
    %44 = vector.extract_strided_slice %21 {offsets = [0, 176], sizes = [16, 16], strides = [1, 1]} : vector<16x192xf32> to vector<16x16xf32>
    %45 = vector.shape_cast %44 : vector<16x16xf32> to vector<2x8x16xf32>
    %46 = tpu.concatenate %23, %29, %35, %41 in 0 : vector<2x8x16xf32>, vector<2x8x16xf32>, vector<2x8x16xf32>, vector<2x8x16xf32> -> vector<8x8x16xf32>
    %47 = tpu.concatenate %25, %31, %37, %43 in 0 : vector<2x8x16xf32>, vector<2x8x16xf32>, vector<2x8x16xf32>, vector<2x8x16xf32> -> vector<8x8x16xf32>
    %48 = tpu.concatenate %27, %33, %39, %45 in 0 : vector<2x8x16xf32>, vector<2x8x16xf32>, vector<2x8x16xf32>, vector<2x8x16xf32> -> vector<8x8x16xf32>
    "tpu.trace_start"() <{level = 10 : i32, message = "bqd,bkd->bqk"}> : () -> ()
    %cst_8 = arith.constant dense<0.000000e+00> : vector<8x8x8xf32>
    %49 = tpu.matmul %46, %47, %cst_8 {dimension_numbers = #tpu.dot_dimension_numbers<[2], [2], [1], [1], [0, 0, 0, 1, 1, 1], [0], [0]>} : vector<8x8x16xf32>, vector<8x8x16xf32>, vector<8x8x8xf32> -> vector<8x8x8xf32>
    "tpu.trace_stop"() : () -> ()
    %cst_9 = arith.constant dense<0xFF800000> : vector<8x8xf32>
    %50 = vector.multi_reduction <maximumf>, %49, %cst_9 [2] : vector<8x8x8xf32> to vector<8x8xf32>
    %51 = vector.shape_cast %50 : vector<8x8xf32> to vector<8x8x1xf32>
    %52 = vector.broadcast %51 : vector<8x8x1xf32> to vector<8x8x8xf32>
    %53 = arith.subf %49, %52 : vector<8x8x8xf32>
    %54 = math.exp %53 : vector<8x8x8xf32>
    %cst_10 = arith.constant dense<0.000000e+00> : vector<8x8xf32>
    %55 = vector.multi_reduction <add>, %54, %cst_10 [2] : vector<8x8x8xf32> to vector<8x8xf32>
    %56 = vector.shape_cast %55 : vector<8x8xf32> to vector<8x8x1xf32>
    %57 = tpu.reciprocal %56 {approx = true} : vector<8x8x1xf32> -> vector<8x8x1xf32>
    %58 = vector.broadcast %57 : vector<8x8x1xf32> to vector<8x8x8xf32>
    %59 = arith.mulf %54, %58 : vector<8x8x8xf32>
    "tpu.trace_start"() <{level = 10 : i32, message = "bqk,bkd->bqd"}> : () -> ()
    %cst_11 = arith.constant dense<0.000000e+00> : vector<8x8x16xf32>
    %60 = tpu.matmul %59, %48, %cst_11 {dimension_numbers = #tpu.dot_dimension_numbers<[2], [1], [1], [2], [0, 0, 0, 1, 1, 2], [0], [0]>} : vector<8x8x8xf32>, vector<8x8x16xf32>, vector<8x8x16xf32> -> vector<8x8x16xf32>
    "tpu.trace_stop"() : () -> ()
    %61 = vector.extract_strided_slice %60 {offsets = [0, 0, 0], sizes = [2, 8, 16], strides = [1, 1, 1]} : vector<8x8x16xf32> to vector<2x8x16xf32>
    %62 = vector.extract_strided_slice %60 {offsets = [2, 0, 0], sizes = [2, 8, 16], strides = [1, 1, 1]} : vector<8x8x16xf32> to vector<2x8x16xf32>
    %63 = vector.extract_strided_slice %60 {offsets = [4, 0, 0], sizes = [2, 8, 16], strides = [1, 1, 1]} : vector<8x8x16xf32> to vector<2x8x16xf32>
    %64 = vector.extract_strided_slice %60 {offsets = [6, 0, 0], sizes = [2, 8, 16], strides = [1, 1, 1]} : vector<8x8x16xf32> to vector<2x8x16xf32>
    %65 = tpu.concatenate %61, %62, %63, %64 in 2 : vector<2x8x16xf32>, vector<2x8x16xf32>, vector<2x8x16xf32>, vector<2x8x16xf32> -> vector<2x8x64xf32>
    %66 = vector.shape_cast %65 : vector<2x8x64xf32> to vector<16x64xf32>
    %cst_12 = arith.constant dense<0.000000e+00> : vector<16x64xf32>
    %67 = tpu.matmul %66, %10, %cst_12 {dimension_numbers = #tpu.dot_dimension_numbers<[1], [0], [0], [1], [0, 0, 1, 1], [], []>} : vector<16x64xf32>, vector<64x64xf32>, vector<16x64xf32> -> vector<16x64xf32>
    %68 = vector.broadcast %12 : vector<1x64xf32> to vector<16x64xf32>
    %69 = arith.addf %67, %68 : vector<16x64xf32>
    %70 = arith.addf %69, %3 : vector<16x64xf32>
    %cst_13 = arith.constant dense<0.000000e+00> : vector<16xf32>
    %71 = vector.multi_reduction <add>, %70, %cst_13 [1] : vector<16x64xf32> to vector<16xf32>
    %72 = vector.shape_cast %71 : vector<16xf32> to vector<16x1xf32>
    %cst_14 = arith.constant 6.400000e+01 : f32
    %73 = vector.broadcast %cst_14 : f32 to vector<16x1xf32>
    %74 = arith.divf %72, %73 : vector<16x1xf32>
    %75 = vector.broadcast %74 : vector<16x1xf32> to vector<16x64xf32>
    %76 = arith.subf %70, %75 : vector<16x64xf32>
    %77 = arith.mulf %76, %76 : vector<16x64xf32>
    %cst_15 = arith.constant dense<0.000000e+00> : vector<16xf32>
    %78 = vector.multi_reduction <add>, %77, %cst_15 [1] : vector<16x64xf32> to vector<16xf32>
    %79 = vector.shape_cast %78 : vector<16xf32> to vector<16x1xf32>
    %cst_16 = arith.constant 6.400000e+01 : f32
    %80 = vector.broadcast %cst_16 : f32 to vector<16x1xf32>
    %81 = arith.divf %79, %80 : vector<16x1xf32>
    %cst_17 = arith.constant 9.99999996E-13 : f32
    %82 = vector.broadcast %cst_17 : f32 to vector<16x1xf32>
    %83 = arith.addf %81, %82 : vector<16x1xf32>
    %84 = math.rsqrt %83 : vector<16x1xf32>
    %85 = vector.broadcast %84 : vector<16x1xf32> to vector<16x64xf32>
    %86 = arith.mulf %76, %85 : vector<16x64xf32>
    %87 = vector.broadcast %13 : vector<1x64xf32> to vector<16x64xf32>
    %88 = arith.mulf %86, %87 : vector<16x64xf32>
    %89 = vector.broadcast %14 : vector<1x64xf32> to vector<16x64xf32>
    %90 = arith.addf %88, %89 : vector<16x64xf32>
    %cst_18 = arith.constant dense<0.000000e+00> : vector<16x128xf32>
    %91 = tpu.matmul %90, %9, %cst_18 {dimension_numbers = #tpu.dot_dimension_numbers<[1], [0], [0], [1], [0, 0, 1, 1], [], []>} : vector<16x64xf32>, vector<64x128xf32>, vector<16x128xf32> -> vector<16x128xf32>
    %92 = vector.broadcast %15 : vector<1x128xf32> to vector<16x128xf32>
    %93 = arith.addf %91, %92 : vector<16x128xf32>
    %cst_19 = arith.constant 5.000000e-01 : f32
    %94 = vector.broadcast %cst_19 : f32 to vector<16x128xf32>
    %95 = arith.mulf %93, %94 : vector<16x128xf32>
    %cst_20 = arith.constant 0.707106769 : f32
    %96 = vector.broadcast %cst_20 : f32 to vector<16x128xf32>
    %97 = arith.mulf %93, %96 : vector<16x128xf32>
    %98 = math.erf %97 : vector<16x128xf32>
    %cst_21 = arith.constant 1.000000e+00 : f32
    %99 = vector.broadcast %cst_21 : f32 to vector<16x128xf32>
    %100 = arith.addf %99, %98 : vector<16x128xf32>
    %101 = arith.mulf %95, %100 : vector<16x128xf32>
    %c0_22 = arith.constant 0 : index
    %c0_23 = arith.constant 0 : index
    %c0_24 = arith.constant 0 : index
    %102 = vector.load %arg3[%c0_22, %c0_23, %c0_24] : memref<1x128x64xf32, #tpu.memory_space<vmem>>, vector<1x128x64xf32>
    %103 = vector.shape_cast %102 : vector<1x128x64xf32> to vector<128x64xf32>
    %cst_25 = arith.constant dense<0.000000e+00> : vector<16x64xf32>
    %104 = tpu.matmul %101, %103, %cst_25 {dimension_numbers = #tpu.dot_dimension_numbers<[1], [0], [0], [1], [0, 0, 1, 1], [], []>} : vector<16x128xf32>, vector<128x64xf32>, vector<16x64xf32> -> vector<16x64xf32>
    %105 = vector.broadcast %16 : vector<1x64xf32> to vector<16x64xf32>
    %106 = arith.addf %104, %105 : vector<16x64xf32>
    %107 = arith.addf %106, %90 : vector<16x64xf32>
    %cst_26 = arith.constant dense<0.000000e+00> : vector<16xf32>
    %108 = vector.multi_reduction <add>, %107, %cst_26 [1] : vector<16x64xf32> to vector<16xf32>
    %109 = vector.shape_cast %108 : vector<16xf32> to vector<16x1xf32>
    %cst_27 = arith.constant 6.400000e+01 : f32
    %110 = vector.broadcast %cst_27 : f32 to vector<16x1xf32>
    %111 = arith.divf %109, %110 : vector<16x1xf32>
    %112 = vector.broadcast %111 : vector<16x1xf32> to vector<16x64xf32>
    %113 = arith.subf %107, %112 : vector<16x64xf32>
    %114 = arith.mulf %113, %113 : vector<16x64xf32>
    %cst_28 = arith.constant dense<0.000000e+00> : vector<16xf32>
    %115 = vector.multi_reduction <add>, %114, %cst_28 [1] : vector<16x64xf32> to vector<16xf32>
    %116 = vector.shape_cast %115 : vector<16xf32> to vector<16x1xf32>
    %cst_29 = arith.constant 6.400000e+01 : f32
    %117 = vector.broadcast %cst_29 : f32 to vector<16x1xf32>
    %118 = arith.divf %116, %117 : vector<16x1xf32>
    %cst_30 = arith.constant 9.99999996E-13 : f32
    %119 = vector.broadcast %cst_30 : f32 to vector<16x1xf32>
    %120 = arith.addf %118, %119 : vector<16x1xf32>
    %121 = math.rsqrt %120 : vector<16x1xf32>
    %122 = vector.broadcast %121 : vector<16x1xf32> to vector<16x64xf32>
    %123 = arith.mulf %113, %122 : vector<16x64xf32>
    %124 = vector.broadcast %17 : vector<1x64xf32> to vector<16x64xf32>
    %125 = arith.mulf %123, %124 : vector<16x64xf32>
    %126 = vector.broadcast %18 : vector<1x64xf32> to vector<16x64xf32>
    %127 = arith.addf %125, %126 : vector<16x64xf32>
    %c0_31 = arith.constant 0 : index
    %c0_32 = arith.constant 0 : index
    %128 = vector.load %arg9[%c0_31, %c0_32] : memref<16x64xf32, #tpu.memory_space<vmem>>, vector<16x64xf32>
    tpu.vector_store %arg9[%c0_31, %c0_32], %127 {strides = array<i32>} : memref<16x64xf32, #tpu.memory_space<vmem>>, vector<16x64xf32>,
    %c1_i32 = arith.constant 1 : i32
    %129 = arith.cmpi eq, %arg0, %c1_i32 : i32
    %130 = arith.extui %129 : i1 to i32
    %c0_i32_33 = arith.constant 0 : i32
    %131 = arith.cmpi ne, %130, %c0_i32_33 : i32
    scf.if %131 {
      %c0_34 = arith.constant 0 : index
      %c0_35 = arith.constant 0 : index
      %132 = vector.load %arg5[%c0_34, %c0_35] : memref<64x384xf32, #tpu.memory_space<vmem>>, vector<64x384xf32>
      %c0_36 = arith.constant 0 : index
      %c0_37 = arith.constant 0 : index
      %133 = vector.load %arg6[%c0_36, %c0_37] : memref<8x128xf32, #tpu.memory_space<vmem>>, vector<8x128xf32>
      %134 = vector.extract_strided_slice %132 {offsets = [0, 0], sizes = [64, 128], strides = [1, 1]} : vector<64x384xf32> to vector<64x128xf32>
      %135 = vector.extract_strided_slice %132 {offsets = [0, 128], sizes = [64, 128], strides = [1, 1]} : vector<64x384xf32> to vector<64x128xf32>
      %136 = vector.extract_strided_slice %132 {offsets = [0, 256], sizes = [64, 64], strides = [1, 1]} : vector<64x384xf32> to vector<64x64xf32>
      %137 = vector.extract_strided_slice %132 {offsets = [0, 320], sizes = [64, 64], strides = [1, 1]} : vector<64x384xf32> to vector<64x64xf32>
      %138 = vector.extract_strided_slice %133 {offsets = [0, 0], sizes = [1, 128], strides = [1, 1]} : vector<8x128xf32> to vector<1x128xf32>
      %139 = vector.extract_strided_slice %133 {offsets = [1, 0], sizes = [1, 128], strides = [1, 1]} : vector<8x128xf32> to vector<1x128xf32>
      %140 = vector.extract_strided_slice %133 {offsets = [2, 0], sizes = [1, 64], strides = [1, 1]} : vector<8x128xf32> to vector<1x64xf32>
      %141 = vector.extract_strided_slice %133 {offsets = [3, 0], sizes = [1, 64], strides = [1, 1]} : vector<8x128xf32> to vector<1x64xf32>
      %142 = vector.extract_strided_slice %133 {offsets = [4, 0], sizes = [1, 64], strides = [1, 1]} : vector<8x128xf32> to vector<1x64xf32>
      %143 = vector.extract_strided_slice %133 {offsets = [5, 0], sizes = [1, 64], strides = [1, 1]} : vector<8x128xf32> to vector<1x64xf32>
      %cst_38 = arith.constant dense<0.000000e+00> : vector<16x64xf32>
      %144 = tpu.matmul %127, %136, %cst_38 {dimension_numbers = #tpu.dot_dimension_numbers<[1], [0], [0], [1], [0, 0, 1, 1], [], []>} : vector<16x64xf32>, vector<64x64xf32>, vector<16x64xf32> -> vector<16x64xf32>
      %145 = vector.broadcast %140 : vector<1x64xf32> to vector<16x64xf32>
      %146 = arith.addf %144, %145 : vector<16x64xf32>
      %147 = math.tanh %146 : vector<16x64xf32>
      %cst_39 = arith.constant dense<0.000000e+00> : vector<16x128xf32>
      %148 = tpu.matmul %147, %135, %cst_39 {dimension_numbers = #tpu.dot_dimension_numbers<[1], [0], [0], [1], [0, 0, 1, 1], [], []>} : vector<16x64xf32>, vector<64x128xf32>, vector<16x128xf32> -> vector<16x128xf32>
      %149 = vector.broadcast %139 : vector<1x128xf32> to vector<16x128xf32>
      %150 = arith.addf %148, %149 : vector<16x128xf32>
      %c0_40 = arith.constant 0 : index
      %c0_41 = arith.constant 0 : index
      %151 = vector.load %arg8[%c0_40, %c0_41] : memref<16x128xf32, #tpu.memory_space<vmem>>, vector<16x128xf32>
      tpu.vector_store %arg8[%c0_40, %c0_41], %150 {strides = array<i32>} : memref<16x128xf32, #tpu.memory_space<vmem>>, vector<16x128xf32>,
      %cst_42 = arith.constant dense<0.000000e+00> : vector<16x64xf32>
      %152 = tpu.matmul %127, %137, %cst_42 {dimension_numbers = #tpu.dot_dimension_numbers<[1], [0], [0], [1], [0, 0, 1, 1], [], []>} : vector<16x64xf32>, vector<64x64xf32>, vector<16x64xf32> -> vector<16x64xf32>
      %153 = vector.broadcast %141 : vector<1x64xf32> to vector<16x64xf32>
      %154 = arith.addf %152, %153 : vector<16x64xf32>
      %cst_43 = arith.constant 5.000000e-01 : f32
      %155 = vector.broadcast %cst_43 : f32 to vector<16x64xf32>
      %156 = arith.mulf %154, %155 : vector<16x64xf32>
      %cst_44 = arith.constant 0.707106769 : f32
      %157 = vector.broadcast %cst_44 : f32 to vector<16x64xf32>
      %158 = arith.mulf %154, %157 : vector<16x64xf32>
      %159 = math.erf %158 : vector<16x64xf32>
      %cst_45 = arith.constant 1.000000e+00 : f32
      %160 = vector.broadcast %cst_45 : f32 to vector<16x64xf32>
      %161 = arith.addf %160, %159 : vector<16x64xf32>
      %162 = arith.mulf %156, %161 : vector<16x64xf32>
      %cst_46 = arith.constant dense<0.000000e+00> : vector<16xf32>
      %163 = vector.multi_reduction <add>, %162, %cst_46 [1] : vector<16x64xf32> to vector<16xf32>
      %164 = vector.shape_cast %163 : vector<16xf32> to vector<16x1xf32>
      %cst_47 = arith.constant 6.400000e+01 : f32
      %165 = vector.broadcast %cst_47 : f32 to vector<16x1xf32>
      %166 = arith.divf %164, %165 : vector<16x1xf32>
      %167 = vector.broadcast %166 : vector<16x1xf32> to vector<16x64xf32>
      %168 = arith.subf %162, %167 : vector<16x64xf32>
      %169 = arith.mulf %168, %168 : vector<16x64xf32>
      %cst_48 = arith.constant dense<0.000000e+00> : vector<16xf32>
      %170 = vector.multi_reduction <add>, %169, %cst_48 [1] : vector<16x64xf32> to vector<16xf32>
      %171 = vector.shape_cast %170 : vector<16xf32> to vector<16x1xf32>
      %cst_49 = arith.constant 6.400000e+01 : f32
      %172 = vector.broadcast %cst_49 : f32 to vector<16x1xf32>
      %173 = arith.divf %171, %172 : vector<16x1xf32>
      %cst_50 = arith.constant 9.99999996E-13 : f32
      %174 = vector.broadcast %cst_50 : f32 to vector<16x1xf32>
      %175 = arith.addf %173, %174 : vector<16x1xf32>
      %176 = math.rsqrt %175 : vector<16x1xf32>
      %177 = vector.broadcast %176 : vector<16x1xf32> to vector<16x64xf32>
      %178 = arith.mulf %168, %177 : vector<16x64xf32>
      %179 = vector.broadcast %142 : vector<1x64xf32> to vector<16x64xf32>
      %180 = arith.mulf %178, %179 : vector<16x64xf32>
      %181 = vector.broadcast %143 : vector<1x64xf32> to vector<16x64xf32>
      %182 = arith.addf %180, %181 : vector<16x64xf32>
      %cst_51 = arith.constant dense<0.000000e+00> : vector<16x128xf32>
      %183 = tpu.matmul %182, %134, %cst_51 {dimension_numbers = #tpu.dot_dimension_numbers<[1], [0], [0], [1], [0, 0, 1, 1], [], []>} : vector<16x64xf32>, vector<64x128xf32>, vector<16x128xf32> -> vector<16x128xf32>
      %184 = vector.broadcast %138 : vector<1x128xf32> to vector<16x128xf32>
      %185 = arith.addf %183, %184 : vector<16x128xf32>
      %c0_52 = arith.constant 0 : index
      %c0_53 = arith.constant 0 : index
      %186 = vector.load %arg7[%c0_52, %c0_53] : memref<16x128xf32, #tpu.memory_space<vmem>>, vector<16x128xf32>
      tpu.vector_store %arg7[%c0_52, %c0_53], %185 {strides = array<i32>} : memref<16x128xf32, #tpu.memory_space<vmem>>, vector<16x128xf32>,
    } else {
    }
    return
  }
  func.func @transform_0(%arg0: i32) -> (i32, i32) {
    %c0_i32 = arith.constant 0 : i32
    %c0_i32_0 = arith.constant 0 : i32
    %c0_i32_1 = arith.constant 0 : i32
    return %c0_i32, %c0_i32_0 : i32, i32
  }
  func.func @transform_1(%arg0: i32) -> (i32, i32, i32) {
    %c0_i32 = arith.constant 0 : i32
    %c0_i32_0 = arith.constant 0 : i32
    %c0_i32_1 = arith.constant 0 : i32
    return %arg0, %c0_i32, %c0_i32_0 : i32, i32, i32
  }
  func.func @transform_2(%arg0: i32) -> (i32, i32, i32) {
    %c0_i32 = arith.constant 0 : i32
    %c0_i32_0 = arith.constant 0 : i32
    %c0_i32_1 = arith.constant 0 : i32
    return %arg0, %c0_i32, %c0_i32_0 : i32, i32, i32
  }
  func.func @transform_3(%arg0: i32) -> (i32, i32, i32) {
    %c0_i32 = arith.constant 0 : i32
    %c0_i32_0 = arith.constant 0 : i32
    %c0_i32_1 = arith.constant 0 : i32
    return %arg0, %c0_i32, %c0_i32_0 : i32, i32, i32
  }
  func.func @transform_4(%arg0: i32) -> (i32, i32) {
    %c0_i32 = arith.constant 0 : i32
    %c0_i32_0 = arith.constant 0 : i32
    %c0_i32_1 = arith.constant 0 : i32
    return %c0_i32, %c0_i32_0 : i32, i32
  }
  func.func @transform_5(%arg0: i32) -> (i32, i32) {
    %c0_i32 = arith.constant 0 : i32
    %c0_i32_0 = arith.constant 0 : i32
    %c0_i32_1 = arith.constant 0 : i32
    return %c0_i32, %c0_i32_0 : i32, i32
  }
  func.func @transform_6(%arg0: i32) -> (i32, i32) {
    %c0_i32 = arith.constant 0 : i32
    %c0_i32_0 = arith.constant 0 : i32
    %c0_i32_1 = arith.constant 0 : i32
    return %c0_i32, %c0_i32_0 : i32, i32
  }
  func.func @transform_7(%arg0: i32) -> (i32, i32) {
    %c0_i32 = arith.constant 0 : i32
    %c0_i32_0 = arith.constant 0 : i32
    %c0_i32_1 = arith.constant 0 : i32
    return %c0_i32, %c0_i32_0 : i32, i32
  }
}

</mosaic_0001>

<llo_original>
// kernel: stage1_forward.1
$region0: #{stage1_forward.1}
  #allocation0 [shape = 'u32[]', space=smem, size = 0x4, offset = 0x4, fixed_abs, tag = 'smem constant byte address 0x4 - core index']
  #allocation1 [shape = 'u32[144,128]{1,0:T(1,128)}', space=vmem, size = 0x12000, scoped, tag = 'internal scratch']
  #allocation2 [shape = 'f32[16,64]{1,0:T(8,128)}', space=vmem, size = 0x2000, scoped, tag = 'scratch operand']
  %s0 = inlined_call_operand.vmem [shape: f32[16,64], index: 0, kind: input, shape index: {}]
  %s1 = inlined_call_operand.hbm [shape: f32[2,64,512], index: 1, kind: input, shape index: {}]
  %s2 = inlined_call_operand.vmem [shape: f32[2,128,64], index: 2, kind: input, shape index: {}]
  %s3 = inlined_call_operand.vmem [shape: f32[2,8,256], index: 3, kind: input, shape index: {}]
  %s4 = inlined_call_operand.vmem [shape: f32[64,384], index: 4, kind: input, shape index: {}]
  %s5 = inlined_call_operand.vmem [shape: f32[8,128], index: 5, kind: input, shape index: {}]
  %s6 = inlined_call_operand.hbm [shape: f32[16,128], index: 6, kind: output, shape index: {0}]
  %s7 = inlined_call_operand.vmem [shape: f32[16,128], index: 7, kind: output, shape index: {1}]
  %8 = xla_tuple %s6, %s7
  %s9 = sld [smem:[#allocation0]]
  $region77: #{stage1_forward.1} parent=0
    _
  %s11 = ssub.s32 1, %s9
  %s12 = scalar_select 0, %s11, %s9
  $region1: #{stage1_forward.1} parent=0
    #allocation3 [shape = 'u8[262144]{0}', space=vmem, size = 0x40000, scoped, tag = 'input window, operand 1']
    #allocation4 [shape = 's32[2]{0}', space=sflag, size = 0x8, scoped, tag = 'scoped memory for stage1_forward.1']
    #allocation5 [shape = 's32[2]{0}', space=sflag, size = 0x8, scoped, tag = 'scoped memory for stage1_forward.1']
    #allocation6 [shape = 'u8[8192]{0}', space=vmem, size = 0x2000, scoped, tag = 'output window, operand 0, single buffered']
    %13 = vsyncpa [#allocation4], 0
    %s14 = scalar_lea.sflag [#allocation4], 1
    %15 = vsyncpa %s14, 0
    %16 = vsyncpa [#allocation5], 0
    loop: start=0, step=1, limit=4
    $region2: #{stage1_forward.1} parent=1 // loop_pre_header
      _
    $region3: #{stage1_forward.1} parent=1 // loop_header
      %s18 = sphi 0, %s22
      %p19 = scmp.ge.s32.totalorder %s18, 4
      %s26 = sphi 0, %s26
      %s28 = sphi 0, %s26
      %s29 = sphi 0, %s28
      %s43 = sphi 0, %s29
      %s49 = sphi 0, %s51
      %s52 = sphi 0, %s49
      %s53 = sphi 0, %s52
      %s69 = sphi 0, %s53
      %s75 = sphi 0, %s77
      %s78 = sphi 0, %s75
      %s79 = sphi 0, %s78
      %s95 = sphi 0, %s79
      %s101 = sphi 0, %s103
      %s104 = sphi 0, %s101
      %s105 = sphi 0, %s104
      %s121 = sphi 0, %s105
      %s125 = sphi 0, %s125
      %s127 = sphi 0, %s125
      %s128 = sphi 0, %s127
      %s142 = sphi 0, %s128
      %s146 = sphi 0, %s146
      %s148 = sphi 0, %s146
      %s149 = sphi 0, %s148
      %s163 = sphi 0, %s149
      %s167 = sphi 0, %s167
      %s169 = sphi 0, %s167
      %s170 = sphi 0, %s169
      %s184 = sphi 0, %s170
      %s188 = sphi 0, %s188
      %s190 = sphi 0, %s188
      %s191 = sphi 0, %s190
      %s205 = sphi 0, %s191
    $region4: #{stage1_forward.1} parent=1 // loop_header_branch
      %21 = sbr.rel (%p19) target = $region8
    $region5: #{stage1_forward.1} parent=1 // loop_body
      %s23 = ssub.s32 %s18, 1
      %s24 = ssub.s32 %s18, 2
      %s25 = sadd.s32 %s18, 1
      %s27 = sadd.s32 %s26, 1
      %p30 = scmp.eq.s32.totalorder %s18, 1
      %p31 = scmp.ne.s32.totalorder %s26, %s28
      %p32 = scmp.eq.s32.totalorder %s18, 0
      %p33 = por %p31, %p32
      %p34 = scmp.ne.s32.totalorder %s26, %s28
      %p35 = scmp.eq.s32.totalorder %s23, 1
      %p36 = por %p34, %p35
      %p37 = scmp.ne.s32.totalorder %s28, %s29
      %p38 = scmp.eq.s32.totalorder %s23, 0
      %p39 = por %p37, %p38
      %p40 = scmp.ne.s32.totalorder %s28, %s29
      %p41 = scmp.eq.s32.totalorder %s24, 1
      %p42 = por %p40, %p41
      %p44 = scmp.ne.s32.totalorder %s29, %s43
      %p45 = scmp.eq.s32.totalorder %s24, 0
      %p46 = por %p44, %p45
      %s47 = ssub.s32 %s18, %s25
      %p48 = scmp.eq.s32.totalorder %s47, 0
      %s50 = sadd.s32 %s49, 1
      %s51 = scalar_select %p48, %s49, %s50
      %p54 = pneg %p48
      %p55 = scmp.eq.s32.totalorder %s18, 1
      %p56 = por %p54, %p55
      %p57 = scmp.ne.s32.totalorder %s49, %s52
      %p58 = scmp.eq.s32.totalorder %s18, 0
      %p59 = por %p57, %p58
      %p60 = scmp.ne.s32.totalorder %s49, %s52
      %p61 = scmp.eq.s32.totalorder %s23, 1
      %p62 = por %p60, %p61
      %p63 = scmp.ne.s32.totalorder %s52, %s53
      %p64 = scmp.eq.s32.totalorder %s23, 0
      %p65 = por %p63, %p64
      %p66 = scmp.ne.s32.totalorder %s52, %s53
      %p67 = scmp.eq.s32.totalorder %s24, 1
      %p68 = por %p66, %p67
      %p70 = scmp.ne.s32.totalorder %s53, %s69
      %p71 = scmp.eq.s32.totalorder %s24, 0
      %p72 = por %p70, %p71
      %s73 = ssub.s32 %s18, %s25
      %p74 = scmp.eq.s32.totalorder %s73, 0
      %s76 = sadd.s32 %s75, 1
      %s77 = scalar_select %p74, %s75, %s76
      %p80 = pneg %p74
      %p81 = scmp.eq.s32.totalorder %s18, 1
      %p82 = por %p80, %p81
      %p83 = scmp.ne.s32.totalorder %s75, %s78
      %p84 = scmp.eq.s32.totalorder %s18, 0
      %p85 = por %p83, %p84
      %p86 = scmp.ne.s32.totalorder %s75, %s78
      %p87 = scmp.eq.s32.totalorder %s23, 1
      %p88 = por %p86, %p87
      %p89 = scmp.ne.s32.totalorder %s78, %s79
      %p90 = scmp.eq.s32.totalorder %s23, 0
      %p91 = por %p89, %p90
      %p92 = scmp.ne.s32.totalorder %s78, %s79
      %p93 = scmp.eq.s32.totalorder %s24, 1
      %p94 = por %p92, %p93
      %p96 = scmp.ne.s32.totalorder %s79, %s95
      %p97 = scmp.eq.s32.totalorder %s24, 0
      %p98 = por %p96, %p97
      %s99 = ssub.s32 %s18, %s25
      %p100 = scmp.eq.s32.totalorder %s99, 0
      %s102 = sadd.s32 %s101, 1
      %s103 = scalar_select %p100, %s101, %s102
      %p106 = pneg %p100
      %p107 = scmp.eq.s32.totalorder %s18, 1
      %p108 = por %p106, %p107
      %p109 = scmp.ne.s32.totalorder %s101, %s104
      %p110 = scmp.eq.s32.totalorder %s18, 0
      %p111 = por %p109, %p110
      %p112 = scmp.ne.s32.totalorder %s101, %s104
      %p113 = scmp.eq.s32.totalorder %s23, 1
      %p114 = por %p112, %p113
      %p115 = scmp.ne.s32.totalorder %s104, %s105
      %p116 = scmp.eq.s32.totalorder %s23, 0
      %p117 = por %p115, %p116
      %p118 = scmp.ne.s32.totalorder %s104, %s105
      %p119 = scmp.eq.s32.totalorder %s24, 1
      %p120 = por %p118, %p119
      %p122 = scmp.ne.s32.totalorder %s105, %s121
      %p123 = scmp.eq.s32.totalorder %s24, 0
      %p124 = por %p122, %p123
      %s126 = sadd.s32 %s125, 1
      %p129 = scmp.eq.s32.totalorder %s18, 1
      %p130 = scmp.ne.s32.totalorder %s125, %s127
      %p131 = scmp.eq.s32.totalorder %s18, 0
      %p132 = por %p130, %p131
      %p133 = scmp.ne.s32.totalorder %s125, %s127
      %p134 = scmp.eq.s32.totalorder %s23, 1
      %p135 = por %p133, %p134
      %p136 = scmp.ne.s32.totalorder %s127, %s128
      %p137 = scmp.eq.s32.totalorder %s23, 0
      %p138 = por %p136, %p137
      %p139 = scmp.ne.s32.totalorder %s127, %s128
      %p140 = scmp.eq.s32.totalorder %s24, 1
      %p141 = por %p139, %p140
      %p143 = scmp.ne.s32.totalorder %s128, %s142
      %p144 = scmp.eq.s32.totalorder %s24, 0
      %p145 = por %p143, %p144
      %s147 = sadd.s32 %s146, 1
      %p150 = scmp.eq.s32.totalorder %s18, 1
      %p151 = scmp.ne.s32.totalorder %s146, %s148
      %p152 = scmp.eq.s32.totalorder %s18, 0
      %p153 = por %p151, %p152
      %p154 = scmp.ne.s32.totalorder %s146, %s148
      %p155 = scmp.eq.s32.totalorder %s23, 1
      %p156 = por %p154, %p155
      %p157 = scmp.ne.s32.totalorder %s148, %s149
      %p158 = scmp.eq.s32.totalorder %s23, 0
      %p159 = por %p157, %p158
      %p160 = scmp.ne.s32.totalorder %s148, %s149
      %p161 = scmp.eq.s32.totalorder %s24, 1
      %p162 = por %p160, %p161
      %p164 = scmp.ne.s32.totalorder %s149, %s163
      %p165 = scmp.eq.s32.totalorder %s24, 0
      %p166 = por %p164, %p165
      %s168 = sadd.s32 %s167, 1
      %p171 = scmp.eq.s32.totalorder %s18, 1
      %p172 = scmp.ne.s32.totalorder %s167, %s169
      %p173 = scmp.eq.s32.totalorder %s18, 0
      %p174 = por %p172, %p173
      %p175 = scmp.ne.s32.totalorder %s167, %s169
      %p176 = scmp.eq.s32.totalorder %s23, 1
      %p177 = por %p175, %p176
      %p178 = scmp.ne.s32.totalorder %s169, %s170
      %p179 = scmp.eq.s32.totalorder %s23, 0
      %p180 = por %p178, %p179
      %p181 = scmp.ne.s32.totalorder %s169, %s170
      %p182 = scmp.eq.s32.totalorder %s24, 1
      %p183 = por %p181, %p182
      %p185 = scmp.ne.s32.totalorder %s170, %s184
      %p186 = scmp.eq.s32.totalorder %s24, 0
      %p187 = por %p185, %p186
      %s189 = sadd.s32 %s188, 1
      %p192 = scmp.eq.s32.totalorder %s18, 1
      %p193 = scmp.ne.s32.totalorder %s188, %s190
      %p194 = scmp.eq.s32.totalorder %s18, 0
      %p195 = por %p193, %p194
      %p196 = scmp.ne.s32.totalorder %s188, %s190
      %p197 = scmp.eq.s32.totalorder %s23, 1
      %p198 = por %p196, %p197
      %p199 = scmp.ne.s32.totalorder %s190, %s191
      %p200 = scmp.eq.s32.totalorder %s23, 0
      %p201 = por %p199, %p200
      %p202 = scmp.ne.s32.totalorder %s190, %s191
      %p203 = scmp.eq.s32.totalorder %s24, 1
      %p204 = por %p202, %p203
      %p206 = scmp.ne.s32.totalorder %s191, %s205
      %p207 = scmp.eq.s32.totalorder %s24, 0
      %p208 = por %p206, %p207
      %p209 = scmp.le.s32.totalorder 1, %s18
      %p210 = scmp.lt.s32.totalorder %s18, 3
      %p211 = pnand %p209, %p210
      %p212 = pneg %p211
      // Predicated region
      $region9: #{stage1_forward.1} parent=5 // pred_check
        _
      $region10: #{stage1_forward.1} parent=5 // pred_check_branch
        %214 = sbr.rel (%p211) target = $region12
      $region11: #{stage1_forward.1} parent=5 // pred_region
        %s215 = ssub.s32 %s18, 1
        // Predicated region
        $region13: #{stage1_forward.1} parent=11 // pred_check
          %p216 = pneg %p39
        $region14: #{stage1_forward.1} parent=11 // pred_check_branch
          %218 = sbr.rel (%p216) target = $region16
        $region15: #{stage1_forward.1} parent=11 // pred_region
          _
        $region16: #{stage1_forward.1} parent=11 // pred_fallthru
          _
        // Predicated region
        $region17: #{stage1_forward.1} parent=11 // pred_check
          %p219 = pneg %p138
        $region18: #{stage1_forward.1} parent=11 // pred_check_branch
          %221 = sbr.rel (%p219) target = $region20
        $region19: #{stage1_forward.1} parent=11 // pred_region
          _
        $region20: #{stage1_forward.1} parent=11 // pred_fallthru
          _
        // Predicated region
        $region21: #{stage1_forward.1} parent=11 // pred_check
          %p222 = pneg %p159
        $region22: #{stage1_forward.1} parent=11 // pred_check_branch
          %224 = sbr.rel (%p222) target = $region24
        $region23: #{stage1_forward.1} parent=11 // pred_region
          _
        $region24: #{stage1_forward.1} parent=11 // pred_fallthru
          _
      $region12: #{stage1_forward.1} parent=5 // pred_fallthru
        _
      %p225 = scmp.lt.s32.totalorder %s18, 2
      // Predicated region
      $region25: #{stage1_forward.1} parent=5 // pred_check
        %p226 = pneg %p225
      $region26: #{stage1_forward.1} parent=5 // pred_check_branch
        %228 = sbr.rel (%p226) target = $region28
      $region27: #{stage1_forward.1} parent=5 // pred_region
        // Predicated region
        $region29: #{stage1_forward.1} parent=27 // pred_check
          %p229 = pneg %p59
        $region30: #{stage1_forward.1} parent=27 // pred_check_branch
          %231 = sbr.rel (%p229) target = $region32
        $region31: #{stage1_forward.1} parent=27 // pred_region
          %s232 = sand.u32 %s49, 1
          %s233 = scalar_lea.sflag [#allocation4], %s232
          %s234 = sand.u32 %s49, 1
          %s235 = smul.addr %s234, 256
          %s236 = scalar_lea.vmem [#allocation3], %s235
          %s238 = ssub.s32 4096, 4096
          %239 = vsyncadd %s233, %s238
          %s240 = smul.addr %s18, 32
          %s241 = smul.addr %s240, 128
          %s242 = scalar_lea.hbm %s1, %s241
          %s243 = sshll.u32 %s236, 4
          %s244 = int_to_ptr.vmem [resolvable:$true] %s243
          %249 = dma.hbm_to_vmem [thread:$0]  %s242, 4096, %s244, %s233, 512, 512, 32
        $region32: #{stage1_forward.1} parent=27 // pred_fallthru
          _
        // Predicated region
        $region33: #{stage1_forward.1} parent=27 // pred_check
          %p250 = pneg %p85
        $region34: #{stage1_forward.1} parent=27 // pred_check_branch
          %252 = sbr.rel (%p250) target = $region36
        $region35: #{stage1_forward.1} parent=27 // pred_region
          %p253 = scmp.lt.s32.totalorder %s18, 1
          %s254 = scalar_select %p253, %s18, 1
          %s255 = smul.addr %s254, 16
          %s256 = smul.addr %s255, 8
          %s257 = scalar_lea.vmem %s2, %s256
        $region36: #{stage1_forward.1} parent=27 // pred_fallthru
          _
        // Predicated region
        $region37: #{stage1_forward.1} parent=27 // pred_check
          %p258 = pneg %p111
        $region38: #{stage1_forward.1} parent=27 // pred_check_branch
          %260 = sbr.rel (%p258) target = $region40
        $region39: #{stage1_forward.1} parent=27 // pred_region
          %p261 = scmp.lt.s32.totalorder %s18, 1
          %s262 = scalar_select %p261, %s18, 1
          %s263 = smul.addr %s262, 2
          %s264 = smul.addr %s263, 8
          %s265 = scalar_lea.vmem %s3, %s264
        $region40: #{stage1_forward.1} parent=27 // pred_fallthru
          _
      $region28: #{stage1_forward.1} parent=5 // pred_fallthru
        _
      %p266 = scmp.le.s32.totalorder 1, %s18
      %p267 = scmp.lt.s32.totalorder %s18, 3
      %p268 = pnand %p266, %p267
      %p269 = pneg %p268
      // Predicated region
      $region41: #{stage1_forward.1} parent=5 // pred_check
        _
      $region42: #{stage1_forward.1} parent=5 // pred_check_branch
        %271 = sbr.rel (%p268) target = $region44
      $region43: #{stage1_forward.1} parent=5 // pred_region
        %s272 = ssub.s32 %s18, 1
        %s273 = sand.u32 %s52, 1
        %s274 = scalar_lea.sflag [#allocation4], %s273
        %s275 = sand.u32 %s52, 1
        %s276 = smul.addr %s275, 256
        %s277 = scalar_lea.vmem [#allocation3], %s276
        // Predicated region
        $region45: #{stage1_forward.1} parent=43 // pred_check
          %p278 = pneg %p65
        $region46: #{stage1_forward.1} parent=43 // pred_check_branch
          %280 = sbr.rel (%p278) target = $region48
        $region47: #{stage1_forward.1} parent=43 // pred_region
          %281 = dma.done %s274, 4096
        $region48: #{stage1_forward.1} parent=43 // pred_fallthru
          _
        %p282 = pneg %p39
        %p283 = pneg %p36
        %s284 = sand.u32 %s52, 1
        %s285 = scalar_lea.sflag [#allocation4], %s284
        %s286 = sand.u32 %s52, 1
        %s287 = smul.addr %s286, 256
        %s288 = scalar_lea.vmem [#allocation3], %s287
        %p289 = pneg %p65
        %p290 = pneg %p62
        %p291 = scmp.lt.s32.totalorder %s23, 1
        %s292 = scalar_select %p291, %s23, 1
        %s293 = smul.addr %s292, 16
        %s294 = smul.addr %s293, 8
        %s295 = scalar_lea.vmem %s2, %s294
        %p296 = pneg %p91
        %p297 = pneg %p88
        %p298 = scmp.lt.s32.totalorder %s23, 1
        %s299 = scalar_select %p298, %s23, 1
        %s300 = smul.addr %s299, 2
        %s301 = smul.addr %s300, 8
        %s302 = scalar_lea.vmem %s3, %s301
        %p303 = pneg %p117
        %p304 = pneg %p114
        %p305 = pneg %p138
        %p306 = pneg %p135
        %p307 = pneg %p159
        %p308 = pneg %p156
        %p309 = pneg %p180
        %p310 = pneg %p177
        %p311 = pneg %p201
        %p312 = pneg %p198
        %p313 = scmp.lt.s32.totalorder %s23, 1
        %s314 = scalar_select %p313, %s23, 1
        %s315 = smul.addr %s314, 16
        %s316 = smul.addr %s315, 8
        %s317 = scalar_lea.vmem %s2, %s316
        %p318 = scmp.lt.s32.totalorder %s23, 1
        %s319 = scalar_select %p318, %s23, 1
        %s320 = smul.addr %s319, 2
        %s321 = smul.addr %s320, 8
        %s322 = scalar_lea.vmem %s3, %s321
        %p323 = scmp.eq.s32.totalorder %s23, 0
        // Predicated region
        $region49: #{stage1_forward.1} parent=43 // pred_check
          %p324 = pneg %p323
        $region50: #{stage1_forward.1} parent=43 // pred_check_branch
          %326 = sbr.rel (%p324) target = $region52
        $region51: #{stage1_forward.1} parent=43 // pred_region
          %v327 = vld [vmem:[%s0] sm:$0xff]
          %v328 = vld [vmem:[%s0 + $0x8] sm:$0xff]
          %vm329 = vcmask 523264
          %330 = vst.msk [vmem:[#allocation2] sm:$0xff] %vm329, %v327
          %331 = vst.msk [vmem:[#allocation2 + $0x8] sm:$0xff] %vm329, %v328
        $region52: #{stage1_forward.1} parent=43 // pred_fallthru
          _
        %v332 = vld [vmem:[#allocation2] sm:$0xff]
        %v333 = vld [vmem:[#allocation2 + $0x8] sm:$0xff]
        %v334 = vld [vmem:[%s277] sm:$0xff]
        %v335 = vld [vmem:[%s277 + $0x8] sm:$0xff]
        %v336 = vld [vmem:[%s277 + $0x10] sm:$0xff]
        %v337 = vld [vmem:[%s277 + $0x18] sm:$0xff]
        %v338 = vld [vmem:[%s277 + $0x20] sm:$0xff]
        %v339 = vld [vmem:[%s277 + $0x28] sm:$0xff]
        %v340 = vld [vmem:[%s277 + $0x30] sm:$0xff]
        %v341 = vld [vmem:[%s277 + $0x38] sm:$0xff]
        %v342 = vld [vmem:[%s277 + $0x40] sm:$0xff]
        %v343 = vld [vmem:[%s277 + $0x48] sm:$0xff]
        %v344 = vld [vmem:[%s277 + $0x50] sm:$0xff]
        %v345 = vld [vmem:[%s277 + $0x58] sm:$0xff]
        %v346 = vld [vmem:[%s277 + $0x60] sm:$0xff]
        %v347 = vld [vmem:[%s277 + $0x68] sm:$0xff]
        %v348 = vld [vmem:[%s277 + $0x70] sm:$0xff]
        %v349 = vld [vmem:[%s277 + $0x78] sm:$0xff]
        %v350 = vld [vmem:[%s277 + $0x80] sm:$0xff]
        %v351 = vld [vmem:[%s277 + $0x88] sm:$0xff]
        %v352 = vld [vmem:[%s277 + $0x90] sm:$0xff]
        %v353 = vld [vmem:[%s277 + $0x98] sm:$0xff]
        %v354 = vld [vmem:[%s277 + $0xa0] sm:$0xff]
        %v355 = vld [vmem:[%s277 + $0xa8] sm:$0xff]
        %v356 = vld [vmem:[%s277 + $0xb0] sm:$0xff]
        %v357 = vld [vmem:[%s277 + $0xb8] sm:$0xff]
        %v358 = vld [vmem:[%s277 + $0xc0] sm:$0xff]
        %v359 = vld [vmem:[%s277 + $0xc8] sm:$0xff]
        %v360 = vld [vmem:[%s277 + $0xd0] sm:$0xff]
        %v361 = vld [vmem:[%s277 + $0xd8] sm:$0xff]
        %v362 = vld [vmem:[%s277 + $0xe0] sm:$0xff]
        %v363 = vld [vmem:[%s277 + $0xe8] sm:$0xff]
        %v364 = vld [vmem:[%s277 + $0xf0] sm:$0xff]
        %v365 = vld [vmem:[%s277 + $0xf8] sm:$0xff]
        %v366 = vld [vmem:[%s322] sm:$0xff]
        %v367 = vld [vmem:[%s322 + $0x8] sm:$0xff]
        %v368 = vlaneseq
        %v369 = vshrl.u32 %v368, 7
        %v370 = vsub.s32 0, %v369
        %v371 = vrot.slane %v366, %v370
        %v372 = vlaneseq
        %v373 = vshrl.u32 %v372, 7
        %v374 = vsub.s32 0, %v373
        %v375 = vrot.slane %v367, %v374
        %vm376 = vcmask 523264
        %v378 = vsel %vm376, %v332, 0
        %v381 = vsel %vm376, %v333, 0
        %383 = vmatprep.subr.mxu0 0.0
        %384 = vmatpush1.msra.mxu0 0.0
        %385 = vmatprep.subr.mxu0 0.0
        %386 = vmatpush1.msra.mxu0 0.0
        %387 = vmatprep.subr.mxu0 0.0
        %388 = vmatpush1.msra.mxu0 0.0
        %389 = vmatprep.subr.mxu0 0.0
        %390 = vmatpush1.msra.mxu0 0.0
        %391 = vmatprep.subr.mxu0 0.0
        %392 = vmatpush1.msra.mxu0 0.0
        %393 = vmatprep.subr.mxu0 0.0
        %394 = vmatpush1.msra.mxu0 0.0
        %395 = vmatprep.subr.mxu0 0.0
        %396 = vmatpush1.msra.mxu0 0.0
        %397 = vmatprep.subr.mxu0 0.0
        %398 = vmatpush1.msra.mxu0 0.0
        %399 = vmatprep.subr.mxu0 %v363
        %400 = vmatpush1.msra.mxu0 %v362
        %401 = vmatprep.subr.mxu0 %v359
        %402 = vmatpush1.msra.mxu0 %v358
        %403 = vmatprep.subr.mxu0 %v355
        %404 = vmatpush1.msra.mxu0 %v354
        %405 = vmatprep.subr.mxu0 %v351
        %406 = vmatpush1.msra.mxu0 %v350
        %407 = vmatprep.subr.mxu0 %v347
        %408 = vmatpush1.msra.mxu0 %v346
        %409 = vmatprep.subr.mxu0 %v343
        %410 = vmatpush1.msra.mxu0 %v342
        %411 = vmatprep.subr.mxu0 %v339
        %412 = vmatpush1.msra.mxu0 %v338
        %413 = vmatprep.subr.mxu0 %v335
        %414 = vmatpush1.msra.mxu0 %v334
        %415 = vmatprep.subr.mxu0 0.0
        %416 = vmatpush2.msra.mxu0 0.0
        %417 = vmatprep.subr.mxu0 0.0
        %418 = vmatpush2.msra.mxu0 0.0
        %419 = vmatprep.subr.mxu0 0.0
        %420 = vmatpush2.msra.mxu0 0.0
        %421 = vmatprep.subr.mxu0 0.0
        %422 = vmatpush2.msra.mxu0 0.0
        %423 = vmatprep.subr.mxu0 0.0
        %424 = vmatpush2.msra.mxu0 0.0
        %425 = vmatprep.subr.mxu0 0.0
        %426 = vmatpush2.msra.mxu0 0.0
        %427 = vmatprep.subr.mxu0 0.0
        %428 = vmatpush2.msra.mxu0 0.0
        %429 = vmatprep.subr.mxu0 0.0
        %430 = vmatpush2.msra.mxu0 0.0
        %431 = vmatprep.subr.mxu0 0.0
        %432 = vmatpush2.msra.mxu0 0.0
        %433 = vmatprep.subr.mxu0 0.0
        %434 = vmatpush2.msra.mxu0 0.0
        %435 = vmatprep.subr.mxu0 0.0
        %436 = vmatpush2.msra.mxu0 0.0
        %437 = vmatprep.subr.mxu0 0.0
        %438 = vmatpush2.msra.mxu0 0.0
        %439 = vmatprep.subr.mxu0 0.0
        %440 = vmatpush2.msra.mxu0 0.0
        %441 = vmatprep.subr.mxu0 0.0
        %442 = vmatpush2.msra.mxu0 0.0
        %443 = vmatprep.subr.mxu0 0.0
        %444 = vmatpush2.msra.mxu0 0.0
        %445 = vmatprep.subr.mxu0 0.0
        %446 = vmatpush2.msra.mxu0 0.0
        %447 = vmatprep.mubr.f32.mxu0 0.0
        %448 = vmatmul.mubr.f32.gmra.mxu0 %v378
        %v449 = vpop.f32.mrf.mxu0
        %v450 = vadd.f32 %v371, %v449
        %v451 = vpop.f32.mrf.mxu0
        %v452 = vadd.f32 %v375, %v451
        %453 = vmatprep.mubr.f32.mxu0 0.0
        %454 = vmatmul.mubr.f32.gmra.mxu0 %v381
        %v455 = vpop.f32.mrf.mxu0
        %v456 = vadd.f32 %v371, %v455
        %v457 = vpop.f32.mrf.mxu0
        %v458 = vadd.f32 %v375, %v457
        %459 = vdwg.mxu0
        %462 = vrot.lane.b32.xlu0 %v450, 112
        %v463 = vpop.permute.xlu0 %462
        %464 = vrot.lane.b32.xlu0 %v456, 112
        %v465 = vpop.permute.xlu0 %464
        %466 = vrot.lane.b32.xlu0 %v450, 96
        %v467 = vpop.permute.xlu0 %466
        %468 = vrot.lane.b32.xlu0 %v456, 96
        %v469 = vpop.permute.xlu0 %468
        %470 = vrot.lane.b32.xlu0 %v450, 80
        %v471 = vpop.permute.xlu0 %470
        %472 = vrot.lane.b32.xlu0 %v456, 80
        %v473 = vpop.permute.xlu0 %472
        %476 = vrot.lane.b32.xlu0 %v452, 112
        %v477 = vpop.permute.xlu0 %476
        %478 = vrot.lane.b32.xlu0 %v458, 112
        %v479 = vpop.permute.xlu0 %478
        %482 = vrot.lane.b32.xlu0 %v452, 96
        %v483 = vpop.permute.xlu0 %482
        %484 = vrot.lane.b32.xlu0 %v458, 96
        %v485 = vpop.permute.xlu0 %484
        %488 = vrot.lane.b32.xlu0 %v452, 80
        %v489 = vpop.permute.xlu0 %488
        %490 = vrot.lane.b32.xlu0 %v458, 80
        %v491 = vpop.permute.xlu0 %490
        %494 = vrot.lane.b32.xlu0 %v450, 64
        %v495 = vpop.permute.xlu0 %494
        %vm496 = vcmask 130048
        %v497 = vsel %vm496, %v450, 0
        %v499 = vsel %vm496, %v495, 0
        %501 = vmatprep.subr.mxu0 0.0
        %502 = vmatpush1.xpose.msra.mxu0 0.0
        %503 = vmatprep.subr.mxu0 0.0
        %504 = vmatpush1.xpose.msra.mxu0 0.0
        %505 = vmatprep.subr.mxu0 0.0
        %506 = vmatpush1.xpose.msra.mxu0 0.0
        %507 = vmatprep.subr.mxu0 0.0
        %508 = vmatpush1.xpose.msra.mxu0 0.0
        %509 = vmatprep.subr.mxu0 0.0
        %510 = vmatpush1.xpose.msra.mxu0 0.0
        %511 = vmatprep.subr.mxu0 0.0
        %512 = vmatpush1.xpose.msra.mxu0 0.0
        %513 = vmatprep.subr.mxu0 0.0
        %514 = vmatpush1.xpose.msra.mxu0 0.0
        %515 = vmatprep.subr.mxu0 0.0
        %516 = vmatpush1.xpose.msra.mxu0 0.0
        %517 = vmatprep.subr.mxu0 0.0
        %518 = vmatpush1.xpose.msra.mxu0 0.0
        %519 = vmatprep.subr.mxu0 0.0
        %520 = vmatpush1.xpose.msra.mxu0 0.0
        %521 = vmatprep.subr.mxu0 0.0
        %522 = vmatpush1.xpose.msra.mxu0 0.0
        %523 = vmatprep.subr.mxu0 0.0
        %524 = vmatpush1.xpose.msra.mxu0 0.0
        %525 = vmatprep.subr.mxu0 0.0
        %526 = vmatpush1.xpose.msra.mxu0 0.0
        %527 = vmatprep.subr.mxu0 0.0
        %528 = vmatpush1.xpose.msra.mxu0 0.0
        %529 = vmatprep.subr.mxu0 0.0
        %530 = vmatpush1.xpose.msra.mxu0 0.0
        %531 = vmatprep.subr.mxu0 0.0
        %532 = vmatpush1.xpose.msra.mxu0 %v499
        %533 = vmatprep.subr.mxu0 0.0
        %534 = vmatpush2.xpose.msra.mxu0 0.0
        %535 = vmatprep.subr.mxu0 0.0
        %536 = vmatpush2.xpose.msra.mxu0 0.0
        %537 = vmatprep.subr.mxu0 0.0
        %538 = vmatpush2.xpose.msra.mxu0 0.0
        %539 = vmatprep.subr.mxu0 0.0
        %540 = vmatpush2.xpose.msra.mxu0 0.0
        %541 = vmatprep.subr.mxu0 0.0
        %542 = vmatpush2.xpose.msra.mxu0 0.0
        %543 = vmatprep.subr.mxu0 0.0
        %544 = vmatpush2.xpose.msra.mxu0 0.0
        %545 = vmatprep.subr.mxu0 0.0
        %546 = vmatpush2.xpose.msra.mxu0 0.0
        %547 = vmatprep.subr.mxu0 0.0
        %548 = vmatpush2.xpose.msra.mxu0 0.0
        %549 = vmatprep.subr.mxu0 0.0
        %550 = vmatpush2.xpose.msra.mxu0 0.0
        %551 = vmatprep.subr.mxu0 0.0
        %552 = vmatpush2.xpose.msra.mxu0 0.0
        %553 = vmatprep.subr.mxu0 0.0
        %554 = vmatpush2.xpose.msra.mxu0 0.0
        %555 = vmatprep.subr.mxu0 0.0
        %556 = vmatpush2.xpose.msra.mxu0 0.0
        %557 = vmatprep.subr.mxu0 0.0
        %558 = vmatpush2.xpose.msra.mxu0 0.0
        %559 = vmatprep.subr.mxu0 0.0
        %560 = vmatpush2.xpose.msra.mxu0 0.0
        %561 = vmatprep.subr.mxu0 0.0
        %562 = vmatpush2.xpose.msra.mxu0 0.0
        %563 = vmatprep.subr.mxu0 0.0
        %564 = vmatpush2.xpose.msra.mxu0 0.0
        %565 = vmatprep.mubr.f32.mxu0 0.0
        %566 = vmatmul.mubr.f32.gmra.mxu0 %v497
        %v567 = vpop.f32.mrf.mxu0
        %v568 = vadd.f32 0.0, %v567
        %v569 = vpop.f32.mrf.mxu0
        %570 = vdwg.mxu0
        %571 = vrot.lane.b32.xlu0 %v456, 64
        %v572 = vpop.permute.xlu0 %571
        %v573 = vsel %vm496, %v456, 0
        %v575 = vsel %vm496, %v572, 0
        %577 = vmatprep.subr.mxu0 0.0
        %578 = vmatpush1.xpose.msra.mxu0 0.0
        %579 = vmatprep.subr.mxu0 0.0
        %580 = vmatpush1.xpose.msra.mxu0 0.0
        %581 = vmatprep.subr.mxu0 0.0
        %582 = vmatpush1.xpose.msra.mxu0 0.0
        %583 = vmatprep.subr.mxu0 0.0
        %584 = vmatpush1.xpose.msra.mxu0 0.0
        %585 = vmatprep.subr.mxu0 0.0
        %586 = vmatpush1.xpose.msra.mxu0 0.0
        %587 = vmatprep.subr.mxu0 0.0
        %588 = vmatpush1.xpose.msra.mxu0 0.0
        %589 = vmatprep.subr.mxu0 0.0
        %590 = vmatpush1.xpose.msra.mxu0 0.0
        %591 = vmatprep.subr.mxu0 0.0
        %592 = vmatpush1.xpose.msra.mxu0 0.0
        %593 = vmatprep.subr.mxu0 0.0
        %594 = vmatpush1.xpose.msra.mxu0 0.0
        %595 = vmatprep.subr.mxu0 0.0
        %596 = vmatpush1.xpose.msra.mxu0 0.0
        %597 = vmatprep.subr.mxu0 0.0
        %598 = vmatpush1.xpose.msra.mxu0 0.0
        %599 = vmatprep.subr.mxu0 0.0
        %600 = vmatpush1.xpose.msra.mxu0 0.0
        %601 = vmatprep.subr.mxu0 0.0
        %602 = vmatpush1.xpose.msra.mxu0 0.0
        %603 = vmatprep.subr.mxu0 0.0
        %604 = vmatpush1.xpose.msra.mxu0 0.0
        %605 = vmatprep.subr.mxu0 0.0
        %606 = vmatpush1.xpose.msra.mxu0 0.0
        %607 = vmatprep.subr.mxu0 0.0
        %608 = vmatpush1.xpose.msra.mxu0 %v575
        %609 = vmatprep.subr.mxu0 0.0
        %610 = vmatpush2.xpose.msra.mxu0 0.0
        %611 = vmatprep.subr.mxu0 0.0
        %612 = vmatpush2.xpose.msra.mxu0 0.0
        %613 = vmatprep.subr.mxu0 0.0
        %614 = vmatpush2.xpose.msra.mxu0 0.0
        %615 = vmatprep.subr.mxu0 0.0
        %616 = vmatpush2.xpose.msra.mxu0 0.0
        %617 = vmatprep.subr.mxu0 0.0
        %618 = vmatpush2.xpose.msra.mxu0 0.0
        %619 = vmatprep.subr.mxu0 0.0
        %620 = vmatpush2.xpose.msra.mxu0 0.0
        %621 = vmatprep.subr.mxu0 0.0
        %622 = vmatpush2.xpose.msra.mxu0 0.0
        %623 = vmatprep.subr.mxu0 0.0
        %624 = vmatpush2.xpose.msra.mxu0 0.0
        %625 = vmatprep.subr.mxu0 0.0
        %626 = vmatpush2.xpose.msra.mxu0 0.0
        %627 = vmatprep.subr.mxu0 0.0
        %628 = vmatpush2.xpose.msra.mxu0 0.0
        %629 = vmatprep.subr.mxu0 0.0
        %630 = vmatpush2.xpose.msra.mxu0 0.0
        %631 = vmatprep.subr.mxu0 0.0
        %632 = vmatpush2.xpose.msra.mxu0 0.0
        %633 = vmatprep.subr.mxu0 0.0
        %634 = vmatpush2.xpose.msra.mxu0 0.0
        %635 = vmatprep.subr.mxu0 0.0
        %636 = vmatpush2.xpose.msra.mxu0 0.0
        %637 = vmatprep.subr.mxu0 0.0
        %638 = vmatpush2.xpose.msra.mxu0 0.0
        %639 = vmatprep.subr.mxu0 0.0
        %640 = vmatpush2.xpose.msra.mxu0 0.0
        %641 = vmatprep.mubr.f32.mxu0 0.0
        %642 = vmatmul.mubr.f32.gmra.mxu0 %v573
        %v643 = vpop.f32.mrf.mxu0
        %v644 = vadd.f32 0.0, %v643
        %v645 = vpop.f32.mrf.mxu0
        %646 = vdwg.mxu0
        %647 = vrot.lane.b32.xlu0 %v463, 64
        %v648 = vpop.permute.xlu0 %647
        %v649 = vsel %vm496, %v463, 0
        %v651 = vsel %vm496, %v648, 0
        %653 = vmatprep.subr.mxu0 0.0
        %654 = vmatpush1.xpose.msra.mxu0 0.0
        %655 = vmatprep.subr.mxu0 0.0
        %656 = vmatpush1.xpose.msra.mxu0 0.0
        %657 = vmatprep.subr.mxu0 0.0
        %658 = vmatpush1.xpose.msra.mxu0 0.0
        %659 = vmatprep.subr.mxu0 0.0
        %660 = vmatpush1.xpose.msra.mxu0 0.0
        %661 = vmatprep.subr.mxu0 0.0
        %662 = vmatpush1.xpose.msra.mxu0 0.0
        %663 = vmatprep.subr.mxu0 0.0
        %664 = vmatpush1.xpose.msra.mxu0 0.0
        %665 = vmatprep.subr.mxu0 0.0
        %666 = vmatpush1.xpose.msra.mxu0 0.0
        %667 = vmatprep.subr.mxu0 0.0
        %668 = vmatpush1.xpose.msra.mxu0 0.0
        %669 = vmatprep.subr.mxu0 0.0
        %670 = vmatpush1.xpose.msra.mxu0 0.0
        %671 = vmatprep.subr.mxu0 0.0
        %672 = vmatpush1.xpose.msra.mxu0 0.0
        %673 = vmatprep.subr.mxu0 0.0
        %674 = vmatpush1.xpose.msra.mxu0 0.0
        %675 = vmatprep.subr.mxu0 0.0
        %676 = vmatpush1.xpose.msra.mxu0 0.0
        %677 = vmatprep.subr.mxu0 0.0
        %678 = vmatpush1.xpose.msra.mxu0 0.0
        %679 = vmatprep.subr.mxu0 0.0
        %680 = vmatpush1.xpose.msra.mxu0 0.0
        %681 = vmatprep.subr.mxu0 0.0
        %682 = vmatpush1.xpose.msra.mxu0 0.0
        %683 = vmatprep.subr.mxu0 0.0
        %684 = vmatpush1.xpose.msra.mxu0 %v651
        %685 = vmatprep.subr.mxu0 0.0
        %686 = vmatpush2.xpose.msra.mxu0 0.0
        %687 = vmatprep.subr.mxu0 0.0
        %688 = vmatpush2.xpose.msra.mxu0 0.0
        %689 = vmatprep.subr.mxu0 0.0
        %690 = vmatpush2.xpose.msra.mxu0 0.0
        %691 = vmatprep.subr.mxu0 0.0
        %692 = vmatpush2.xpose.msra.mxu0 0.0
        %693 = vmatprep.subr.mxu0 0.0
        %694 = vmatpush2.xpose.msra.mxu0 0.0
        %695 = vmatprep.subr.mxu0 0.0
        %696 = vmatpush2.xpose.msra.mxu0 0.0
        %697 = vmatprep.subr.mxu0 0.0
        %698 = vmatpush2.xpose.msra.mxu0 0.0
        %699 = vmatprep.subr.mxu0 0.0
        %700 = vmatpush2.xpose.msra.mxu0 0.0
        %701 = vmatprep.subr.mxu0 0.0
        %702 = vmatpush2.xpose.msra.mxu0 0.0
        %703 = vmatprep.subr.mxu0 0.0
        %704 = vmatpush2.xpose.msra.mxu0 0.0
        %705 = vmatprep.subr.mxu0 0.0
        %706 = vmatpush2.xpose.msra.mxu0 0.0
        %707 = vmatprep.subr.mxu0 0.0
        %708 = vmatpush2.xpose.msra.mxu0 0.0
        %709 = vmatprep.subr.mxu0 0.0
        %710 = vmatpush2.xpose.msra.mxu0 0.0
        %711 = vmatprep.subr.mxu0 0.0
        %712 = vmatpush2.xpose.msra.mxu0 0.0
        %713 = vmatprep.subr.mxu0 0.0
        %714 = vmatpush2.xpose.msra.mxu0 0.0
        %715 = vmatprep.subr.mxu0 0.0
        %716 = vmatpush2.xpose.msra.mxu0 0.0
        %717 = vmatprep.mubr.f32.mxu0 0.0
        %718 = vmatmul.mubr.f32.gmra.mxu0 %v649
        %v719 = vpop.f32.mrf.mxu0
        %v720 = vadd.f32 0.0, %v719
        %v721 = vpop.f32.mrf.mxu0
        %722 = vdwg.mxu0
        %723 = vrot.lane.b32.xlu0 %v465, 64
        %v724 = vpop.permute.xlu0 %723
        %v725 = vsel %vm496, %v465, 0
        %v727 = vsel %vm496, %v724, 0
        %729 = vmatprep.subr.mxu0 0.0
        %730 = vmatpush1.xpose.msra.mxu0 0.0
        %731 = vmatprep.subr.mxu0 0.0
        %732 = vmatpush1.xpose.msra.mxu0 0.0
        %733 = vmatprep.subr.mxu0 0.0
        %734 = vmatpush1.xpose.msra.mxu0 0.0
        %735 = vmatprep.subr.mxu0 0.0
        %736 = vmatpush1.xpose.msra.mxu0 0.0
        %737 = vmatprep.subr.mxu0 0.0
        %738 = vmatpush1.xpose.msra.mxu0 0.0
        %739 = vmatprep.subr.mxu0 0.0
        %740 = vmatpush1.xpose.msra.mxu0 0.0
        %741 = vmatprep.subr.mxu0 0.0
        %742 = vmatpush1.xpose.msra.mxu0 0.0
        %743 = vmatprep.subr.mxu0 0.0
        %744 = vmatpush1.xpose.msra.mxu0 0.0
        %745 = vmatprep.subr.mxu0 0.0
        %746 = vmatpush1.xpose.msra.mxu0 0.0
        %747 = vmatprep.subr.mxu0 0.0
        %748 = vmatpush1.xpose.msra.mxu0 0.0
        %749 = vmatprep.subr.mxu0 0.0
        %750 = vmatpush1.xpose.msra.mxu0 0.0
        %751 = vmatprep.subr.mxu0 0.0
        %752 = vmatpush1.xpose.msra.mxu0 0.0
        %753 = vmatprep.subr.mxu0 0.0
        %754 = vmatpush1.xpose.msra.mxu0 0.0
        %755 = vmatprep.subr.mxu0 0.0
        %756 = vmatpush1.xpose.msra.mxu0 0.0
        %757 = vmatprep.subr.mxu0 0.0
        %758 = vmatpush1.xpose.msra.mxu0 0.0
        %759 = vmatprep.subr.mxu0 0.0
        %760 = vmatpush1.xpose.msra.mxu0 %v727
        %761 = vmatprep.subr.mxu0 0.0
        %762 = vmatpush2.xpose.msra.mxu0 0.0
        %763 = vmatprep.subr.mxu0 0.0
        %764 = vmatpush2.xpose.msra.mxu0 0.0
        %765 = vmatprep.subr.mxu0 0.0
        %766 = vmatpush2.xpose.msra.mxu0 0.0
        %767 = vmatprep.subr.mxu0 0.0
        %768 = vmatpush2.xpose.msra.mxu0 0.0
        %769 = vmatprep.subr.mxu0 0.0
        %770 = vmatpush2.xpose.msra.mxu0 0.0
        %771 = vmatprep.subr.mxu0 0.0
        %772 = vmatpush2.xpose.msra.mxu0 0.0
        %773 = vmatprep.subr.mxu0 0.0
        %774 = vmatpush2.xpose.msra.mxu0 0.0
        %775 = vmatprep.subr.mxu0 0.0
        %776 = vmatpush2.xpose.msra.mxu0 0.0
        %777 = vmatprep.subr.mxu0 0.0
        %778 = vmatpush2.xpose.msra.mxu0 0.0
        %779 = vmatprep.subr.mxu0 0.0
        %780 = vmatpush2.xpose.msra.mxu0 0.0
        %781 = vmatprep.subr.mxu0 0.0
        %782 = vmatpush2.xpose.msra.mxu0 0.0
        %783 = vmatprep.subr.mxu0 0.0
        %784 = vmatpush2.xpose.msra.mxu0 0.0
        %785 = vmatprep.subr.mxu0 0.0
        %786 = vmatpush2.xpose.msra.mxu0 0.0
        %787 = vmatprep.subr.mxu0 0.0
        %788 = vmatpush2.xpose.msra.mxu0 0.0
        %789 = vmatprep.subr.mxu0 0.0
        %790 = vmatpush2.xpose.msra.mxu0 0.0
        %791 = vmatprep.subr.mxu0 0.0
        %792 = vmatpush2.xpose.msra.mxu0 0.0
        %793 = vmatprep.mubr.f32.mxu0 0.0
        %794 = vmatmul.mubr.f32.gmra.mxu0 %v725
        %v795 = vpop.f32.mrf.mxu0
        %v796 = vadd.f32 0.0, %v795
        %v797 = vpop.f32.mrf.mxu0
        %798 = vdwg.mxu0
        %799 = vrot.lane.b32.xlu0 %v467, 64
        %v800 = vpop.permute.xlu0 %799
        %v801 = vsel %vm496, %v467, 0
        %v803 = vsel %vm496, %v800, 0
        %805 = vmatprep.subr.mxu0 0.0
        %806 = vmatpush1.xpose.msra.mxu0 0.0
        %807 = vmatprep.subr.mxu0 0.0
        %808 = vmatpush1.xpose.msra.mxu0 0.0
        %809 = vmatprep.subr.mxu0 0.0
        %810 = vmatpush1.xpose.msra.mxu0 0.0
        %811 = vmatprep.subr.mxu0 0.0
        %812 = vmatpush1.xpose.msra.mxu0 0.0
        %813 = vmatprep.subr.mxu0 0.0
        %814 = vmatpush1.xpose.msra.mxu0 0.0
        %815 = vmatprep.subr.mxu0 0.0
        %816 = vmatpush1.xpose.msra.mxu0 0.0
        %817 = vmatprep.subr.mxu0 0.0
        %818 = vmatpush1.xpose.msra.mxu0 0.0
        %819 = vmatprep.subr.mxu0 0.0
        %820 = vmatpush1.xpose.msra.mxu0 0.0
        %821 = vmatprep.subr.mxu0 0.0
        %822 = vmatpush1.xpose.msra.mxu0 0.0
        %823 = vmatprep.subr.mxu0 0.0
        %824 = vmatpush1.xpose.msra.mxu0 0.0
        %825 = vmatprep.subr.mxu0 0.0
        %826 = vmatpush1.xpose.msra.mxu0 0.0
        %827 = vmatprep.subr.mxu0 0.0
        %828 = vmatpush1.xpose.msra.mxu0 0.0
        %829 = vmatprep.subr.mxu0 0.0
        %830 = vmatpush1.xpose.msra.mxu0 0.0
        %831 = vmatprep.subr.mxu0 0.0
        %832 = vmatpush1.xpose.msra.mxu0 0.0
        %833 = vmatprep.subr.mxu0 0.0
        %834 = vmatpush1.xpose.msra.mxu0 0.0
        %835 = vmatprep.subr.mxu0 0.0
        %836 = vmatpush1.xpose.msra.mxu0 %v803
        %837 = vmatprep.subr.mxu0 0.0
        %838 = vmatpush2.xpose.msra.mxu0 0.0
        %839 = vmatprep.subr.mxu0 0.0
        %840 = vmatpush2.xpose.msra.mxu0 0.0
        %841 = vmatprep.subr.mxu0 0.0
        %842 = vmatpush2.xpose.msra.mxu0 0.0
        %843 = vmatprep.subr.mxu0 0.0
        %844 = vmatpush2.xpose.msra.mxu0 0.0
        %845 = vmatprep.subr.mxu0 0.0
        %846 = vmatpush2.xpose.msra.mxu0 0.0
        %847 = vmatprep.subr.mxu0 0.0
        %848 = vmatpush2.xpose.msra.mxu0 0.0
        %849 = vmatprep.subr.mxu0 0.0
        %850 = vmatpush2.xpose.msra.mxu0 0.0
        %851 = vmatprep.subr.mxu0 0.0
        %852 = vmatpush2.xpose.msra.mxu0 0.0
        %853 = vmatprep.subr.mxu0 0.0
        %854 = vmatpush2.xpose.msra.mxu0 0.0
        %855 = vmatprep.subr.mxu0 0.0
        %856 = vmatpush2.xpose.msra.mxu0 0.0
        %857 = vmatprep.subr.mxu0 0.0
        %858 = vmatpush2.xpose.msra.mxu0 0.0
        %859 = vmatprep.subr.mxu0 0.0
        %860 = vmatpush2.xpose.msra.mxu0 0.0
        %861 = vmatprep.subr.mxu0 0.0
        %862 = vmatpush2.xpose.msra.mxu0 0.0
        %863 = vmatprep.subr.mxu0 0.0
        %864 = vmatpush2.xpose.msra.mxu0 0.0
        %865 = vmatprep.subr.mxu0 0.0
        %866 = vmatpush2.xpose.msra.mxu0 0.0
        %867 = vmatprep.subr.mxu0 0.0
        %868 = vmatpush2.xpose.msra.mxu0 0.0
        %869 = vmatprep.mubr.f32.mxu0 0.0
        %870 = vmatmul.mubr.f32.gmra.mxu0 %v801
        %v871 = vpop.f32.mrf.mxu0
        %v872 = vadd.f32 0.0, %v871
        %v873 = vpop.f32.mrf.mxu0
        %874 = vdwg.mxu0
        %875 = vrot.lane.b32.xlu0 %v469, 64
        %v876 = vpop.permute.xlu0 %875
        %v877 = vsel %vm496, %v469, 0
        %v879 = vsel %vm496, %v876, 0
        %881 = vmatprep.subr.mxu0 0.0
        %882 = vmatpush1.xpose.msra.mxu0 0.0
        %883 = vmatprep.subr.mxu0 0.0
        %884 = vmatpush1.xpose.msra.mxu0 0.0
        %885 = vmatprep.subr.mxu0 0.0
        %886 = vmatpush1.xpose.msra.mxu0 0.0
        %887 = vmatprep.subr.mxu0 0.0
        %888 = vmatpush1.xpose.msra.mxu0 0.0
        %889 = vmatprep.subr.mxu0 0.0
        %890 = vmatpush1.xpose.msra.mxu0 0.0
        %891 = vmatprep.subr.mxu0 0.0
        %892 = vmatpush1.xpose.msra.mxu0 0.0
        %893 = vmatprep.subr.mxu0 0.0
        %894 = vmatpush1.xpose.msra.mxu0 0.0
        %895 = vmatprep.subr.mxu0 0.0
        %896 = vmatpush1.xpose.msra.mxu0 0.0
        %897 = vmatprep.subr.mxu0 0.0
        %898 = vmatpush1.xpose.msra.mxu0 0.0
        %899 = vmatprep.subr.mxu0 0.0
        %900 = vmatpush1.xpose.msra.mxu0 0.0
        %901 = vmatprep.subr.mxu0 0.0
        %902 = vmatpush1.xpose.msra.mxu0 0.0
        %903 = vmatprep.subr.mxu0 0.0
        %904 = vmatpush1.xpose.msra.mxu0 0.0
        %905 = vmatprep.subr.mxu0 0.0
        %906 = vmatpush1.xpose.msra.mxu0 0.0
        %907 = vmatprep.subr.mxu0 0.0
        %908 = vmatpush1.xpose.msra.mxu0 0.0
        %909 = vmatprep.subr.mxu0 0.0
        %910 = vmatpush1.xpose.msra.mxu0 0.0
        %911 = vmatprep.subr.mxu0 0.0
        %912 = vmatpush1.xpose.msra.mxu0 %v879
        %913 = vmatprep.subr.mxu0 0.0
        %914 = vmatpush2.xpose.msra.mxu0 0.0
        %915 = vmatprep.subr.mxu0 0.0
        %916 = vmatpush2.xpose.msra.mxu0 0.0
        %917 = vmatprep.subr.mxu0 0.0
        %918 = vmatpush2.xpose.msra.mxu0 0.0
        %919 = vmatprep.subr.mxu0 0.0
        %920 = vmatpush2.xpose.msra.mxu0 0.0
        %921 = vmatprep.subr.mxu0 0.0
        %922 = vmatpush2.xpose.msra.mxu0 0.0
        %923 = vmatprep.subr.mxu0 0.0
        %924 = vmatpush2.xpose.msra.mxu0 0.0
        %925 = vmatprep.subr.mxu0 0.0
        %926 = vmatpush2.xpose.msra.mxu0 0.0
        %927 = vmatprep.subr.mxu0 0.0
        %928 = vmatpush2.xpose.msra.mxu0 0.0
        %929 = vmatprep.subr.mxu0 0.0
        %930 = vmatpush2.xpose.msra.mxu0 0.0
        %931 = vmatprep.subr.mxu0 0.0
        %932 = vmatpush2.xpose.msra.mxu0 0.0
        %933 = vmatprep.subr.mxu0 0.0
        %934 = vmatpush2.xpose.msra.mxu0 0.0
        %935 = vmatprep.subr.mxu0 0.0
        %936 = vmatpush2.xpose.msra.mxu0 0.0
        %937 = vmatprep.subr.mxu0 0.0
        %938 = vmatpush2.xpose.msra.mxu0 0.0
        %939 = vmatprep.subr.mxu0 0.0
        %940 = vmatpush2.xpose.msra.mxu0 0.0
        %941 = vmatprep.subr.mxu0 0.0
        %942 = vmatpush2.xpose.msra.mxu0 0.0
        %943 = vmatprep.subr.mxu0 0.0
        %944 = vmatpush2.xpose.msra.mxu0 0.0
        %945 = vmatprep.mubr.f32.mxu0 0.0
        %946 = vmatmul.mubr.f32.gmra.mxu0 %v877
        %v947 = vpop.f32.mrf.mxu0
        %v948 = vadd.f32 0.0, %v947
        %v949 = vpop.f32.mrf.mxu0
        %950 = vdwg.mxu0
        %951 = vrot.lane.b32.xlu0 %v471, 64
        %v952 = vpop.permute.xlu0 %951
        %v953 = vsel %vm496, %v471, 0
        %v955 = vsel %vm496, %v952, 0
        %957 = vmatprep.subr.mxu0 0.0
        %958 = vmatpush1.xpose.msra.mxu0 0.0
        %959 = vmatprep.subr.mxu0 0.0
        %960 = vmatpush1.xpose.msra.mxu0 0.0
        %961 = vmatprep.subr.mxu0 0.0
        %962 = vmatpush1.xpose.msra.mxu0 0.0
        %963 = vmatprep.subr.mxu0 0.0
        %964 = vmatpush1.xpose.msra.mxu0 0.0
        %965 = vmatprep.subr.mxu0 0.0
        %966 = vmatpush1.xpose.msra.mxu0 0.0
        %967 = vmatprep.subr.mxu0 0.0
        %968 = vmatpush1.xpose.msra.mxu0 0.0
        %969 = vmatprep.subr.mxu0 0.0
        %970 = vmatpush1.xpose.msra.mxu0 0.0
        %971 = vmatprep.subr.mxu0 0.0
        %972 = vmatpush1.xpose.msra.mxu0 0.0
        %973 = vmatprep.subr.mxu0 0.0
        %974 = vmatpush1.xpose.msra.mxu0 0.0
        %975 = vmatprep.subr.mxu0 0.0
        %976 = vmatpush1.xpose.msra.mxu0 0.0
        %977 = vmatprep.subr.mxu0 0.0
        %978 = vmatpush1.xpose.msra.mxu0 0.0
        %979 = vmatprep.subr.mxu0 0.0
        %980 = vmatpush1.xpose.msra.mxu0 0.0
        %981 = vmatprep.subr.mxu0 0.0
        %982 = vmatpush1.xpose.msra.mxu0 0.0
        %983 = vmatprep.subr.mxu0 0.0
        %984 = vmatpush1.xpose.msra.mxu0 0.0
        %985 = vmatprep.subr.mxu0 0.0
        %986 = vmatpush1.xpose.msra.mxu0 0.0
        %987 = vmatprep.subr.mxu0 0.0
        %988 = vmatpush1.xpose.msra.mxu0 %v955
        %989 = vmatprep.subr.mxu0 0.0
        %990 = vmatpush2.xpose.msra.mxu0 0.0
        %991 = vmatprep.subr.mxu0 0.0
        %992 = vmatpush2.xpose.msra.mxu0 0.0
        %993 = vmatprep.subr.mxu0 0.0
        %994 = vmatpush2.xpose.msra.mxu0 0.0
        %995 = vmatprep.subr.mxu0 0.0
        %996 = vmatpush2.xpose.msra.mxu0 0.0
        %997 = vmatprep.subr.mxu0 0.0
        %998 = vmatpush2.xpose.msra.mxu0 0.0
        %999 = vmatprep.subr.mxu0 0.0
        %1000 = vmatpush2.xpose.msra.mxu0 0.0
        %1001 = vmatprep.subr.mxu0 0.0
        %1002 = vmatpush2.xpose.msra.mxu0 0.0
        %1003 = vmatprep.subr.mxu0 0.0
        %1004 = vmatpush2.xpose.msra.mxu0 0.0
        %1005 = vmatprep.subr.mxu0 0.0
        %1006 = vmatpush2.xpose.msra.mxu0 0.0
        %1007 = vmatprep.subr.mxu0 0.0
        %1008 = vmatpush2.xpose.msra.mxu0 0.0
        %1009 = vmatprep.subr.mxu0 0.0
        %1010 = vmatpush2.xpose.msra.mxu0 0.0
        %1011 = vmatprep.subr.mxu0 0.0
        %1012 = vmatpush2.xpose.msra.mxu0 0.0
        %1013 = vmatprep.subr.mxu0 0.0
        %1014 = vmatpush2.xpose.msra.mxu0 0.0
        %1015 = vmatprep.subr.mxu0 0.0
        %1016 = vmatpush2.xpose.msra.mxu0 0.0
        %1017 = vmatprep.subr.mxu0 0.0
        %1018 = vmatpush2.xpose.msra.mxu0 0.0
        %1019 = vmatprep.subr.mxu0 0.0
        %1020 = vmatpush2.xpose.msra.mxu0 0.0
        %1021 = vmatprep.mubr.f32.mxu0 0.0
        %1022 = vmatmul.mubr.f32.gmra.mxu0 %v953
        %v1023 = vpop.f32.mrf.mxu0
        %v1024 = vadd.f32 0.0, %v1023
        %v1025 = vpop.f32.mrf.mxu0
        %1026 = vdwg.mxu0
        %1027 = vrot.lane.b32.xlu0 %v473, 64
        %v1028 = vpop.permute.xlu0 %1027
        %v1029 = vsel %vm496, %v473, 0
        %v1031 = vsel %vm496, %v1028, 0
        %1033 = vmatprep.subr.mxu0 0.0
        %1034 = vmatpush1.xpose.msra.mxu0 0.0
        %1035 = vmatprep.subr.mxu0 0.0
        %1036 = vmatpush1.xpose.msra.mxu0 0.0
        %1037 = vmatprep.subr.mxu0 0.0
        %1038 = vmatpush1.xpose.msra.mxu0 0.0
        %1039 = vmatprep.subr.mxu0 0.0
        %1040 = vmatpush1.xpose.msra.mxu0 0.0
        %1041 = vmatprep.subr.mxu0 0.0
        %1042 = vmatpush1.xpose.msra.mxu0 0.0
        %1043 = vmatprep.subr.mxu0 0.0
        %1044 = vmatpush1.xpose.msra.mxu0 0.0
        %1045 = vmatprep.subr.mxu0 0.0
        %1046 = vmatpush1.xpose.msra.mxu0 0.0
        %1047 = vmatprep.subr.mxu0 0.0
        %1048 = vmatpush1.xpose.msra.mxu0 0.0
        %1049 = vmatprep.subr.mxu0 0.0
        %1050 = vmatpush1.xpose.msra.mxu0 0.0
        %1051 = vmatprep.subr.mxu0 0.0
        %1052 = vmatpush1.xpose.msra.mxu0 0.0
        %1053 = vmatprep.subr.mxu0 0.0
        %1054 = vmatpush1.xpose.msra.mxu0 0.0
        %1055 = vmatprep.subr.mxu0 0.0
        %1056 = vmatpush1.xpose.msra.mxu0 0.0
        %1057 = vmatprep.subr.mxu0 0.0
        %1058 = vmatpush1.xpose.msra.mxu0 0.0
        %1059 = vmatprep.subr.mxu0 0.0
        %1060 = vmatpush1.xpose.msra.mxu0 0.0
        %1061 = vmatprep.subr.mxu0 0.0
        %1062 = vmatpush1.xpose.msra.mxu0 0.0
        %1063 = vmatprep.subr.mxu0 0.0
        %1064 = vmatpush1.xpose.msra.mxu0 %v1031
        %1065 = vmatprep.subr.mxu0 0.0
        %1066 = vmatpush2.xpose.msra.mxu0 0.0
        %1067 = vmatprep.subr.mxu0 0.0
        %1068 = vmatpush2.xpose.msra.mxu0 0.0
        %1069 = vmatprep.subr.mxu0 0.0
        %1070 = vmatpush2.xpose.msra.mxu0 0.0
        %1071 = vmatprep.subr.mxu0 0.0
        %1072 = vmatpush2.xpose.msra.mxu0 0.0
        %1073 = vmatprep.subr.mxu0 0.0
        %1074 = vmatpush2.xpose.msra.mxu0 0.0
        %1075 = vmatprep.subr.mxu0 0.0
        %1076 = vmatpush2.xpose.msra.mxu0 0.0
        %1077 = vmatprep.subr.mxu0 0.0
        %1078 = vmatpush2.xpose.msra.mxu0 0.0
        %1079 = vmatprep.subr.mxu0 0.0
        %1080 = vmatpush2.xpose.msra.mxu0 0.0
        %1081 = vmatprep.subr.mxu0 0.0
        %1082 = vmatpush2.xpose.msra.mxu0 0.0
        %1083 = vmatprep.subr.mxu0 0.0
        %1084 = vmatpush2.xpose.msra.mxu0 0.0
        %1085 = vmatprep.subr.mxu0 0.0
        %1086 = vmatpush2.xpose.msra.mxu0 0.0
        %1087 = vmatprep.subr.mxu0 0.0
        %1088 = vmatpush2.xpose.msra.mxu0 0.0
        %1089 = vmatprep.subr.mxu0 0.0
        %1090 = vmatpush2.xpose.msra.mxu0 0.0
        %1091 = vmatprep.subr.mxu0 0.0
        %1092 = vmatpush2.xpose.msra.mxu0 0.0
        %1093 = vmatprep.subr.mxu0 0.0
        %1094 = vmatpush2.xpose.msra.mxu0 0.0
        %1095 = vmatprep.subr.mxu0 0.0
        %1096 = vmatpush2.xpose.msra.mxu0 0.0
        %1097 = vmatprep.mubr.f32.mxu0 0.0
        %1098 = vmatmul.mubr.f32.gmra.mxu0 %v1029
        %v1099 = vpop.f32.mrf.mxu0
        %v1100 = vadd.f32 0.0, %v1099
        %v1101 = vpop.f32.mrf.mxu0
        %1102 = vdwg.mxu0
        %vm1103 = vcmask 64512
        %v1104 = vsel %vm1103, %v568, -inf
        %1105 = vmax.xlane.f32.xlu0 %v1104
        %v1106 = vpop.xlane.xlu0 %1105
        %v1107 = vsel %vm1103, %v644, -inf
        %1108 = vmax.xlane.f32.xlu0 %v1107
        %v1109 = vpop.xlane.xlu0 %1108
        %v1110 = vsel %vm1103, %v720, -inf
        %1111 = vmax.xlane.f32.xlu0 %v1110
        %v1112 = vpop.xlane.xlu0 %1111
        %v1113 = vsel %vm1103, %v796, -inf
        %1114 = vmax.xlane.f32.xlu0 %v1113
        %v1115 = vpop.xlane.xlu0 %1114
        %v1116 = vsel %vm1103, %v872, -inf
        %1117 = vmax.xlane.f32.xlu0 %v1116
        %v1118 = vpop.xlane.xlu0 %1117
        %v1119 = vsel %vm1103, %v948, -inf
        %1120 = vmax.xlane.f32.xlu0 %v1119
        %v1121 = vpop.xlane.xlu0 %1120
        %v1122 = vsel %vm1103, %v1024, -inf
        %1123 = vmax.xlane.f32.xlu0 %v1122
        %v1124 = vpop.xlane.xlu0 %1123
        %v1125 = vsel %vm1103, %v1100, -inf
        %1126 = vmax.xlane.f32.xlu0 %v1125
        %v1127 = vpop.xlane.xlu0 %1126
        %v1128 = vsub.f32 %v568, %v1106
        %v1129 = vsub.f32 %v644, %v1109
        %v1130 = vsub.f32 %v720, %v1112
        %v1131 = vsub.f32 %v796, %v1115
        %v1132 = vsub.f32 %v872, %v1118
        %v1133 = vsub.f32 %v948, %v1121
        %v1134 = vsub.f32 %v1024, %v1124
        %v1135 = vsub.f32 %v1100, %v1127
        %v1136 = vmul.f32 %v1128, 1.442695
        %v1137 = vpow.pop %v1136
        %v1138 = vmul.f32 %v1129, 1.442695
        %v1139 = vpow.pop %v1138
        %v1140 = vmul.f32 %v1130, 1.442695
        %v1141 = vpow.pop %v1140
        %v1142 = vmul.f32 %v1131, 1.442695
        %v1143 = vpow.pop %v1142
        %v1144 = vmul.f32 %v1132, 1.442695
        %v1145 = vpow.pop %v1144
        %v1146 = vmul.f32 %v1133, 1.442695
        %v1147 = vpow.pop %v1146
        %v1148 = vmul.f32 %v1134, 1.442695
        %v1149 = vpow.pop %v1148
        %v1150 = vmul.f32 %v1135, 1.442695
        %v1151 = vpow.pop %v1150
        %v1152 = vsel %vm1103, %v1137, 0.0
        %1153 = vadd.xlane.f32.xlu0 %v1152
        %v1154 = vpop.xlane.xlu0 %1153
        %v1155 = vsel %vm1103, %v1139, 0.0
        %1156 = vadd.xlane.f32.xlu0 %v1155
        %v1157 = vpop.xlane.xlu0 %1156
        %v1158 = vsel %vm1103, %v1141, 0.0
        %1159 = vadd.xlane.f32.xlu0 %v1158
        %v1160 = vpop.xlane.xlu0 %1159
        %v1161 = vsel %vm1103, %v1143, 0.0
        %1162 = vadd.xlane.f32.xlu0 %v1161
        %v1163 = vpop.xlane.xlu0 %1162
        %v1164 = vsel %vm1103, %v1145, 0.0
        %1165 = vadd.xlane.f32.xlu0 %v1164
        %v1166 = vpop.xlane.xlu0 %1165
        %v1167 = vsel %vm1103, %v1147, 0.0
        %1168 = vadd.xlane.f32.xlu0 %v1167
        %v1169 = vpop.xlane.xlu0 %1168
        %v1170 = vsel %vm1103, %v1149, 0.0
        %1171 = vadd.xlane.f32.xlu0 %v1170
        %v1172 = vpop.xlane.xlu0 %1171
        %v1173 = vsel %vm1103, %v1151, 0.0
        %1174 = vadd.xlane.f32.xlu0 %v1173
        %v1175 = vpop.xlane.xlu0 %1174
        %v1176 = vrcp.pop %v1154
        %v1177 = vrcp.pop %v1157
        %v1178 = vrcp.pop %v1160
        %v1179 = vrcp.pop %v1163
        %v1180 = vrcp.pop %v1166
        %v1181 = vrcp.pop %v1169
        %v1182 = vrcp.pop %v1172
        %v1183 = vrcp.pop %v1175
        %v1184 = vmul.f32 %v1137, %v1176
        %v1185 = vmul.f32 %v1139, %v1177
        %v1186 = vmul.f32 %v1141, %v1178
        %v1187 = vmul.f32 %v1143, %v1179
        %v1188 = vmul.f32 %v1145, %v1180
        %v1189 = vmul.f32 %v1147, %v1181
        %v1190 = vmul.f32 %v1149, %v1182
        %v1191 = vmul.f32 %v1151, %v1183
        %v1193 = vsel %vm1103, %v1184, 0
        %1195 = vmatprep.subr.mxu0 0.0
        %1196 = vmatpush1.msra.mxu0 0.0
        %1197 = vmatprep.subr.mxu0 0.0
        %1198 = vmatpush1.msra.mxu0 0.0
        %1199 = vmatprep.subr.mxu0 0.0
        %1200 = vmatpush1.msra.mxu0 0.0
        %1201 = vmatprep.subr.mxu0 0.0
        %1202 = vmatpush1.msra.mxu0 0.0
        %1203 = vmatprep.subr.mxu0 0.0
        %1204 = vmatpush1.msra.mxu0 0.0
        %1205 = vmatprep.subr.mxu0 0.0
        %1206 = vmatpush1.msra.mxu0 0.0
        %1207 = vmatprep.subr.mxu0 0.0
        %1208 = vmatpush1.msra.mxu0 0.0
        %1209 = vmatprep.subr.mxu0 0.0
        %1210 = vmatpush1.msra.mxu0 0.0
        %1211 = vmatprep.subr.mxu0 0.0
        %1212 = vmatpush1.msra.mxu0 0.0
        %1213 = vmatprep.subr.mxu0 0.0
        %1214 = vmatpush1.msra.mxu0 0.0
        %1215 = vmatprep.subr.mxu0 0.0
        %1216 = vmatpush1.msra.mxu0 0.0
        %1217 = vmatprep.subr.mxu0 0.0
        %1218 = vmatpush1.msra.mxu0 0.0
        %1219 = vmatprep.subr.mxu0 0.0
        %1220 = vmatpush1.msra.mxu0 0.0
        %1221 = vmatprep.subr.mxu0 0.0
        %1222 = vmatpush1.msra.mxu0 0.0
        %1223 = vmatprep.subr.mxu0 0.0
        %1224 = vmatpush1.msra.mxu0 0.0
        %1225 = vmatprep.subr.mxu0 0.0
        %1226 = vmatpush1.msra.mxu0 %v452
        %1227 = vmatprep.subr.mxu0 0.0
        %1228 = vmatpush2.msra.mxu0 0.0
        %1229 = vmatprep.subr.mxu0 0.0
        %1230 = vmatpush2.msra.mxu0 0.0
        %1231 = vmatprep.subr.mxu0 0.0
        %1232 = vmatpush2.msra.mxu0 0.0
        %1233 = vmatprep.subr.mxu0 0.0
        %1234 = vmatpush2.msra.mxu0 0.0
        %1235 = vmatprep.subr.mxu0 0.0
        %1236 = vmatpush2.msra.mxu0 0.0
        %1237 = vmatprep.subr.mxu0 0.0
        %1238 = vmatpush2.msra.mxu0 0.0
        %1239 = vmatprep.subr.mxu0 0.0
        %1240 = vmatpush2.msra.mxu0 0.0
        %1241 = vmatprep.subr.mxu0 0.0
        %1242 = vmatpush2.msra.mxu0 0.0
        %1243 = vmatprep.subr.mxu0 0.0
        %1244 = vmatpush2.msra.mxu0 0.0
        %1245 = vmatprep.subr.mxu0 0.0
        %1246 = vmatpush2.msra.mxu0 0.0
        %1247 = vmatprep.subr.mxu0 0.0
        %1248 = vmatpush2.msra.mxu0 0.0
        %1249 = vmatprep.subr.mxu0 0.0
        %1250 = vmatpush2.msra.mxu0 0.0
        %1251 = vmatprep.subr.mxu0 0.0
        %1252 = vmatpush2.msra.mxu0 0.0
        %1253 = vmatprep.subr.mxu0 0.0
        %1254 = vmatpush2.msra.mxu0 0.0
        %1255 = vmatprep.subr.mxu0 0.0
        %1256 = vmatpush2.msra.mxu0 0.0
        %1257 = vmatprep.subr.mxu0 0.0
        %1258 = vmatpush2.msra.mxu0 0.0
        %1259 = vmatprep.mubr.f32.mxu0 0.0
        %1260 = vmatmul.mubr.f32.gmra.mxu0 %v1193
        %v1261 = vpop.f32.mrf.mxu0
        %v1262 = vadd.f32 0.0, %v1261
        %v1263 = vpop.f32.mrf.mxu0
        %1264 = vdwg.mxu0
        %v1266 = vsel %vm1103, %v1185, 0
        %1268 = vmatprep.subr.mxu0 0.0
        %1269 = vmatpush1.msra.mxu0 0.0
        %1270 = vmatprep.subr.mxu0 0.0
        %1271 = vmatpush1.msra.mxu0 0.0
        %1272 = vmatprep.subr.mxu0 0.0
        %1273 = vmatpush1.msra.mxu0 0.0
        %1274 = vmatprep.subr.mxu0 0.0
        %1275 = vmatpush1.msra.mxu0 0.0
        %1276 = vmatprep.subr.mxu0 0.0
        %1277 = vmatpush1.msra.mxu0 0.0
        %1278 = vmatprep.subr.mxu0 0.0
        %1279 = vmatpush1.msra.mxu0 0.0
        %1280 = vmatprep.subr.mxu0 0.0
        %1281 = vmatpush1.msra.mxu0 0.0
        %1282 = vmatprep.subr.mxu0 0.0
        %1283 = vmatpush1.msra.mxu0 0.0
        %1284 = vmatprep.subr.mxu0 0.0
        %1285 = vmatpush1.msra.mxu0 0.0
        %1286 = vmatprep.subr.mxu0 0.0
        %1287 = vmatpush1.msra.mxu0 0.0
        %1288 = vmatprep.subr.mxu0 0.0
        %1289 = vmatpush1.msra.mxu0 0.0
        %1290 = vmatprep.subr.mxu0 0.0
        %1291 = vmatpush1.msra.mxu0 0.0
        %1292 = vmatprep.subr.mxu0 0.0
        %1293 = vmatpush1.msra.mxu0 0.0
        %1294 = vmatprep.subr.mxu0 0.0
        %1295 = vmatpush1.msra.mxu0 0.0
        %1296 = vmatprep.subr.mxu0 0.0
        %1297 = vmatpush1.msra.mxu0 0.0
        %1298 = vmatprep.subr.mxu0 0.0
        %1299 = vmatpush1.msra.mxu0 %v458
        %1300 = vmatprep.subr.mxu0 0.0
        %1301 = vmatpush2.msra.mxu0 0.0
        %1302 = vmatprep.subr.mxu0 0.0
        %1303 = vmatpush2.msra.mxu0 0.0
        %1304 = vmatprep.subr.mxu0 0.0
        %1305 = vmatpush2.msra.mxu0 0.0
        %1306 = vmatprep.subr.mxu0 0.0
        %1307 = vmatpush2.msra.mxu0 0.0
        %1308 = vmatprep.subr.mxu0 0.0
        %1309 = vmatpush2.msra.mxu0 0.0
        %1310 = vmatprep.subr.mxu0 0.0
        %1311 = vmatpush2.msra.mxu0 0.0
        %1312 = vmatprep.subr.mxu0 0.0
        %1313 = vmatpush2.msra.mxu0 0.0
        %1314 = vmatprep.subr.mxu0 0.0
        %1315 = vmatpush2.msra.mxu0 0.0
        %1316 = vmatprep.subr.mxu0 0.0
        %1317 = vmatpush2.msra.mxu0 0.0
        %1318 = vmatprep.subr.mxu0 0.0
        %1319 = vmatpush2.msra.mxu0 0.0
        %1320 = vmatprep.subr.mxu0 0.0
        %1321 = vmatpush2.msra.mxu0 0.0
        %1322 = vmatprep.subr.mxu0 0.0
        %1323 = vmatpush2.msra.mxu0 0.0
        %1324 = vmatprep.subr.mxu0 0.0
        %1325 = vmatpush2.msra.mxu0 0.0
        %1326 = vmatprep.subr.mxu0 0.0
        %1327 = vmatpush2.msra.mxu0 0.0
        %1328 = vmatprep.subr.mxu0 0.0
        %1329 = vmatpush2.msra.mxu0 0.0
        %1330 = vmatprep.subr.mxu0 0.0
        %1331 = vmatpush2.msra.mxu0 0.0
        %1332 = vmatprep.mubr.f32.mxu0 0.0
        %1333 = vmatmul.mubr.f32.gmra.mxu0 %v1266
        %v1334 = vpop.f32.mrf.mxu0
        %v1335 = vadd.f32 0.0, %v1334
        %v1336 = vpop.f32.mrf.mxu0
        %1337 = vdwg.mxu0
        %v1339 = vsel %vm1103, %v1186, 0
        %1341 = vmatprep.subr.mxu0 0.0
        %1342 = vmatpush1.msra.mxu0 0.0
        %1343 = vmatprep.subr.mxu0 0.0
        %1344 = vmatpush1.msra.mxu0 0.0
        %1345 = vmatprep.subr.mxu0 0.0
        %1346 = vmatpush1.msra.mxu0 0.0
        %1347 = vmatprep.subr.mxu0 0.0
        %1348 = vmatpush1.msra.mxu0 0.0
        %1349 = vmatprep.subr.mxu0 0.0
        %1350 = vmatpush1.msra.mxu0 0.0
        %1351 = vmatprep.subr.mxu0 0.0
        %1352 = vmatpush1.msra.mxu0 0.0
        %1353 = vmatprep.subr.mxu0 0.0
        %1354 = vmatpush1.msra.mxu0 0.0
        %1355 = vmatprep.subr.mxu0 0.0
        %1356 = vmatpush1.msra.mxu0 0.0
        %1357 = vmatprep.subr.mxu0 0.0
        %1358 = vmatpush1.msra.mxu0 0.0
        %1359 = vmatprep.subr.mxu0 0.0
        %1360 = vmatpush1.msra.mxu0 0.0
        %1361 = vmatprep.subr.mxu0 0.0
        %1362 = vmatpush1.msra.mxu0 0.0
        %1363 = vmatprep.subr.mxu0 0.0
        %1364 = vmatpush1.msra.mxu0 0.0
        %1365 = vmatprep.subr.mxu0 0.0
        %1366 = vmatpush1.msra.mxu0 0.0
        %1367 = vmatprep.subr.mxu0 0.0
        %1368 = vmatpush1.msra.mxu0 0.0
        %1369 = vmatprep.subr.mxu0 0.0
        %1370 = vmatpush1.msra.mxu0 0.0
        %1371 = vmatprep.subr.mxu0 0.0
        %1372 = vmatpush1.msra.mxu0 %v477
        %1373 = vmatprep.subr.mxu0 0.0
        %1374 = vmatpush2.msra.mxu0 0.0
        %1375 = vmatprep.subr.mxu0 0.0
        %1376 = vmatpush2.msra.mxu0 0.0
        %1377 = vmatprep.subr.mxu0 0.0
        %1378 = vmatpush2.msra.mxu0 0.0
        %1379 = vmatprep.subr.mxu0 0.0
        %1380 = vmatpush2.msra.mxu0 0.0
        %1381 = vmatprep.subr.mxu0 0.0
        %1382 = vmatpush2.msra.mxu0 0.0
        %1383 = vmatprep.subr.mxu0 0.0
        %1384 = vmatpush2.msra.mxu0 0.0
        %1385 = vmatprep.subr.mxu0 0.0
        %1386 = vmatpush2.msra.mxu0 0.0
        %1387 = vmatprep.subr.mxu0 0.0
        %1388 = vmatpush2.msra.mxu0 0.0
        %1389 = vmatprep.subr.mxu0 0.0
        %1390 = vmatpush2.msra.mxu0 0.0
        %1391 = vmatprep.subr.mxu0 0.0
        %1392 = vmatpush2.msra.mxu0 0.0
        %1393 = vmatprep.subr.mxu0 0.0
        %1394 = vmatpush2.msra.mxu0 0.0
        %1395 = vmatprep.subr.mxu0 0.0
        %1396 = vmatpush2.msra.mxu0 0.0
        %1397 = vmatprep.subr.mxu0 0.0
        %1398 = vmatpush2.msra.mxu0 0.0
        %1399 = vmatprep.subr.mxu0 0.0
        %1400 = vmatpush2.msra.mxu0 0.0
        %1401 = vmatprep.subr.mxu0 0.0
        %1402 = vmatpush2.msra.mxu0 0.0
        %1403 = vmatprep.subr.mxu0 0.0
        %1404 = vmatpush2.msra.mxu0 0.0
        %1405 = vmatprep.mubr.f32.mxu0 0.0
        %1406 = vmatmul.mubr.f32.gmra.mxu0 %v1339
        %v1407 = vpop.f32.mrf.mxu0
        %v1408 = vadd.f32 0.0, %v1407
        %v1409 = vpop.f32.mrf.mxu0
        %1410 = vdwg.mxu0
        %v1412 = vsel %vm1103, %v1187, 0
        %1414 = vmatprep.subr.mxu0 0.0
        %1415 = vmatpush1.msra.mxu0 0.0
        %1416 = vmatprep.subr.mxu0 0.0
        %1417 = vmatpush1.msra.mxu0 0.0
        %1418 = vmatprep.subr.mxu0 0.0
        %1419 = vmatpush1.msra.mxu0 0.0
        %1420 = vmatprep.subr.mxu0 0.0
        %1421 = vmatpush1.msra.mxu0 0.0
        %1422 = vmatprep.subr.mxu0 0.0
        %1423 = vmatpush1.msra.mxu0 0.0
        %1424 = vmatprep.subr.mxu0 0.0
        %1425 = vmatpush1.msra.mxu0 0.0
        %1426 = vmatprep.subr.mxu0 0.0
        %1427 = vmatpush1.msra.mxu0 0.0
        %1428 = vmatprep.subr.mxu0 0.0
        %1429 = vmatpush1.msra.mxu0 0.0
        %1430 = vmatprep.subr.mxu0 0.0
        %1431 = vmatpush1.msra.mxu0 0.0
        %1432 = vmatprep.subr.mxu0 0.0
        %1433 = vmatpush1.msra.mxu0 0.0
        %1434 = vmatprep.subr.mxu0 0.0
        %1435 = vmatpush1.msra.mxu0 0.0
        %1436 = vmatprep.subr.mxu0 0.0
        %1437 = vmatpush1.msra.mxu0 0.0
        %1438 = vmatprep.subr.mxu0 0.0
        %1439 = vmatpush1.msra.mxu0 0.0
        %1440 = vmatprep.subr.mxu0 0.0
        %1441 = vmatpush1.msra.mxu0 0.0
        %1442 = vmatprep.subr.mxu0 0.0
        %1443 = vmatpush1.msra.mxu0 0.0
        %1444 = vmatprep.subr.mxu0 0.0
        %1445 = vmatpush1.msra.mxu0 %v479
        %1446 = vmatprep.subr.mxu0 0.0
        %1447 = vmatpush2.msra.mxu0 0.0
        %1448 = vmatprep.subr.mxu0 0.0
        %1449 = vmatpush2.msra.mxu0 0.0
        %1450 = vmatprep.subr.mxu0 0.0
        %1451 = vmatpush2.msra.mxu0 0.0
        %1452 = vmatprep.subr.mxu0 0.0
        %1453 = vmatpush2.msra.mxu0 0.0
        %1454 = vmatprep.subr.mxu0 0.0
        %1455 = vmatpush2.msra.mxu0 0.0
        %1456 = vmatprep.subr.mxu0 0.0
        %1457 = vmatpush2.msra.mxu0 0.0
        %1458 = vmatprep.subr.mxu0 0.0
        %1459 = vmatpush2.msra.mxu0 0.0
        %1460 = vmatprep.subr.mxu0 0.0
        %1461 = vmatpush2.msra.mxu0 0.0
        %1462 = vmatprep.subr.mxu0 0.0
        %1463 = vmatpush2.msra.mxu0 0.0
        %1464 = vmatprep.subr.mxu0 0.0
        %1465 = vmatpush2.msra.mxu0 0.0
        %1466 = vmatprep.subr.mxu0 0.0
        %1467 = vmatpush2.msra.mxu0 0.0
        %1468 = vmatprep.subr.mxu0 0.0
        %1469 = vmatpush2.msra.mxu0 0.0
        %1470 = vmatprep.subr.mxu0 0.0
        %1471 = vmatpush2.msra.mxu0 0.0
        %1472 = vmatprep.subr.mxu0 0.0
        %1473 = vmatpush2.msra.mxu0 0.0
        %1474 = vmatprep.subr.mxu0 0.0
        %1475 = vmatpush2.msra.mxu0 0.0
        %1476 = vmatprep.subr.mxu0 0.0
        %1477 = vmatpush2.msra.mxu0 0.0
        %1478 = vmatprep.mubr.f32.mxu0 0.0
        %1479 = vmatmul.mubr.f32.gmra.mxu0 %v1412
        %v1480 = vpop.f32.mrf.mxu0
        %v1481 = vadd.f32 0.0, %v1480
        %v1482 = vpop.f32.mrf.mxu0
        %1483 = vdwg.mxu0
        %v1485 = vsel %vm1103, %v1188, 0
        %1487 = vmatprep.subr.mxu0 0.0
        %1488 = vmatpush1.msra.mxu0 0.0
        %1489 = vmatprep.subr.mxu0 0.0
        %1490 = vmatpush1.msra.mxu0 0.0
        %1491 = vmatprep.subr.mxu0 0.0
        %1492 = vmatpush1.msra.mxu0 0.0
        %1493 = vmatprep.subr.mxu0 0.0
        %1494 = vmatpush1.msra.mxu0 0.0
        %1495 = vmatprep.subr.mxu0 0.0
        %1496 = vmatpush1.msra.mxu0 0.0
        %1497 = vmatprep.subr.mxu0 0.0
        %1498 = vmatpush1.msra.mxu0 0.0
        %1499 = vmatprep.subr.mxu0 0.0
        %1500 = vmatpush1.msra.mxu0 0.0
        %1501 = vmatprep.subr.mxu0 0.0
        %1502 = vmatpush1.msra.mxu0 0.0
        %1503 = vmatprep.subr.mxu0 0.0
        %1504 = vmatpush1.msra.mxu0 0.0
        %1505 = vmatprep.subr.mxu0 0.0
        %1506 = vmatpush1.msra.mxu0 0.0
        %1507 = vmatprep.subr.mxu0 0.0
        %1508 = vmatpush1.msra.mxu0 0.0
        %1509 = vmatprep.subr.mxu0 0.0
        %1510 = vmatpush1.msra.mxu0 0.0
        %1511 = vmatprep.subr.mxu0 0.0
        %1512 = vmatpush1.msra.mxu0 0.0
        %1513 = vmatprep.subr.mxu0 0.0
        %1514 = vmatpush1.msra.mxu0 0.0
        %1515 = vmatprep.subr.mxu0 0.0
        %1516 = vmatpush1.msra.mxu0 0.0
        %1517 = vmatprep.subr.mxu0 0.0
        %1518 = vmatpush1.msra.mxu0 %v483
        %1519 = vmatprep.subr.mxu0 0.0
        %1520 = vmatpush2.msra.mxu0 0.0
        %1521 = vmatprep.subr.mxu0 0.0
        %1522 = vmatpush2.msra.mxu0 0.0
        %1523 = vmatprep.subr.mxu0 0.0
        %1524 = vmatpush2.msra.mxu0 0.0
        %1525 = vmatprep.subr.mxu0 0.0
        %1526 = vmatpush2.msra.mxu0 0.0
        %1527 = vmatprep.subr.mxu0 0.0
        %1528 = vmatpush2.msra.mxu0 0.0
        %1529 = vmatprep.subr.mxu0 0.0
        %1530 = vmatpush2.msra.mxu0 0.0
        %1531 = vmatprep.subr.mxu0 0.0
        %1532 = vmatpush2.msra.mxu0 0.0
        %1533 = vmatprep.subr.mxu0 0.0
        %1534 = vmatpush2.msra.mxu0 0.0
        %1535 = vmatprep.subr.mxu0 0.0
        %1536 = vmatpush2.msra.mxu0 0.0
        %1537 = vmatprep.subr.mxu0 0.0
        %1538 = vmatpush2.msra.mxu0 0.0
        %1539 = vmatprep.subr.mxu0 0.0
        %1540 = vmatpush2.msra.mxu0 0.0
        %1541 = vmatprep.subr.mxu0 0.0
        %1542 = vmatpush2.msra.mxu0 0.0
        %1543 = vmatprep.subr.mxu0 0.0
        %1544 = vmatpush2.msra.mxu0 0.0
        %1545 = vmatprep.subr.mxu0 0.0
        %1546 = vmatpush2.msra.mxu0 0.0
        %1547 = vmatprep.subr.mxu0 0.0
        %1548 = vmatpush2.msra.mxu0 0.0
        %1549 = vmatprep.subr.mxu0 0.0
        %1550 = vmatpush2.msra.mxu0 0.0
        %1551 = vmatprep.mubr.f32.mxu0 0.0
        %1552 = vmatmul.mubr.f32.gmra.mxu0 %v1485
        %v1553 = vpop.f32.mrf.mxu0
        %v1554 = vadd.f32 0.0, %v1553
        %v1555 = vpop.f32.mrf.mxu0
        %1556 = vdwg.mxu0
        %v1558 = vsel %vm1103, %v1189, 0
        %1560 = vmatprep.subr.mxu0 0.0
        %1561 = vmatpush1.msra.mxu0 0.0
        %1562 = vmatprep.subr.mxu0 0.0
        %1563 = vmatpush1.msra.mxu0 0.0
        %1564 = vmatprep.subr.mxu0 0.0
        %1565 = vmatpush1.msra.mxu0 0.0
        %1566 = vmatprep.subr.mxu0 0.0
        %1567 = vmatpush1.msra.mxu0 0.0
        %1568 = vmatprep.subr.mxu0 0.0
        %1569 = vmatpush1.msra.mxu0 0.0
        %1570 = vmatprep.subr.mxu0 0.0
        %1571 = vmatpush1.msra.mxu0 0.0
        %1572 = vmatprep.subr.mxu0 0.0
        %1573 = vmatpush1.msra.mxu0 0.0
        %1574 = vmatprep.subr.mxu0 0.0
        %1575 = vmatpush1.msra.mxu0 0.0
        %1576 = vmatprep.subr.mxu0 0.0
        %1577 = vmatpush1.msra.mxu0 0.0
        %1578 = vmatprep.subr.mxu0 0.0
        %1579 = vmatpush1.msra.mxu0 0.0
        %1580 = vmatprep.subr.mxu0 0.0
        %1581 = vmatpush1.msra.mxu0 0.0
        %1582 = vmatprep.subr.mxu0 0.0
        %1583 = vmatpush1.msra.mxu0 0.0
        %1584 = vmatprep.subr.mxu0 0.0
        %1585 = vmatpush1.msra.mxu0 0.0
        %1586 = vmatprep.subr.mxu0 0.0
        %1587 = vmatpush1.msra.mxu0 0.0
        %1588 = vmatprep.subr.mxu0 0.0
        %1589 = vmatpush1.msra.mxu0 0.0
        %1590 = vmatprep.subr.mxu0 0.0
        %1591 = vmatpush1.msra.mxu0 %v485
        %1592 = vmatprep.subr.mxu0 0.0
        %1593 = vmatpush2.msra.mxu0 0.0
        %1594 = vmatprep.subr.mxu0 0.0
        %1595 = vmatpush2.msra.mxu0 0.0
        %1596 = vmatprep.subr.mxu0 0.0
        %1597 = vmatpush2.msra.mxu0 0.0
        %1598 = vmatprep.subr.mxu0 0.0
        %1599 = vmatpush2.msra.mxu0 0.0
        %1600 = vmatprep.subr.mxu0 0.0
        %1601 = vmatpush2.msra.mxu0 0.0
        %1602 = vmatprep.subr.mxu0 0.0
        %1603 = vmatpush2.msra.mxu0 0.0
        %1604 = vmatprep.subr.mxu0 0.0
        %1605 = vmatpush2.msra.mxu0 0.0
        %1606 = vmatprep.subr.mxu0 0.0
        %1607 = vmatpush2.msra.mxu0 0.0
        %1608 = vmatprep.subr.mxu0 0.0
        %1609 = vmatpush2.msra.mxu0 0.0
        %1610 = vmatprep.subr.mxu0 0.0
        %1611 = vmatpush2.msra.mxu0 0.0
        %1612 = vmatprep.subr.mxu0 0.0
        %1613 = vmatpush2.msra.mxu0 0.0
        %1614 = vmatprep.subr.mxu0 0.0
        %1615 = vmatpush2.msra.mxu0 0.0
        %1616 = vmatprep.subr.mxu0 0.0
        %1617 = vmatpush2.msra.mxu0 0.0
        %1618 = vmatprep.subr.mxu0 0.0
        %1619 = vmatpush2.msra.mxu0 0.0
        %1620 = vmatprep.subr.mxu0 0.0
        %1621 = vmatpush2.msra.mxu0 0.0
        %1622 = vmatprep.subr.mxu0 0.0
        %1623 = vmatpush2.msra.mxu0 0.0
        %1624 = vmatprep.mubr.f32.mxu0 0.0
        %1625 = vmatmul.mubr.f32.gmra.mxu0 %v1558
        %v1626 = vpop.f32.mrf.mxu0
        %v1627 = vadd.f32 0.0, %v1626
        %v1628 = vpop.f32.mrf.mxu0
        %1629 = vdwg.mxu0
        %v1631 = vsel %vm1103, %v1190, 0
        %1633 = vmatprep.subr.mxu0 0.0
        %1634 = vmatpush1.msra.mxu0 0.0
        %1635 = vmatprep.subr.mxu0 0.0
        %1636 = vmatpush1.msra.mxu0 0.0
        %1637 = vmatprep.subr.mxu0 0.0
        %1638 = vmatpush1.msra.mxu0 0.0
        %1639 = vmatprep.subr.mxu0 0.0
        %1640 = vmatpush1.msra.mxu0 0.0
        %1641 = vmatprep.subr.mxu0 0.0
        %1642 = vmatpush1.msra.mxu0 0.0
        %1643 = vmatprep.subr.mxu0 0.0
        %1644 = vmatpush1.msra.mxu0 0.0
        %1645 = vmatprep.subr.mxu0 0.0
        %1646 = vmatpush1.msra.mxu0 0.0
        %1647 = vmatprep.subr.mxu0 0.0
        %1648 = vmatpush1.msra.mxu0 0.0
        %1649 = vmatprep.subr.mxu0 0.0
        %1650 = vmatpush1.msra.mxu0 0.0
        %1651 = vmatprep.subr.mxu0 0.0
        %1652 = vmatpush1.msra.mxu0 0.0
        %1653 = vmatprep.subr.mxu0 0.0
        %1654 = vmatpush1.msra.mxu0 0.0
        %1655 = vmatprep.subr.mxu0 0.0
        %1656 = vmatpush1.msra.mxu0 0.0
        %1657 = vmatprep.subr.mxu0 0.0
        %1658 = vmatpush1.msra.mxu0 0.0
        %1659 = vmatprep.subr.mxu0 0.0
        %1660 = vmatpush1.msra.mxu0 0.0
        %1661 = vmatprep.subr.mxu0 0.0
        %1662 = vmatpush1.msra.mxu0 0.0
        %1663 = vmatprep.subr.mxu0 0.0
        %1664 = vmatpush1.msra.mxu0 %v489
        %1665 = vmatprep.subr.mxu0 0.0
        %1666 = vmatpush2.msra.mxu0 0.0
        %1667 = vmatprep.subr.mxu0 0.0
        %1668 = vmatpush2.msra.mxu0 0.0
        %1669 = vmatprep.subr.mxu0 0.0
        %1670 = vmatpush2.msra.mxu0 0.0
        %1671 = vmatprep.subr.mxu0 0.0
        %1672 = vmatpush2.msra.mxu0 0.0
        %1673 = vmatprep.subr.mxu0 0.0
        %1674 = vmatpush2.msra.mxu0 0.0
        %1675 = vmatprep.subr.mxu0 0.0
        %1676 = vmatpush2.msra.mxu0 0.0
        %1677 = vmatprep.subr.mxu0 0.0
        %1678 = vmatpush2.msra.mxu0 0.0
        %1679 = vmatprep.subr.mxu0 0.0
        %1680 = vmatpush2.msra.mxu0 0.0
        %1681 = vmatprep.subr.mxu0 0.0
        %1682 = vmatpush2.msra.mxu0 0.0
        %1683 = vmatprep.subr.mxu0 0.0
        %1684 = vmatpush2.msra.mxu0 0.0
        %1685 = vmatprep.subr.mxu0 0.0
        %1686 = vmatpush2.msra.mxu0 0.0
        %1687 = vmatprep.subr.mxu0 0.0
        %1688 = vmatpush2.msra.mxu0 0.0
        %1689 = vmatprep.subr.mxu0 0.0
        %1690 = vmatpush2.msra.mxu0 0.0
        %1691 = vmatprep.subr.mxu0 0.0
        %1692 = vmatpush2.msra.mxu0 0.0
        %1693 = vmatprep.subr.mxu0 0.0
        %1694 = vmatpush2.msra.mxu0 0.0
        %1695 = vmatprep.subr.mxu0 0.0
        %1696 = vmatpush2.msra.mxu0 0.0
        %1697 = vmatprep.mubr.f32.mxu0 0.0
        %1698 = vmatmul.mubr.f32.gmra.mxu0 %v1631
        %v1699 = vpop.f32.mrf.mxu0
        %v1700 = vadd.f32 0.0, %v1699
        %v1701 = vpop.f32.mrf.mxu0
        %1702 = vdwg.mxu0
        %v1704 = vsel %vm1103, %v1191, 0
        %1706 = vmatprep.subr.mxu0 0.0
        %1707 = vmatpush1.msra.mxu0 0.0
        %1708 = vmatprep.subr.mxu0 0.0
        %1709 = vmatpush1.msra.mxu0 0.0
        %1710 = vmatprep.subr.mxu0 0.0
        %1711 = vmatpush1.msra.mxu0 0.0
        %1712 = vmatprep.subr.mxu0 0.0
        %1713 = vmatpush1.msra.mxu0 0.0
        %1714 = vmatprep.subr.mxu0 0.0
        %1715 = vmatpush1.msra.mxu0 0.0
        %1716 = vmatprep.subr.mxu0 0.0
        %1717 = vmatpush1.msra.mxu0 0.0
        %1718 = vmatprep.subr.mxu0 0.0
        %1719 = vmatpush1.msra.mxu0 0.0
        %1720 = vmatprep.subr.mxu0 0.0
        %1721 = vmatpush1.msra.mxu0 0.0
        %1722 = vmatprep.subr.mxu0 0.0
        %1723 = vmatpush1.msra.mxu0 0.0
        %1724 = vmatprep.subr.mxu0 0.0
        %1725 = vmatpush1.msra.mxu0 0.0
        %1726 = vmatprep.subr.mxu0 0.0
        %1727 = vmatpush1.msra.mxu0 0.0
        %1728 = vmatprep.subr.mxu0 0.0
        %1729 = vmatpush1.msra.mxu0 0.0
        %1730 = vmatprep.subr.mxu0 0.0
        %1731 = vmatpush1.msra.mxu0 0.0
        %1732 = vmatprep.subr.mxu0 0.0
        %1733 = vmatpush1.msra.mxu0 0.0
        %1734 = vmatprep.subr.mxu0 0.0
        %1735 = vmatpush1.msra.mxu0 0.0
        %1736 = vmatprep.subr.mxu0 0.0
        %1737 = vmatpush1.msra.mxu0 %v491
        %1738 = vmatprep.subr.mxu0 0.0
        %1739 = vmatpush2.msra.mxu0 0.0
        %1740 = vmatprep.subr.mxu0 0.0
        %1741 = vmatpush2.msra.mxu0 0.0
        %1742 = vmatprep.subr.mxu0 0.0
        %1743 = vmatpush2.msra.mxu0 0.0
        %1744 = vmatprep.subr.mxu0 0.0
        %1745 = vmatpush2.msra.mxu0 0.0
        %1746 = vmatprep.subr.mxu0 0.0
        %1747 = vmatpush2.msra.mxu0 0.0
        %1748 = vmatprep.subr.mxu0 0.0
        %1749 = vmatpush2.msra.mxu0 0.0
        %1750 = vmatprep.subr.mxu0 0.0
        %1751 = vmatpush2.msra.mxu0 0.0
        %1752 = vmatprep.subr.mxu0 0.0
        %1753 = vmatpush2.msra.mxu0 0.0
        %1754 = vmatprep.subr.mxu0 0.0
        %1755 = vmatpush2.msra.mxu0 0.0
        %1756 = vmatprep.subr.mxu0 0.0
        %1757 = vmatpush2.msra.mxu0 0.0
        %1758 = vmatprep.subr.mxu0 0.0
        %1759 = vmatpush2.msra.mxu0 0.0
        %1760 = vmatprep.subr.mxu0 0.0
        %1761 = vmatpush2.msra.mxu0 0.0
        %1762 = vmatprep.subr.mxu0 0.0
        %1763 = vmatpush2.msra.mxu0 0.0
        %1764 = vmatprep.subr.mxu0 0.0
        %1765 = vmatpush2.msra.mxu0 0.0
        %1766 = vmatprep.subr.mxu0 0.0
        %1767 = vmatpush2.msra.mxu0 0.0
        %1768 = vmatprep.subr.mxu0 0.0
        %1769 = vmatpush2.msra.mxu0 0.0
        %1770 = vmatprep.mubr.f32.mxu0 0.0
        %1771 = vmatmul.mubr.f32.gmra.mxu0 %v1704
        %v1772 = vpop.f32.mrf.mxu0
        %v1773 = vadd.f32 0.0, %v1772
        %v1774 = vpop.f32.mrf.mxu0
        %1775 = vdwg.mxu0
        %1778 = vrot.lane.b32.xlu0 %v1408, 16
        %v1779 = vpop.permute.xlu0 %1778
        %1780 = vrot.lane.b32.xlu0 %v1481, 16
        %v1781 = vpop.permute.xlu0 %1780
        %1786 = vrot.lane.b32.xlu0 %v1554, 32
        %v1787 = vpop.permute.xlu0 %1786
        %1788 = vrot.lane.b32.xlu0 %v1627, 32
        %v1789 = vpop.permute.xlu0 %1788
        %1794 = vrot.lane.b32.xlu0 %v1700, 48
        %v1795 = vpop.permute.xlu0 %1794
        %1796 = vrot.lane.b32.xlu0 %v1773, 48
        %v1797 = vpop.permute.xlu0 %1796
        %v1800 = vsel %vm496, %v1262, %v1779
        %v1801 = vsel %vm496, %v1335, %v1781
        %vm1802 = vcmask 261120
        %v1803 = vsel %vm1802, %v1800, %v1787
        %v1804 = vsel %vm1802, %v1801, %v1789
        %vm1805 = vcmask 392192
        %v1806 = vsel %vm1805, %v1803, %v1795
        %v1807 = vsel %vm1805, %v1804, %v1797
        %v1808 = vlaneseq
        %v1809 = vshrl.u32 %v1808, 7
        %v1810 = vsub.s32 1, %v1809
        %v1811 = vrot.slane %v366, %v1810
        %v1813 = vsel %vm376, %v1806, 0
        %v1816 = vsel %vm376, %v1807, 0
        %1818 = vmatprep.subr.mxu0 0.0
        %1819 = vmatpush1.msra.mxu0 0.0
        %1820 = vmatprep.subr.mxu0 0.0
        %1821 = vmatpush1.msra.mxu0 0.0
        %1822 = vmatprep.subr.mxu0 0.0
        %1823 = vmatpush1.msra.mxu0 0.0
        %1824 = vmatprep.subr.mxu0 0.0
        %1825 = vmatpush1.msra.mxu0 0.0
        %1826 = vmatprep.subr.mxu0 0.0
        %1827 = vmatpush1.msra.mxu0 0.0
        %1828 = vmatprep.subr.mxu0 0.0
        %1829 = vmatpush1.msra.mxu0 0.0
        %1830 = vmatprep.subr.mxu0 0.0
        %1831 = vmatpush1.msra.mxu0 0.0
        %1832 = vmatprep.subr.mxu0 0.0
        %1833 = vmatpush1.msra.mxu0 0.0
        %1834 = vmatprep.subr.mxu0 0.0
        %1835 = vmatpush1.msra.mxu0 %v365
        %1836 = vmatprep.subr.mxu0 0.0
        %1837 = vmatpush1.msra.mxu0 %v361
        %1838 = vmatprep.subr.mxu0 0.0
        %1839 = vmatpush1.msra.mxu0 %v357
        %1840 = vmatprep.subr.mxu0 0.0
        %1841 = vmatpush1.msra.mxu0 %v353
        %1842 = vmatprep.subr.mxu0 0.0
        %1843 = vmatpush1.msra.mxu0 %v349
        %1844 = vmatprep.subr.mxu0 0.0
        %1845 = vmatpush1.msra.mxu0 %v345
        %1846 = vmatprep.subr.mxu0 0.0
        %1847 = vmatpush1.msra.mxu0 %v341
        %1848 = vmatprep.subr.mxu0 0.0
        %1849 = vmatpush1.msra.mxu0 %v337
        %1850 = vmatprep.subr.mxu0 0.0
        %1851 = vmatpush2.msra.mxu0 0.0
        %1852 = vmatprep.subr.mxu0 0.0
        %1853 = vmatpush2.msra.mxu0 0.0
        %1854 = vmatprep.subr.mxu0 0.0
        %1855 = vmatpush2.msra.mxu0 0.0
        %1856 = vmatprep.subr.mxu0 0.0
        %1857 = vmatpush2.msra.mxu0 0.0
        %1858 = vmatprep.subr.mxu0 0.0
        %1859 = vmatpush2.msra.mxu0 0.0
        %1860 = vmatprep.subr.mxu0 0.0
        %1861 = vmatpush2.msra.mxu0 0.0
        %1862 = vmatprep.subr.mxu0 0.0
        %1863 = vmatpush2.msra.mxu0 0.0
        %1864 = vmatprep.subr.mxu0 0.0
        %1865 = vmatpush2.msra.mxu0 0.0
        %1866 = vmatprep.subr.mxu0 0.0
        %1867 = vmatpush2.msra.mxu0 0.0
        %1868 = vmatprep.subr.mxu0 0.0
        %1869 = vmatpush2.msra.mxu0 0.0
        %1870 = vmatprep.subr.mxu0 0.0
        %1871 = vmatpush2.msra.mxu0 0.0
        %1872 = vmatprep.subr.mxu0 0.0
        %1873 = vmatpush2.msra.mxu0 0.0
        %1874 = vmatprep.subr.mxu0 0.0
        %1875 = vmatpush2.msra.mxu0 0.0
        %1876 = vmatprep.subr.mxu0 0.0
        %1877 = vmatpush2.msra.mxu0 0.0
        %1878 = vmatprep.subr.mxu0 0.0
        %1879 = vmatpush2.msra.mxu0 0.0
        %1880 = vmatprep.subr.mxu0 0.0
        %1881 = vmatpush2.msra.mxu0 0.0
        %1882 = vmatprep.mubr.f32.mxu0 0.0
        %1883 = vmatmul.mubr.f32.gmra.mxu0 %v1813
        %v1884 = vpop.f32.mrf.mxu0
        %v1885 = vadd.f32 %v1811, %v1884
        %v1886 = vpop.f32.mrf.mxu0
        %1887 = vmatprep.mubr.f32.mxu0 0.0
        %1888 = vmatmul.mubr.f32.gmra.mxu0 %v1816
        %v1889 = vpop.f32.mrf.mxu0
        %v1890 = vadd.f32 %v1811, %v1889
        %v1891 = vpop.f32.mrf.mxu0
        %1892 = vdwg.mxu0
        %v1893 = vadd.f32 %v1885, %v332
        %v1894 = vadd.f32 %v1890, %v333
        %v1895 = vsel %vm376, %v1893, 0.0
        %1896 = vadd.xlane.f32.xlu0 %v1895
        %v1897 = vpop.xlane.xlu0 %1896
        %v1898 = vsel %vm376, %v1894, 0.0
        %1899 = vadd.xlane.f32.xlu0 %v1898
        %v1900 = vpop.xlane.xlu0 %1899
        %v1901 = vrcp.pop 64.0
        %v1902 = vmul.f32 %v1897, %v1901
        %v1903 = vmul.f32 %v1900, %v1901
        %v1904 = vsub.f32 %v1893, %v1902
        %v1905 = vsub.f32 %v1894, %v1903
        %v1906 = vmul.f32 %v1904, %v1904
        %v1907 = vmul.f32 %v1905, %v1905
        %v1908 = vsel %vm376, %v1906, 0.0
        %1909 = vadd.xlane.f32.xlu0 %v1908
        %v1910 = vpop.xlane.xlu0 %1909
        %v1911 = vsel %vm376, %v1907, 0.0
        %1912 = vadd.xlane.f32.xlu0 %v1911
        %v1913 = vpop.xlane.xlu0 %1912
        %v1914 = vmul.f32 %v1910, %v1901
        %v1915 = vmul.f32 %v1913, %v1901
        %v1916 = vadd.f32 %v1914, 1e-12
        %v1917 = vadd.f32 %v1915, 1e-12
        %v1918 = vrsqrt.pop %v1916
        %v1919 = vrsqrt.pop %v1917
        %v1920 = vmul.f32 %v1904, %v1918
        %v1921 = vmul.f32 %v1905, %v1919
        %v1922 = vlaneseq
        %v1923 = vshrl.u32 %v1922, 7
        %v1924 = vsub.s32 2, %v1923
        %v1925 = vrot.slane %v366, %v1924
        %v1926 = vmul.f32 %v1920, %v1925
        %v1927 = vmul.f32 %v1921, %v1925
        %v1928 = vlaneseq
        %v1929 = vshrl.u32 %v1928, 7
        %v1930 = vsub.s32 3, %v1929
        %v1931 = vrot.slane %v366, %v1930
        %v1932 = vadd.f32 %v1926, %v1931
        %v1933 = vadd.f32 %v1927, %v1931
        %v1934 = vlaneseq
        %v1935 = vshrl.u32 %v1934, 7
        %v1936 = vsub.s32 4, %v1935
        %v1937 = vrot.slane %v366, %v1936
        %v1939 = vsel %vm376, %v1932, 0
        %v1942 = vsel %vm376, %v1933, 0
        %1944 = vmatprep.subr.mxu0 0.0
        %1945 = vmatpush1.msra.mxu0 0.0
        %1946 = vmatprep.subr.mxu0 0.0
        %1947 = vmatpush1.msra.mxu0 0.0
        %1948 = vmatprep.subr.mxu0 0.0
        %1949 = vmatpush1.msra.mxu0 0.0
        %1950 = vmatprep.subr.mxu0 0.0
        %1951 = vmatpush1.msra.mxu0 0.0
        %1952 = vmatprep.subr.mxu0 0.0
        %1953 = vmatpush1.msra.mxu0 0.0
        %1954 = vmatprep.subr.mxu0 0.0
        %1955 = vmatpush1.msra.mxu0 0.0
        %1956 = vmatprep.subr.mxu0 0.0
        %1957 = vmatpush1.msra.mxu0 0.0
        %1958 = vmatprep.subr.mxu0 0.0
        %1959 = vmatpush1.msra.mxu0 0.0
        %1960 = vmatprep.subr.mxu0 0.0
        %1961 = vmatpush1.msra.mxu0 %v364
        %1962 = vmatprep.subr.mxu0 0.0
        %1963 = vmatpush1.msra.mxu0 %v360
        %1964 = vmatprep.subr.mxu0 0.0
        %1965 = vmatpush1.msra.mxu0 %v356
        %1966 = vmatprep.subr.mxu0 0.0
        %1967 = vmatpush1.msra.mxu0 %v352
        %1968 = vmatprep.subr.mxu0 0.0
        %1969 = vmatpush1.msra.mxu0 %v348
        %1970 = vmatprep.subr.mxu0 0.0
        %1971 = vmatpush1.msra.mxu0 %v344
        %1972 = vmatprep.subr.mxu0 0.0
        %1973 = vmatpush1.msra.mxu0 %v340
        %1974 = vmatprep.subr.mxu0 0.0
        %1975 = vmatpush1.msra.mxu0 %v336
        %1976 = vmatprep.subr.mxu0 0.0
        %1977 = vmatpush2.msra.mxu0 0.0
        %1978 = vmatprep.subr.mxu0 0.0
        %1979 = vmatpush2.msra.mxu0 0.0
        %1980 = vmatprep.subr.mxu0 0.0
        %1981 = vmatpush2.msra.mxu0 0.0
        %1982 = vmatprep.subr.mxu0 0.0
        %1983 = vmatpush2.msra.mxu0 0.0
        %1984 = vmatprep.subr.mxu0 0.0
        %1985 = vmatpush2.msra.mxu0 0.0
        %1986 = vmatprep.subr.mxu0 0.0
        %1987 = vmatpush2.msra.mxu0 0.0
        %1988 = vmatprep.subr.mxu0 0.0
        %1989 = vmatpush2.msra.mxu0 0.0
        %1990 = vmatprep.subr.mxu0 0.0
        %1991 = vmatpush2.msra.mxu0 0.0
        %1992 = vmatprep.subr.mxu0 0.0
        %1993 = vmatpush2.msra.mxu0 0.0
        %1994 = vmatprep.subr.mxu0 0.0
        %1995 = vmatpush2.msra.mxu0 0.0
        %1996 = vmatprep.subr.mxu0 0.0
        %1997 = vmatpush2.msra.mxu0 0.0
        %1998 = vmatprep.subr.mxu0 0.0
        %1999 = vmatpush2.msra.mxu0 0.0
        %2000 = vmatprep.subr.mxu0 0.0
        %2001 = vmatpush2.msra.mxu0 0.0
        %2002 = vmatprep.subr.mxu0 0.0
        %2003 = vmatpush2.msra.mxu0 0.0
        %2004 = vmatprep.subr.mxu0 0.0
        %2005 = vmatpush2.msra.mxu0 0.0
        %2006 = vmatprep.subr.mxu0 0.0
        %2007 = vmatpush2.msra.mxu0 0.0
        %2008 = vmatprep.mubr.f32.mxu0 0.0
        %2009 = vmatmul.mubr.f32.gmra.mxu0 %v1939
        %v2010 = vpop.f32.mrf.mxu0
        %v2011 = vadd.f32 %v1937, %v2010
        %v2012 = vpop.f32.mrf.mxu0
        %2013 = vmatprep.mubr.f32.mxu0 0.0
        %2014 = vmatmul.mubr.f32.gmra.mxu0 %v1942
        %v2015 = vpop.f32.mrf.mxu0
        %v2016 = vadd.f32 %v1937, %v2015
        %v2017 = vpop.f32.mrf.mxu0
        %2018 = vdwg.mxu0
        %v2019 = vmul.f32 %v2011, 0.5
        %v2020 = vmul.f32 %v2016, 0.5
        %v2021 = vmul.f32 %v2011, 0.70710677
        %v2022 = vmul.f32 %v2016, 0.70710677
        %v2023 = verf.f32.pop %v2021
        %v2024 = verf.f32.pop %v2022
        %v2025 = vadd.f32 %v2023, 1.0
        %v2026 = vadd.f32 %v2024, 1.0
        %v2027 = vmul.f32 %v2019, %v2025
        %v2028 = vmul.f32 %v2020, %v2026
        %v2029 = vld [vmem:[%s317] sm:$0xff]
        %v2030 = vld [vmem:[%s317 + $0x8] sm:$0xff]
        %v2031 = vld [vmem:[%s317 + $0x10] sm:$0xff]
        %v2032 = vld [vmem:[%s317 + $0x18] sm:$0xff]
        %v2033 = vld [vmem:[%s317 + $0x20] sm:$0xff]
        %v2034 = vld [vmem:[%s317 + $0x28] sm:$0xff]
        %v2035 = vld [vmem:[%s317 + $0x30] sm:$0xff]
        %v2036 = vld [vmem:[%s317 + $0x38] sm:$0xff]
        %v2037 = vld [vmem:[%s317 + $0x40] sm:$0xff]
        %v2038 = vld [vmem:[%s317 + $0x48] sm:$0xff]
        %v2039 = vld [vmem:[%s317 + $0x50] sm:$0xff]
        %v2040 = vld [vmem:[%s317 + $0x58] sm:$0xff]
        %v2041 = vld [vmem:[%s317 + $0x60] sm:$0xff]
        %v2042 = vld [vmem:[%s317 + $0x68] sm:$0xff]
        %v2043 = vld [vmem:[%s317 + $0x70] sm:$0xff]
        %v2044 = vld [vmem:[%s317 + $0x78] sm:$0xff]
        %v2045 = vlaneseq
        %v2046 = vshrl.u32 %v2045, 7
        %v2047 = vsub.s32 5, %v2046
        %v2048 = vrot.slane %v366, %v2047
        %2049 = vmatprep.subr.mxu0 0.0
        %2050 = vmatpush1.msra.mxu0 %v2044
        %2051 = vmatprep.subr.mxu0 0.0
        %2052 = vmatpush1.msra.mxu0 %v2043
        %2053 = vmatprep.subr.mxu0 0.0
        %2054 = vmatpush1.msra.mxu0 %v2042
        %2055 = vmatprep.subr.mxu0 0.0
        %2056 = vmatpush1.msra.mxu0 %v2041
        %2057 = vmatprep.subr.mxu0 0.0
        %2058 = vmatpush1.msra.mxu0 %v2040
        %2059 = vmatprep.subr.mxu0 0.0
        %2060 = vmatpush1.msra.mxu0 %v2039
        %2061 = vmatprep.subr.mxu0 0.0
        %2062 = vmatpush1.msra.mxu0 %v2038
        %2063 = vmatprep.subr.mxu0 0.0
        %2064 = vmatpush1.msra.mxu0 %v2037
        %2065 = vmatprep.subr.mxu0 0.0
        %2066 = vmatpush1.msra.mxu0 %v2036
        %2067 = vmatprep.subr.mxu0 0.0
        %2068 = vmatpush1.msra.mxu0 %v2035
        %2069 = vmatprep.subr.mxu0 0.0
        %2070 = vmatpush1.msra.mxu0 %v2034
        %2071 = vmatprep.subr.mxu0 0.0
        %2072 = vmatpush1.msra.mxu0 %v2033
        %2073 = vmatprep.subr.mxu0 0.0
        %2074 = vmatpush1.msra.mxu0 %v2032
        %2075 = vmatprep.subr.mxu0 0.0
        %2076 = vmatpush1.msra.mxu0 %v2031
        %2077 = vmatprep.subr.mxu0 0.0
        %2078 = vmatpush1.msra.mxu0 %v2030
        %2079 = vmatprep.subr.mxu0 0.0
        %2080 = vmatpush1.msra.mxu0 %v2029
        %2081 = vmatprep.subr.mxu0 0.0
        %2082 = vmatpush2.msra.mxu0 0.0
        %2083 = vmatprep.subr.mxu0 0.0
        %2084 = vmatpush2.msra.mxu0 0.0
        %2085 = vmatprep.subr.mxu0 0.0
        %2086 = vmatpush2.msra.mxu0 0.0
        %2087 = vmatprep.subr.mxu0 0.0
        %2088 = vmatpush2.msra.mxu0 0.0
        %2089 = vmatprep.subr.mxu0 0.0
        %2090 = vmatpush2.msra.mxu0 0.0
        %2091 = vmatprep.subr.mxu0 0.0
        %2092 = vmatpush2.msra.mxu0 0.0
        %2093 = vmatprep.subr.mxu0 0.0
        %2094 = vmatpush2.msra.mxu0 0.0
        %2095 = vmatprep.subr.mxu0 0.0
        %2096 = vmatpush2.msra.mxu0 0.0
        %2097 = vmatprep.subr.mxu0 0.0
        %2098 = vmatpush2.msra.mxu0 0.0
        %2099 = vmatprep.subr.mxu0 0.0
        %2100 = vmatpush2.msra.mxu0 0.0
        %2101 = vmatprep.subr.mxu0 0.0
        %2102 = vmatpush2.msra.mxu0 0.0
        %2103 = vmatprep.subr.mxu0 0.0
        %2104 = vmatpush2.msra.mxu0 0.0
        %2105 = vmatprep.subr.mxu0 0.0
        %2106 = vmatpush2.msra.mxu0 0.0
        %2107 = vmatprep.subr.mxu0 0.0
        %2108 = vmatpush2.msra.mxu0 0.0
        %2109 = vmatprep.subr.mxu0 0.0
        %2110 = vmatpush2.msra.mxu0 0.0
        %2111 = vmatprep.subr.mxu0 0.0
        %2112 = vmatpush2.msra.mxu0 0.0
        %2113 = vmatprep.mubr.f32.mxu0 0.0
        %2114 = vmatmul.mubr.f32.gmra.mxu0 %v2027
        %v2115 = vpop.f32.mrf.mxu0
        %v2116 = vadd.f32 %v2048, %v2115
        %v2117 = vpop.f32.mrf.mxu0
        %2118 = vmatprep.mubr.f32.mxu0 0.0
        %2119 = vmatmul.mubr.f32.gmra.mxu0 %v2028
        %v2120 = vpop.f32.mrf.mxu0
        %v2121 = vadd.f32 %v2048, %v2120
        %v2122 = vpop.f32.mrf.mxu0
        %2123 = vdwg.mxu0
        %v2124 = vadd.f32 %v2116, %v1932
        %v2125 = vadd.f32 %v2121, %v1933
        %v2126 = vsel %vm376, %v2124, 0.0
        %2127 = vadd.xlane.f32.xlu0 %v2126
        %v2128 = vpop.xlane.xlu0 %2127
        %v2129 = vsel %vm376, %v2125, 0.0
        %2130 = vadd.xlane.f32.xlu0 %v2129
        %v2131 = vpop.xlane.xlu0 %2130
        %v2132 = vmul.f32 %v2128, %v1901
        %v2133 = vmul.f32 %v2131, %v1901
        %v2134 = vsub.f32 %v2124, %v2132
        %v2135 = vsub.f32 %v2125, %v2133
        %v2136 = vmul.f32 %v2134, %v2134
        %v2137 = vmul.f32 %v2135, %v2135
        %v2138 = vsel %vm376, %v2136, 0.0
        %2139 = vadd.xlane.f32.xlu0 %v2138
        %v2140 = vpop.xlane.xlu0 %2139
        %v2141 = vsel %vm376, %v2137, 0.0
        %2142 = vadd.xlane.f32.xlu0 %v2141
        %v2143 = vpop.xlane.xlu0 %2142
        %v2144 = vmul.f32 %v2140, %v1901
        %v2145 = vmul.f32 %v2143, %v1901
        %v2146 = vadd.f32 %v2144, 1e-12
        %v2147 = vadd.f32 %v2145, 1e-12
        %v2148 = vrsqrt.pop %v2146
        %v2149 = vrsqrt.pop %v2147
        %v2150 = vmul.f32 %v2134, %v2148
        %v2151 = vmul.f32 %v2135, %v2149
        %v2152 = vlaneseq
        %v2153 = vshrl.u32 %v2152, 7
        %v2154 = vsub.s32 6, %v2153
        %v2155 = vrot.slane %v366, %v2154
        %v2156 = vmul.f32 %v2150, %v2155
        %v2157 = vmul.f32 %v2151, %v2155
        %v2158 = vlaneseq
        %v2159 = vshrl.u32 %v2158, 7
        %v2160 = vsub.s32 7, %v2159
        %v2161 = vrot.slane %v366, %v2160
        %v2162 = vadd.f32 %v2156, %v2161
        %v2163 = vadd.f32 %v2157, %v2161
        %2164 = vst.msk [vmem:[#allocation2] sm:$0xff] %vm376, %v2162
        %2165 = vst.msk [vmem:[#allocation2 + $0x8] sm:$0xff] %vm376, %v2163
        %p2166 = scmp.eq.s32.totalorder %s23, 1
        // Predicated region
        $region53: #{stage1_forward.1} parent=43 // pred_check
          %p2167 = pneg %p2166
        $region54: #{stage1_forward.1} parent=43 // pred_check_branch
          %2169 = sbr.rel (%p2167) target = $region56
        $region55: #{stage1_forward.1} parent=43 // pred_region
          %v2170 = vld [vmem:[%s4] sm:$0xff]
          %v2171 = vld [vmem:[%s4 + $0x8] sm:$0xff]
          %v2172 = vld [vmem:[%s4 + $0x10] sm:$0xff]
          %v2173 = vld [vmem:[%s4 + $0x18] sm:$0xff]
          %v2174 = vld [vmem:[%s4 + $0x20] sm:$0xff]
          %v2175 = vld [vmem:[%s4 + $0x28] sm:$0xff]
          %v2176 = vld [vmem:[%s4 + $0x30] sm:$0xff]
          %v2177 = vld [vmem:[%s4 + $0x38] sm:$0xff]
          %v2178 = vld [vmem:[%s4 + $0x40] sm:$0xff]
          %v2179 = vld [vmem:[%s4 + $0x48] sm:$0xff]
          %v2180 = vld [vmem:[%s4 + $0x50] sm:$0xff]
          %v2181 = vld [vmem:[%s4 + $0x58] sm:$0xff]
          %v2182 = vld [vmem:[%s4 + $0x60] sm:$0xff]
          %v2183 = vld [vmem:[%s4 + $0x68] sm:$0xff]
          %v2184 = vld [vmem:[%s4 + $0x70] sm:$0xff]
          %v2185 = vld [vmem:[%s4 + $0x78] sm:$0xff]
          %v2186 = vld [vmem:[%s4 + $0x80] sm:$0xff]
          %v2187 = vld [vmem:[%s4 + $0x88] sm:$0xff]
          %v2188 = vld [vmem:[%s4 + $0x90] sm:$0xff]
          %v2189 = vld [vmem:[%s4 + $0x98] sm:$0xff]
          %v2190 = vld [vmem:[%s4 + $0xa0] sm:$0xff]
          %v2191 = vld [vmem:[%s4 + $0xa8] sm:$0xff]
          %v2192 = vld [vmem:[%s4 + $0xb0] sm:$0xff]
          %v2193 = vld [vmem:[%s4 + $0xb8] sm:$0xff]
          %v2194 = vld [vmem:[%s5] sm:$0xff]
          %v2195 = vlaneseq
          %v2196 = vshrl.u32 %v2195, 7
          %v2197 = vsub.s32 2, %v2196
          %v2198 = vrot.slane %v2194, %v2197
          %v2200 = vsel %vm376, %v2162, 0
          %v2203 = vsel %vm376, %v2163, 0
          %2205 = vmatprep.subr.mxu0 0.0
          %2206 = vmatpush1.msra.mxu0 0.0
          %2207 = vmatprep.subr.mxu0 0.0
          %2208 = vmatpush1.msra.mxu0 0.0
          %2209 = vmatprep.subr.mxu0 0.0
          %2210 = vmatpush1.msra.mxu0 0.0
          %2211 = vmatprep.subr.mxu0 0.0
          %2212 = vmatpush1.msra.mxu0 0.0
          %2213 = vmatprep.subr.mxu0 0.0
          %2214 = vmatpush1.msra.mxu0 0.0
          %2215 = vmatprep.subr.mxu0 0.0
          %2216 = vmatpush1.msra.mxu0 0.0
          %2217 = vmatprep.subr.mxu0 0.0
          %2218 = vmatpush1.msra.mxu0 0.0
          %2219 = vmatprep.subr.mxu0 0.0
          %2220 = vmatpush1.msra.mxu0 0.0
          %2221 = vmatprep.subr.mxu0 0.0
          %2222 = vmatpush1.msra.mxu0 %v2193
          %2223 = vmatprep.subr.mxu0 0.0
          %2224 = vmatpush1.msra.mxu0 %v2190
          %2225 = vmatprep.subr.mxu0 0.0
          %2226 = vmatpush1.msra.mxu0 %v2187
          %2227 = vmatprep.subr.mxu0 0.0
          %2228 = vmatpush1.msra.mxu0 %v2184
          %2229 = vmatprep.subr.mxu0 0.0
          %2230 = vmatpush1.msra.mxu0 %v2181
          %2231 = vmatprep.subr.mxu0 0.0
          %2232 = vmatpush1.msra.mxu0 %v2178
          %2233 = vmatprep.subr.mxu0 0.0
          %2234 = vmatpush1.msra.mxu0 %v2175
          %2235 = vmatprep.subr.mxu0 0.0
          %2236 = vmatpush1.msra.mxu0 %v2172
          %2237 = vmatprep.subr.mxu0 0.0
          %2238 = vmatpush2.msra.mxu0 0.0
          %2239 = vmatprep.subr.mxu0 0.0
          %2240 = vmatpush2.msra.mxu0 0.0
          %2241 = vmatprep.subr.mxu0 0.0
          %2242 = vmatpush2.msra.mxu0 0.0
          %2243 = vmatprep.subr.mxu0 0.0
          %2244 = vmatpush2.msra.mxu0 0.0
          %2245 = vmatprep.subr.mxu0 0.0
          %2246 = vmatpush2.msra.mxu0 0.0
          %2247 = vmatprep.subr.mxu0 0.0
          %2248 = vmatpush2.msra.mxu0 0.0
          %2249 = vmatprep.subr.mxu0 0.0
          %2250 = vmatpush2.msra.mxu0 0.0
          %2251 = vmatprep.subr.mxu0 0.0
          %2252 = vmatpush2.msra.mxu0 0.0
          %2253 = vmatprep.subr.mxu0 0.0
          %2254 = vmatpush2.msra.mxu0 0.0
          %2255 = vmatprep.subr.mxu0 0.0
          %2256 = vmatpush2.msra.mxu0 0.0
          %2257 = vmatprep.subr.mxu0 0.0
          %2258 = vmatpush2.msra.mxu0 0.0
          %2259 = vmatprep.subr.mxu0 0.0
          %2260 = vmatpush2.msra.mxu0 0.0
          %2261 = vmatprep.subr.mxu0 0.0
          %2262 = vmatpush2.msra.mxu0 0.0
          %2263 = vmatprep.subr.mxu0 0.0
          %2264 = vmatpush2.msra.mxu0 0.0
          %2265 = vmatprep.subr.mxu0 0.0
          %2266 = vmatpush2.msra.mxu0 0.0
          %2267 = vmatprep.subr.mxu0 0.0
          %2268 = vmatpush2.msra.mxu0 0.0
          %2269 = vmatprep.mubr.f32.mxu0 0.0
          %2270 = vmatmul.mubr.f32.gmra.mxu0 %v2200
          %v2271 = vpop.f32.mrf.mxu0
          %v2272 = vadd.f32 %v2198, %v2271
          %v2273 = vpop.f32.mrf.mxu0
          %2274 = vmatprep.mubr.f32.mxu0 0.0
          %2275 = vmatmul.mubr.f32.gmra.mxu0 %v2203
          %v2276 = vpop.f32.mrf.mxu0
          %v2277 = vadd.f32 %v2198, %v2276
          %v2278 = vpop.f32.mrf.mxu0
          %2279 = vdwg.mxu0
          %v2280 = vtanh.pop %v2272
          %v2281 = vtanh.pop %v2277
          %v2282 = vlaneseq
          %v2283 = vshrl.u32 %v2282, 7
          %v2284 = vsub.s32 1, %v2283
          %v2285 = vrot.slane %v2194, %v2284
          %v2287 = vsel %vm376, %v2280, 0
          %v2290 = vsel %vm376, %v2281, 0
          %2292 = vmatprep.subr.mxu0 0.0
          %2293 = vmatpush1.msra.mxu0 0.0
          %2294 = vmatprep.subr.mxu0 0.0
          %2295 = vmatpush1.msra.mxu0 0.0
          %2296 = vmatprep.subr.mxu0 0.0
          %2297 = vmatpush1.msra.mxu0 0.0
          %2298 = vmatprep.subr.mxu0 0.0
          %2299 = vmatpush1.msra.mxu0 0.0
          %2300 = vmatprep.subr.mxu0 0.0
          %2301 = vmatpush1.msra.mxu0 0.0
          %2302 = vmatprep.subr.mxu0 0.0
          %2303 = vmatpush1.msra.mxu0 0.0
          %2304 = vmatprep.subr.mxu0 0.0
          %2305 = vmatpush1.msra.mxu0 0.0
          %2306 = vmatprep.subr.mxu0 0.0
          %2307 = vmatpush1.msra.mxu0 0.0
          %2308 = vmatprep.subr.mxu0 0.0
          %2309 = vmatpush1.msra.mxu0 %v2192
          %2310 = vmatprep.subr.mxu0 0.0
          %2311 = vmatpush1.msra.mxu0 %v2189
          %2312 = vmatprep.subr.mxu0 0.0
          %2313 = vmatpush1.msra.mxu0 %v2186
          %2314 = vmatprep.subr.mxu0 0.0
          %2315 = vmatpush1.msra.mxu0 %v2183
          %2316 = vmatprep.subr.mxu0 0.0
          %2317 = vmatpush1.msra.mxu0 %v2180
          %2318 = vmatprep.subr.mxu0 0.0
          %2319 = vmatpush1.msra.mxu0 %v2177
          %2320 = vmatprep.subr.mxu0 0.0
          %2321 = vmatpush1.msra.mxu0 %v2174
          %2322 = vmatprep.subr.mxu0 0.0
          %2323 = vmatpush1.msra.mxu0 %v2171
          %2324 = vmatprep.subr.mxu0 0.0
          %2325 = vmatpush2.msra.mxu0 0.0
          %2326 = vmatprep.subr.mxu0 0.0
          %2327 = vmatpush2.msra.mxu0 0.0
          %2328 = vmatprep.subr.mxu0 0.0
          %2329 = vmatpush2.msra.mxu0 0.0
          %2330 = vmatprep.subr.mxu0 0.0
          %2331 = vmatpush2.msra.mxu0 0.0
          %2332 = vmatprep.subr.mxu0 0.0
          %2333 = vmatpush2.msra.mxu0 0.0
          %2334 = vmatprep.subr.mxu0 0.0
          %2335 = vmatpush2.msra.mxu0 0.0
          %2336 = vmatprep.subr.mxu0 0.0
          %2337 = vmatpush2.msra.mxu0 0.0
          %2338 = vmatprep.subr.mxu0 0.0
          %2339 = vmatpush2.msra.mxu0 0.0
          %2340 = vmatprep.subr.mxu0 0.0
          %2341 = vmatpush2.msra.mxu0 0.0
          %2342 = vmatprep.subr.mxu0 0.0
          %2343 = vmatpush2.msra.mxu0 0.0
          %2344 = vmatprep.subr.mxu0 0.0
          %2345 = vmatpush2.msra.mxu0 0.0
          %2346 = vmatprep.subr.mxu0 0.0
          %2347 = vmatpush2.msra.mxu0 0.0
          %2348 = vmatprep.subr.mxu0 0.0
          %2349 = vmatpush2.msra.mxu0 0.0
          %2350 = vmatprep.subr.mxu0 0.0
          %2351 = vmatpush2.msra.mxu0 0.0
          %2352 = vmatprep.subr.mxu0 0.0
          %2353 = vmatpush2.msra.mxu0 0.0
          %2354 = vmatprep.subr.mxu0 0.0
          %2355 = vmatpush2.msra.mxu0 0.0
          %2356 = vmatprep.mubr.f32.mxu0 0.0
          %2357 = vmatmul.mubr.f32.gmra.mxu0 %v2287
          %v2358 = vpop.f32.mrf.mxu0
          %v2359 = vadd.f32 %v2285, %v2358
          %v2360 = vpop.f32.mrf.mxu0
          %2361 = vmatprep.mubr.f32.mxu0 0.0
          %2362 = vmatmul.mubr.f32.gmra.mxu0 %v2290
          %v2363 = vpop.f32.mrf.mxu0
          %v2364 = vadd.f32 %v2285, %v2363
          %v2365 = vpop.f32.mrf.mxu0
          %2366 = vdwg.mxu0
          %2367 = vst [vmem:[%s7] sm:$0xff] %v2359
          %2368 = vst [vmem:[%s7 + $0x8] sm:$0xff] %v2364
          %v2369 = vlaneseq
          %v2370 = vshrl.u32 %v2369, 7
          %v2371 = vsub.s32 3, %v2370
          %v2372 = vrot.slane %v2194, %v2371
          %2381 = vrot.lane.b32.xlu0 %v2172, 64
          %v2382 = vpop.permute.xlu0 %2381
          %2383 = vrot.lane.b32.xlu0 %v2175, 64
          %v2384 = vpop.permute.xlu0 %2383
          %2385 = vrot.lane.b32.xlu0 %v2178, 64
          %v2386 = vpop.permute.xlu0 %2385
          %2387 = vrot.lane.b32.xlu0 %v2181, 64
          %v2388 = vpop.permute.xlu0 %2387
          %2389 = vrot.lane.b32.xlu0 %v2184, 64
          %v2390 = vpop.permute.xlu0 %2389
          %2391 = vrot.lane.b32.xlu0 %v2187, 64
          %v2392 = vpop.permute.xlu0 %2391
          %2393 = vrot.lane.b32.xlu0 %v2190, 64
          %v2394 = vpop.permute.xlu0 %2393
          %2395 = vrot.lane.b32.xlu0 %v2193, 64
          %v2396 = vpop.permute.xlu0 %2395
          %2405 = vmatprep.subr.mxu0 0.0
          %2406 = vmatpush1.msra.mxu0 0.0
          %2407 = vmatprep.subr.mxu0 0.0
          %2408 = vmatpush1.msra.mxu0 0.0
          %2409 = vmatprep.subr.mxu0 0.0
          %2410 = vmatpush1.msra.mxu0 0.0
          %2411 = vmatprep.subr.mxu0 0.0
          %2412 = vmatpush1.msra.mxu0 0.0
          %2413 = vmatprep.subr.mxu0 0.0
          %2414 = vmatpush1.msra.mxu0 0.0
          %2415 = vmatprep.subr.mxu0 0.0
          %2416 = vmatpush1.msra.mxu0 0.0
          %2417 = vmatprep.subr.mxu0 0.0
          %2418 = vmatpush1.msra.mxu0 0.0
          %2419 = vmatprep.subr.mxu0 0.0
          %2420 = vmatpush1.msra.mxu0 0.0
          %2421 = vmatprep.subr.mxu0 0.0
          %2422 = vmatpush1.msra.mxu0 %v2396
          %2423 = vmatprep.subr.mxu0 0.0
          %2424 = vmatpush1.msra.mxu0 %v2394
          %2425 = vmatprep.subr.mxu0 0.0
          %2426 = vmatpush1.msra.mxu0 %v2392
          %2427 = vmatprep.subr.mxu0 0.0
          %2428 = vmatpush1.msra.mxu0 %v2390
          %2429 = vmatprep.subr.mxu0 0.0
          %2430 = vmatpush1.msra.mxu0 %v2388
          %2431 = vmatprep.subr.mxu0 0.0
          %2432 = vmatpush1.msra.mxu0 %v2386
          %2433 = vmatprep.subr.mxu0 0.0
          %2434 = vmatpush1.msra.mxu0 %v2384
          %2435 = vmatprep.subr.mxu0 0.0
          %2436 = vmatpush1.msra.mxu0 %v2382
          %2437 = vmatprep.subr.mxu0 0.0
          %2438 = vmatpush2.msra.mxu0 0.0
          %2439 = vmatprep.subr.mxu0 0.0
          %2440 = vmatpush2.msra.mxu0 0.0
          %2441 = vmatprep.subr.mxu0 0.0
          %2442 = vmatpush2.msra.mxu0 0.0
          %2443 = vmatprep.subr.mxu0 0.0
          %2444 = vmatpush2.msra.mxu0 0.0
          %2445 = vmatprep.subr.mxu0 0.0
          %2446 = vmatpush2.msra.mxu0 0.0
          %2447 = vmatprep.subr.mxu0 0.0
          %2448 = vmatpush2.msra.mxu0 0.0
          %2449 = vmatprep.subr.mxu0 0.0
          %2450 = vmatpush2.msra.mxu0 0.0
          %2451 = vmatprep.subr.mxu0 0.0
          %2452 = vmatpush2.msra.mxu0 0.0
          %2453 = vmatprep.subr.mxu0 0.0
          %2454 = vmatpush2.msra.mxu0 0.0
          %2455 = vmatprep.subr.mxu0 0.0
          %2456 = vmatpush2.msra.mxu0 0.0
          %2457 = vmatprep.subr.mxu0 0.0
          %2458 = vmatpush2.msra.mxu0 0.0
          %2459 = vmatprep.subr.mxu0 0.0
          %2460 = vmatpush2.msra.mxu0 0.0
          %2461 = vmatprep.subr.mxu0 0.0
          %2462 = vmatpush2.msra.mxu0 0.0
          %2463 = vmatprep.subr.mxu0 0.0
          %2464 = vmatpush2.msra.mxu0 0.0
          %2465 = vmatprep.subr.mxu0 0.0
          %2466 = vmatpush2.msra.mxu0 0.0
          %2467 = vmatprep.subr.mxu0 0.0
          %2468 = vmatpush2.msra.mxu0 0.0
          %2469 = vmatprep.mubr.f32.mxu0 0.0
          %2470 = vmatmul.mubr.f32.gmra.mxu0 %v2200
          %v2471 = vpop.f32.mrf.mxu0
          %v2472 = vadd.f32 %v2372, %v2471
          %v2473 = vpop.f32.mrf.mxu0
          %2474 = vmatprep.mubr.f32.mxu0 0.0
          %2475 = vmatmul.mubr.f32.gmra.mxu0 %v2203
          %v2476 = vpop.f32.mrf.mxu0
          %v2477 = vadd.f32 %v2372, %v2476
          %v2478 = vpop.f32.mrf.mxu0
          %2479 = vdwg.mxu0
          %v2480 = vmul.f32 %v2472, 0.5
          %v2481 = vmul.f32 %v2477, 0.5
          %v2482 = vmul.f32 %v2472, 0.70710677
          %v2483 = vmul.f32 %v2477, 0.70710677
          %v2484 = verf.f32.pop %v2482
          %v2485 = verf.f32.pop %v2483
          %v2486 = vadd.f32 %v2484, 1.0
          %v2487 = vadd.f32 %v2485, 1.0
          %v2488 = vmul.f32 %v2480, %v2486
          %v2489 = vmul.f32 %v2481, %v2487
          %v2490 = vsel %vm376, %v2488, 0.0
          %2491 = vadd.xlane.f32.xlu0 %v2490
          %v2492 = vpop.xlane.xlu0 %2491
          %v2493 = vsel %vm376, %v2489, 0.0
          %2494 = vadd.xlane.f32.xlu0 %v2493
          %v2495 = vpop.xlane.xlu0 %2494
          %v2496 = vmul.f32 %v2492, %v1901
          %v2497 = vmul.f32 %v2495, %v1901
          %v2498 = vsub.f32 %v2488, %v2496
          %v2499 = vsub.f32 %v2489, %v2497
          %v2500 = vmul.f32 %v2498, %v2498
          %v2501 = vmul.f32 %v2499, %v2499
          %v2502 = vsel %vm376, %v2500, 0.0
          %2503 = vadd.xlane.f32.xlu0 %v2502
          %v2504 = vpop.xlane.xlu0 %2503
          %v2505 = vsel %vm376, %v2501, 0.0
          %2506 = vadd.xlane.f32.xlu0 %v2505
          %v2507 = vpop.xlane.xlu0 %2506
          %v2508 = vmul.f32 %v2504, %v1901
          %v2509 = vmul.f32 %v2507, %v1901
          %v2510 = vadd.f32 %v2508, 1e-12
          %v2511 = vadd.f32 %v2509, 1e-12
          %v2512 = vrsqrt.pop %v2510
          %v2513 = vrsqrt.pop %v2511
          %v2514 = vmul.f32 %v2498, %v2512
          %v2515 = vmul.f32 %v2499, %v2513
          %v2516 = vlaneseq
          %v2517 = vshrl.u32 %v2516, 7
          %v2518 = vsub.s32 4, %v2517
          %v2519 = vrot.slane %v2194, %v2518
          %v2520 = vmul.f32 %v2514, %v2519
          %v2521 = vmul.f32 %v2515, %v2519
          %v2522 = vlaneseq
          %v2523 = vshrl.u32 %v2522, 7
          %v2524 = vsub.s32 5, %v2523
          %v2525 = vrot.slane %v2194, %v2524
          %v2526 = vadd.f32 %v2520, %v2525
          %v2527 = vadd.f32 %v2521, %v2525
          %v2528 = vlaneseq
          %v2529 = vshrl.u32 %v2528, 7
          %v2530 = vsub.s32 0, %v2529
          %v2531 = vrot.slane %v2194, %v2530
          %v2533 = vsel %vm376, %v2526, 0
          %v2536 = vsel %vm376, %v2527, 0
          %2538 = vmatprep.subr.mxu0 0.0
          %2539 = vmatpush1.msra.mxu0 0.0
          %2540 = vmatprep.subr.mxu0 0.0
          %2541 = vmatpush1.msra.mxu0 0.0
          %2542 = vmatprep.subr.mxu0 0.0
          %2543 = vmatpush1.msra.mxu0 0.0
          %2544 = vmatprep.subr.mxu0 0.0
          %2545 = vmatpush1.msra.mxu0 0.0
          %2546 = vmatprep.subr.mxu0 0.0
          %2547 = vmatpush1.msra.mxu0 0.0
          %2548 = vmatprep.subr.mxu0 0.0
          %2549 = vmatpush1.msra.mxu0 0.0
          %2550 = vmatprep.subr.mxu0 0.0
          %2551 = vmatpush1.msra.mxu0 0.0
          %2552 = vmatprep.subr.mxu0 0.0
          %2553 = vmatpush1.msra.mxu0 0.0
          %2554 = vmatprep.subr.mxu0 0.0
          %2555 = vmatpush1.msra.mxu0 %v2191
          %2556 = vmatprep.subr.mxu0 0.0
          %2557 = vmatpush1.msra.mxu0 %v2188
          %2558 = vmatprep.subr.mxu0 0.0
          %2559 = vmatpush1.msra.mxu0 %v2185
          %2560 = vmatprep.subr.mxu0 0.0
          %2561 = vmatpush1.msra.mxu0 %v2182
          %2562 = vmatprep.subr.mxu0 0.0
          %2563 = vmatpush1.msra.mxu0 %v2179
          %2564 = vmatprep.subr.mxu0 0.0
          %2565 = vmatpush1.msra.mxu0 %v2176
          %2566 = vmatprep.subr.mxu0 0.0
          %2567 = vmatpush1.msra.mxu0 %v2173
          %2568 = vmatprep.subr.mxu0 0.0
          %2569 = vmatpush1.msra.mxu0 %v2170
          %2570 = vmatprep.subr.mxu0 0.0
          %2571 = vmatpush2.msra.mxu0 0.0
          %2572 = vmatprep.subr.mxu0 0.0
          %2573 = vmatpush2.msra.mxu0 0.0
          %2574 = vmatprep.subr.mxu0 0.0
          %2575 = vmatpush2.msra.mxu0 0.0
          %2576 = vmatprep.subr.mxu0 0.0
          %2577 = vmatpush2.msra.mxu0 0.0
          %2578 = vmatprep.subr.mxu0 0.0
          %2579 = vmatpush2.msra.mxu0 0.0
          %2580 = vmatprep.subr.mxu0 0.0
          %2581 = vmatpush2.msra.mxu0 0.0
          %2582 = vmatprep.subr.mxu0 0.0
          %2583 = vmatpush2.msra.mxu0 0.0
          %2584 = vmatprep.subr.mxu0 0.0
          %2585 = vmatpush2.msra.mxu0 0.0
          %2586 = vmatprep.subr.mxu0 0.0
          %2587 = vmatpush2.msra.mxu0 0.0
          %2588 = vmatprep.subr.mxu0 0.0
          %2589 = vmatpush2.msra.mxu0 0.0
          %2590 = vmatprep.subr.mxu0 0.0
          %2591 = vmatpush2.msra.mxu0 0.0
          %2592 = vmatprep.subr.mxu0 0.0
          %2593 = vmatpush2.msra.mxu0 0.0
          %2594 = vmatprep.subr.mxu0 0.0
          %2595 = vmatpush2.msra.mxu0 0.0
          %2596 = vmatprep.subr.mxu0 0.0
          %2597 = vmatpush2.msra.mxu0 0.0
          %2598 = vmatprep.subr.mxu0 0.0
          %2599 = vmatpush2.msra.mxu0 0.0
          %2600 = vmatprep.subr.mxu0 0.0
          %2601 = vmatpush2.msra.mxu0 0.0
          %2602 = vmatprep.mubr.f32.mxu0 0.0
          %2603 = vmatmul.mubr.f32.gmra.mxu0 %v2533
          %v2604 = vpop.f32.mrf.mxu0
          %v2605 = vadd.f32 %v2531, %v2604
          %v2606 = vpop.f32.mrf.mxu0
          %2607 = vmatprep.mubr.f32.mxu0 0.0
          %2608 = vmatmul.mubr.f32.gmra.mxu0 %v2536
          %v2609 = vpop.f32.mrf.mxu0
          %v2610 = vadd.f32 %v2531, %v2609
          %v2611 = vpop.f32.mrf.mxu0
          %2612 = vdwg.mxu0
          %2613 = vst [vmem:[#allocation6] sm:$0xff] %v2605
          %2614 = vst [vmem:[#allocation6 + $0x8] sm:$0xff] %v2610
        $region56: #{stage1_forward.1} parent=43 // pred_fallthru
          _
        // Predicated region
        $region57: #{stage1_forward.1} parent=43 // pred_check
          %p2615 = pneg %p177
        $region58: #{stage1_forward.1} parent=43 // pred_check_branch
          %2617 = sbr.rel (%p2615) target = $region60
        $region59: #{stage1_forward.1} parent=43 // pred_region
          %s2619 = ssub.s32 256, 256
          %2620 = vsyncadd [#allocation5], %s2619
          %s2621 = sshll.u32 [#allocation6], 4
          %s2622 = int_to_ptr.vmem [resolvable:$true] %s2621
          %2627 = dma.vmem_to_hbm [thread:$0]  %s2622, 256, %s6, [#allocation5], 128, 128, 8
        $region60: #{stage1_forward.1} parent=43 // pred_fallthru
          _
        // Predicated region
        $region61: #{stage1_forward.1} parent=43 // pred_check
          %p2628 = pneg %p198
        $region62: #{stage1_forward.1} parent=43 // pred_check_branch
          %2630 = sbr.rel (%p2628) target = $region64
        $region63: #{stage1_forward.1} parent=43 // pred_region
          _
        $region64: #{stage1_forward.1} parent=43 // pred_fallthru
          _
        // Predicated region
        $region65: #{stage1_forward.1} parent=43 // pred_check
          %p2631 = pneg %p177
        $region66: #{stage1_forward.1} parent=43 // pred_check_branch
          %2633 = sbr.rel (%p2631) target = $region68
        $region67: #{stage1_forward.1} parent=43 // pred_region
          %2634 = dma.done [#allocation5], 256
        $region68: #{stage1_forward.1} parent=43 // pred_fallthru
          _
        // Predicated region
        $region69: #{stage1_forward.1} parent=43 // pred_check
          %p2635 = pneg %p198
        $region70: #{stage1_forward.1} parent=43 // pred_check_branch
          %2637 = sbr.rel (%p2635) target = $region72
        $region71: #{stage1_forward.1} parent=43 // pred_region
          _
        $region72: #{stage1_forward.1} parent=43 // pred_fallthru
          _
      $region44: #{stage1_forward.1} parent=5 // pred_fallthru
        _
      %p2638 = scmp.le.s32.totalorder 2, %s18
      // Predicated region
      $region73: #{stage1_forward.1} parent=5 // pred_check
        %p2639 = pneg %p2638
      $region74: #{stage1_forward.1} parent=5 // pred_check_branch
        %2641 = sbr.rel (%p2639) target = $region76
      $region75: #{stage1_forward.1} parent=5 // pred_region
        %s2642 = ssub.s32 %s18, 2
      $region76: #{stage1_forward.1} parent=5 // pred_fallthru
        _
    $region6: #{stage1_forward.1} parent=1 // loop_footer
      %s22 = sadd.s32 1, %s18
    $region7: #{stage1_forward.1} parent=1 // loop_footer_branch
      %17 = sbr.rel target = $region3
    $region8: #{stage1_forward.1} parent=1 // loop_exit
      _
    %2643 = vsyncpa [#allocation4], 1
    %s2644 = scalar_lea.sflag [#allocation4], 1
    %2645 = vsyncpa %s2644, 1
    %2646 = vsyncpa [#allocation5], 1
    %s2647 = scalar_lea.sflag [#allocation5], 1
    %2648 = vsyncpa %s2647, 1

</llo_original>
